<compile_context>
chip_gen: v7x
topology: tpu7x:2x2x1
jax: 0.10.0
libtpu: 0.0.40
codegen_flags: <defaults>
</compile_context>

<pallas_src>
import jax
import jax.numpy as jnp
from jax.experimental import pallas as pl
from jax.experimental.pallas import tpu as pltpu


# ----------------------------------------------------------------------------
# Pallas kernel
# ----------------------------------------------------------------------------
def _make_block_kernel(Nb, H, W, Cin, P, Cout, stride, has_sc, has_sc_conv):
    """Builds the fused Block kernel for Nb batch images per grid step."""
    Ho = (H + 2 - 3) // stride + 1
    Wo = (W + 2 - 3) // stride + 1
    R_in, R_out = Nb * H, Nb * Ho          # rows of the wide activation matrix
    WP, WoP = W * P, Wo * P

    def kernel(x_ref, wexp_ref, s1_ref, b1_ref,
               m_ref, s_ref,
               s2_ref, b2_ref,
               wproj_ref, s3_ref, b3_ref,
               alpha_ref, out_ref):
        alpha = alpha_ref[0]                              # shared PReLU slope
        x2d = x_ref[...].reshape(R_in, W * Cin)           # (Nb*H, W*Cin) f32

        # ---- expand 1x1 conv (+ fused shortcut 1x1 conv) + BN1 + PReLU ------
        hcat = jnp.dot(x2d.astype(jnp.bfloat16), wexp_ref[...],
                       preferred_element_type=jnp.float32)
        hcat = hcat * s1_ref[...] + b1_ref[...]           # (R_in, E)

        if has_sc_conv:
            h1 = hcat[:, :WP]           # expand branch        (lane-aligned)
            sc = hcat[:, WP:]           # shortcut-conv branch (lane-aligned)
        else:
            h1 = hcat
            sc = x2d if has_sc else None                  # identity shortcut

        h1 = jnp.where(h1 >= 0.0, h1, alpha * h1)         # PReLU (f32, VPU)
        h1 = h1.astype(jnp.bfloat16)

        # ---- depthwise 3x3 conv (pad 1, stride s) as MXU matmuls ------------
        #   acc = sum_di (S_di @ h1) @ M_di
        acc = jnp.zeros((R_out, WoP), jnp.float32)
        for di in range(3):
            if stride == 1 and di == 1:                   # S_1 is the identity
                rows = h1
            else:
                rows = jnp.dot(s_ref[di], h1,
                               preferred_element_type=jnp.float32)
                rows = rows.astype(jnp.bfloat16)          # exact row selection
            acc = acc + jnp.dot(rows, m_ref[di],
                                preferred_element_type=jnp.float32)

        h2 = acc * s2_ref[...] + b2_ref[...]              # BN2 (f32)
        h2 = jnp.where(h2 >= 0.0, h2, alpha * h2)         # PReLU

        # ---- project 1x1 conv + BN3 (+ shortcut add) ------------------------
        y = jnp.dot(h2.astype(jnp.bfloat16), wproj_ref[...],
                    preferred_element_type=jnp.float32)
        y = y * s3_ref[...] + b3_ref[...]                 # (R_out, Wo*Cout)

        if has_sc:
            y = y + sc

        # lane-dense store: out block is (Nb, Ho, Wo*Cout)
        out_ref[...] = y.reshape(Nb, Ho, Wo * Cout)

    return kernel, Ho, Wo


# ----------------------------------------------------------------------------
# Wrapper-side (pure XLA) operator construction
# ----------------------------------------------------------------------------
def _block_diag(w, reps):
    """(k, n) -> (reps*k, reps*n) block-diagonal with `reps` copies of w."""
    k, n = w.shape
    eye = jnp.eye(reps, dtype=w.dtype)
    return (eye[:, None, :, None] * w[None, :, None, :]).reshape(reps * k,
                                                                 reps * n)


def _tile_cols(v, reps):
    """Per-channel (1, c) vector -> per-(spatial, channel) (1, reps*c)."""
    return jnp.tile(v, (1, reps))


def _depthwise_col_operators(dw3x3, W, Wo, stride):
    """(3, W*P, Wo*P); M[di][j*P+p, w*P+p] = dw3x3[di, j - stride*w + 1, p]."""
    P = dw3x3.shape[-1]
    j = jnp.arange(W)[:, None]
    w = jnp.arange(Wo)[None, :]
    dj = j - stride * w + 1                               # (W, Wo)
    valid = (dj >= 0) & (dj <= 2)
    djc = jnp.clip(dj, 0, 2)
    vals = jnp.take(dw3x3, djc, axis=1)                   # (3, W, Wo, P)
    vals = jnp.where(valid[None, :, :, None], vals, 0.0)
    eye_p = jnp.eye(P, dtype=dw3x3.dtype)
    m = jnp.einsum("djwp,pq->djpwq", vals, eye_p)
    return m.reshape(3, W * P, Wo * P)


def _depthwise_row_operators(H, Ho, stride, Nb):
    """(3, Nb*Ho, Nb*H); S[di][n*Ho+oh, n*H+h] = [h == stride*oh + di - 1]."""
    oh = jnp.arange(Ho)[:, None]
    h = jnp.arange(H)[None, :]
    mats = []
    for di in range(3):
        src = stride * oh + di - 1
        s1 = ((h == src) & (src >= 0) & (src < H)).astype(jnp.float32)
        mats.append(jnp.kron(jnp.eye(Nb, dtype=jnp.float32), s1))
    return jnp.stack(mats, axis=0)


def _choose_batch_per_step(N):
    """Largest divisor of N that still leaves >= 2 grid steps (megacore)."""
    nb = 1
    for cand in range(1, N + 1):
        if N % cand == 0 and N // cand >= 2:
            nb = cand
    return nb


def block_forward(x_nhwc, params, stride, *, mxu_dtype=jnp.bfloat16):
    """Runs the Block forward pass. x_nhwc: (N, H, W, Cin) float32."""
    N, H, W, Cin = x_nhwc.shape
    P = params["w1"].shape[1]
    Cout = params["w3"].shape[1]
    has_sc = stride == 1
    has_sc_conv = has_sc and (Cin != Cout)

    Nb = _choose_batch_per_step(N)
    kernel, Ho, Wo = _make_block_kernel(Nb, H, W, Cin, P, Cout, stride,
                                        has_sc, has_sc_conv)
    R_in, R_out = Nb * H, Nb * Ho
    WP, WoP = W * P, Wo * P

    # ---- fold weights / BN into "wide" operators (one-time, wrapper side) --
    w_exp = _block_diag(params["w1"], W)
    s1w, b1w = _tile_cols(params["s1"], W), _tile_cols(params["b1"], W)
    if has_sc_conv:
        # Fuse the shortcut 1x1 conv into the expand matmul (shared LHS).
        w_exp = jnp.concatenate([w_exp, _block_diag(params["wsc"], W)], axis=1)
        s1w = jnp.concatenate([s1w, _tile_cols(params["ssc"], W)], axis=1)
        b1w = jnp.concatenate([b1w, _tile_cols(params["bsc"], W)], axis=1)
    w_exp = w_exp.astype(mxu_dtype)
    E = w_exp.shape[1]

    m_ops = _depthwise_col_operators(params["dw3x3"], W, Wo,
                                     stride).astype(mxu_dtype)
    s_ops = _depthwise_row_operators(H, Ho, stride, Nb).astype(mxu_dtype)
    s2w, b2w = _tile_cols(params["s2"], Wo), _tile_cols(params["b2"], Wo)
    w_proj = _block_diag(params["w3"], Wo).astype(mxu_dtype)
    s3w, b3w = _tile_cols(params["s3"], Wo), _tile_cols(params["b3"], Wo)

    # lane-dense presentation of input / output (free XLA reshapes)
    x_w = x_nhwc.reshape(N, H, W * Cin)

    def const_spec(arr):
        nd = arr.ndim
        return pl.BlockSpec(arr.shape, lambda n, _nd=nd: (0,) * _nd)

    in_specs = [
        pl.BlockSpec((Nb, H, W * Cin), lambda n: (n, 0, 0)),     # x (wide)
        const_spec(w_exp), const_spec(s1w), const_spec(b1w),     # expand(+sc)
        const_spec(m_ops), const_spec(s_ops),                    # depthwise
        const_spec(s2w), const_spec(b2w),                        # bn2
        const_spec(w_proj), const_spec(s3w), const_spec(b3w),    # project/bn3
        pl.BlockSpec(memory_space=pltpu.MemorySpace.SMEM),       # PReLU alpha
    ]
    out_specs = pl.BlockSpec((Nb, Ho, Wo * Cout), lambda n: (n, 0, 0))

    steps = N // Nb
    flops_step = (2 * R_in * (W * Cin) * E
                  + 3 * 2 * R_out * R_in * WP
                  + 3 * 2 * R_out * WP * WoP
                  + 2 * R_out * WoP * (Wo * Cout))
    operands = (x_w, w_exp, s1w, b1w, m_ops, s_ops, s2w, b2w,
                w_proj, s3w, b3w)
    bytes_accessed = sum(int(a.size) * a.dtype.itemsize for a in operands)
    bytes_accessed += N * Ho * Wo * Cout * 4
    cost = pl.CostEstimate(flops=int(flops_step * steps), transcendentals=0,
                           bytes_accessed=int(bytes_accessed))

    out = pl.pallas_call(
        kernel,
        out_shape=jax.ShapeDtypeStruct((N, Ho, Wo * Cout), jnp.float32),
        grid=(steps,),
        in_specs=in_specs,
        out_specs=out_specs,
        compiler_params=pltpu.CompilerParams(
            dimension_semantics=("parallel",)),
        cost_estimate=cost,
    )(x_w, w_exp, s1w, b1w, m_ops, s_ops, s2w, b2w, w_proj, s3w, b3w,
      params["alpha"])
    return out.reshape(N, Ho, Wo, Cout)


# ----------------------------------------------------------------------------
# Deterministic parameter init (shapes follow Block.__init__)
# ----------------------------------------------------------------------------
def init_params(key, in_planes, out_planes, expansion):
    planes = expansion * in_planes
    ks = jax.random.split(key, 8)

    def bn(k, c):
        k1, k2, k3, k4 = jax.random.split(k, 4)
        gamma = 1.0 + 0.1 * jax.random.normal(k1, (c,), jnp.float32)
        beta = 0.1 * jax.random.normal(k2, (c,), jnp.float32)
        mean = 0.1 * jax.random.normal(k3, (c,), jnp.float32)
        var = 1.0 + 0.1 * jnp.abs(jax.random.normal(k4, (c,), jnp.float32))
        scale = gamma / jnp.sqrt(var + 1e-5)
        shift = beta - mean * scale
        return scale.reshape(1, c), shift.reshape(1, c)

    w1 = 0.2 * jax.random.normal(ks[0], (in_planes, planes), jnp.float32)
    s1, b1 = bn(ks[1], planes)
    dw3x3 = 0.2 * jax.random.normal(ks[2], (3, 3, planes), jnp.float32)
    s2, b2 = bn(ks[3], planes)
    w3 = 0.2 * jax.random.normal(ks[4], (planes, out_planes), jnp.float32)
    s3, b3 = bn(ks[5], out_planes)
    wsc = 0.2 * jax.random.normal(ks[6], (in_planes, out_planes), jnp.float32)
    ssc, bsc = bn(ks[7], out_planes)
    alpha = jnp.array([0.25], jnp.float32)          # PyTorch PReLU default

    return dict(w1=w1, s1=s1, b1=b1,
                dw3x3=dw3x3, s2=s2, b2=b2,
                w3=w3, s3=s3, b3=b3,
                wsc=wsc, ssc=ssc, bsc=bsc,
                alpha=alpha)


# ----------------------------------------------------------------------------
# Pure-JAX reference (same NHWC layout) for correctness checking
# ----------------------------------------------------------------------------
def reference_forward(x_nhwc, p, stride, mxu_dtype=jnp.float32):
    """Module semantics; matmul/conv operands cast to `mxu_dtype` (f32 acc)."""
    a = p["alpha"][0]
    prelu = lambda v: jnp.where(v >= 0, v, a * v)
    c = lambda v: v.astype(mxu_dtype)

    h = jnp.einsum("nhwc,cp->nhwp", c(x_nhwc), c(p["w1"]),
                   preferred_element_type=jnp.float32)
    h = prelu(h * p["s1"][0] + p["b1"][0])

    planes = h.shape[-1]
    dwk = p["dw3x3"].reshape(3, 3, 1, planes)        # HWIO, depthwise
    h = jax.lax.conv_general_dilated(
        c(h), c(dwk), window_strides=(stride, stride),
        padding=((1, 1), (1, 1)),
        dimension_numbers=("NHWC", "HWIO", "NHWC"),
        feature_group_count=planes,
        preferred_element_type=jnp.float32)
    h = prelu(h * p["s2"][0] + p["b2"][0])

    y = jnp.einsum("nhwp,po->nhwo", c(h), c(p["w3"]),
                   preferred_element_type=jnp.float32)
    y = y * p["s3"][0] + p["b3"][0]

    if stride == 1:
        if x_nhwc.shape[-1] != y.shape[-1]:
            sc = jnp.einsum("nhwc,co->nhwo", c(x_nhwc), c(p["wsc"]),
                            preferred_element_type=jnp.float32)
            sc = sc * p["ssc"][0] + p["bsc"][0]
        else:
            sc = x_nhwc
        y = y + sc
    return y


# ----------------------------------------------------------------------------
def _run_case(name, key, in_planes, out_planes, expansion, stride, N, H, W):
    kx, kp = jax.random.split(key)
    # PyTorch-style NCHW input, transposed to the kernel's NHWC layout.
    x_nchw = jax.random.normal(kx, (N, in_planes, H, W), jnp.float32)
    x_nhwc = jnp.transpose(x_nchw, (0, 2, 3, 1))
    params = init_params(kp, in_planes, out_planes, expansion)

    out = jax.block_until_ready(block_forward(x_nhwc, params, stride))
    ref = reference_forward(x_nhwc, params, stride, mxu_dtype=jnp.bfloat16)
    assert out.shape == ref.shape, (name, out.shape, ref.shape)
    err = float(jnp.max(jnp.abs(out - ref)))
    if not jnp.allclose(out, ref, atol=1e-2, rtol=1e-2):
        raise AssertionError(f"{name}: mismatch, max abs err = {err}")
    return out


if __name__ == "__main__":
    key = jax.random.PRNGKey(0)
    k1, k2, k3 = jax.random.split(key, 3)

    # Block(in_planes=4, out_planes=8, expansion=6, stride=1): conv shortcut.
    _run_case("conv_shortcut", k1, 4, 8, 6, 1, N=4, H=16, W=16)
    # Block(8, 8, 4, stride=1): identity shortcut (in_planes == out_planes).
    _run_case("identity_shortcut", k2, 8, 8, 4, 1, N=2, H=16, W=16)
    # Block(4, 8, 6, stride=2): no shortcut, strided depthwise conv.
    _run_case("stride2", k3, 4, 8, 6, 2, N=2, H=16, W=16)

    print("KERNEL_OK")
</pallas_src>

<mosaic_0001>
module attributes {stable_mosaic.version = 11 : i64} {
  func.func @kernel(%arg0: i32, %arg1: memref<2x16x64xf32, #tpu.memory_space<vmem>>, %arg2: memref<64x512xbf16, #tpu.memory_space<vmem>>, %arg3: memref<1x512xf32, #tpu.memory_space<vmem>>, %arg4: memref<1x512xf32, #tpu.memory_space<vmem>>, %arg5: memref<3x384x384xbf16, #tpu.memory_space<vmem>>, %arg6: memref<3x32x32xbf16, #tpu.memory_space<vmem>>, %arg7: memref<1x384xf32, #tpu.memory_space<vmem>>, %arg8: memref<1x384xf32, #tpu.memory_space<vmem>>, %arg9: memref<384x128xbf16, #tpu.memory_space<vmem>>, %arg10: memref<1x128xf32, #tpu.memory_space<vmem>>, %arg11: memref<1x128xf32, #tpu.memory_space<vmem>>, %arg12: memref<1xf32, #tpu.memory_space<smem>>, %arg13: memref<2x16x128xf32, #tpu.memory_space<vmem>>) attributes {dimension_semantics = [#tpu.dimension_semantics<parallel>], iteration_bounds = array<i64: 2>, scalar_prefetch = 0 : i64, scratch_operands = 0 : i64, tpu.core_type = #tpu.core_type<tc>, window_params = [{transform_indices = @transform_0, window_bounds = array<i64: 2, 16, 64>}, {pipeline_mode = #tpu.pipeline_mode<synchronous>, transform_indices = @transform_1, window_bounds = array<i64: 64, 512>}, {pipeline_mode = #tpu.pipeline_mode<synchronous>, transform_indices = @transform_2, window_bounds = array<i64: 1, 512>}, {pipeline_mode = #tpu.pipeline_mode<synchronous>, transform_indices = @transform_3, window_bounds = array<i64: 1, 512>}, {pipeline_mode = #tpu.pipeline_mode<synchronous>, transform_indices = @transform_4, window_bounds = array<i64: 3, 384, 384>}, {pipeline_mode = #tpu.pipeline_mode<synchronous>, transform_indices = @transform_5, window_bounds = array<i64: 3, 32, 32>}, {pipeline_mode = #tpu.pipeline_mode<synchronous>, transform_indices = @transform_6, window_bounds = array<i64: 1, 384>}, {pipeline_mode = #tpu.pipeline_mode<synchronous>, transform_indices = @transform_7, window_bounds = array<i64: 1, 384>}, {pipeline_mode = #tpu.pipeline_mode<synchronous>, transform_indices = @transform_8, window_bounds = array<i64: 384, 128>}, {pipeline_mode = #tpu.pipeline_mode<synchronous>, transform_indices = @transform_9, window_bounds = array<i64: 1, 128>}, {pipeline_mode = #tpu.pipeline_mode<synchronous>, transform_indices = @transform_10, window_bounds = array<i64: 1, 128>}, {transform_indices = @transform_11, window_bounds = array<i64: 1>}, {transform_indices = @transform_12, window_bounds = array<i64: 2, 16, 128>}]} {
    %c0 = arith.constant 0 : index
    %0 = memref.load %arg12[%c0] : memref<1xf32, #tpu.memory_space<smem>>
    %c0_0 = arith.constant 0 : index
    %c0_1 = arith.constant 0 : index
    %c0_2 = arith.constant 0 : index
    %1 = vector.load %arg1[%c0_0, %c0_1, %c0_2] : memref<2x16x64xf32, #tpu.memory_space<vmem>>, vector<2x16x64xf32>
    %2 = vector.shape_cast %1 : vector<2x16x64xf32> to vector<32x64xf32>
    %3 = arith.truncf %2 : vector<32x64xf32> to vector<32x64xbf16>
    %c0_3 = arith.constant 0 : index
    %c0_4 = arith.constant 0 : index
    %4 = vector.load %arg2[%c0_3, %c0_4] : memref<64x512xbf16, #tpu.memory_space<vmem>>, vector<64x512xbf16>
    %cst = arith.constant dense<0.000000e+00> : vector<32x512xf32>
    %5 = tpu.matmul %3, %4, %cst {dimension_numbers = #tpu.dot_dimension_numbers<[1], [0], [0], [1], [0, 0, 1, 1], [], []>} : vector<32x64xbf16>, vector<64x512xbf16>, vector<32x512xf32> -> vector<32x512xf32>
    %c0_5 = arith.constant 0 : index
    %c0_6 = arith.constant 0 : index
    %6 = vector.load %arg3[%c0_5, %c0_6] : memref<1x512xf32, #tpu.memory_space<vmem>>, vector<1x512xf32>
    %7 = vector.broadcast %6 : vector<1x512xf32> to vector<32x512xf32>
    %8 = arith.mulf %5, %7 : vector<32x512xf32>
    %c0_7 = arith.constant 0 : index
    %c0_8 = arith.constant 0 : index
    %9 = vector.load %arg4[%c0_7, %c0_8] : memref<1x512xf32, #tpu.memory_space<vmem>>, vector<1x512xf32>
    %10 = vector.broadcast %9 : vector<1x512xf32> to vector<32x512xf32>
    %11 = arith.addf %8, %10 : vector<32x512xf32>
    %12 = vector.extract_strided_slice %11 {offsets = [0, 0], sizes = [32, 384], strides = [1, 1]} : vector<32x512xf32> to vector<32x384xf32>
    %13 = vector.extract_strided_slice %11 {offsets = [0, 384], sizes = [32, 128], strides = [1, 1]} : vector<32x512xf32> to vector<32x128xf32>
    %cst_9 = arith.constant 0.000000e+00 : f32
    %14 = vector.broadcast %cst_9 : f32 to vector<32x384xf32>
    %15 = arith.cmpf oge, %12, %14 : vector<32x384xf32>
    %16 = vector.broadcast %0 : f32 to vector<32x384xf32>
    %17 = arith.mulf %16, %12 : vector<32x384xf32>
    %18 = arith.select %15, %12, %17 : vector<32x384xi1>, vector<32x384xf32>
    %19 = arith.truncf %18 : vector<32x384xf32> to vector<32x384xbf16>
    %cst_10 = arith.constant 0.000000e+00 : f32
    %20 = vector.broadcast %cst_10 : f32 to vector<32x384xf32>
    %c0_11 = arith.constant 0 : index
    %c0_12 = arith.constant 0 : index
    %c0_13 = arith.constant 0 : index
    %21 = vector.load %arg6[%c0_11, %c0_12, %c0_13] : memref<3x32x32xbf16, #tpu.memory_space<vmem>>, vector<1x32x32xbf16>
    %22 = vector.shape_cast %21 : vector<1x32x32xbf16> to vector<32x32xbf16>
    %cst_14 = arith.constant dense<0.000000e+00> : vector<32x384xf32>
    %23 = tpu.matmul %22, %19, %cst_14 {dimension_numbers = #tpu.dot_dimension_numbers<[1], [0], [0], [1], [0, 0, 1, 1], [], []>} : vector<32x32xbf16>, vector<32x384xbf16>, vector<32x384xf32> -> vector<32x384xf32>
    %24 = arith.truncf %23 : vector<32x384xf32> to vector<32x384xbf16>
    %c0_15 = arith.constant 0 : index
    %c0_16 = arith.constant 0 : index
    %c0_17 = arith.constant 0 : index
    %25 = vector.load %arg5[%c0_15, %c0_16, %c0_17] : memref<3x384x384xbf16, #tpu.memory_space<vmem>>, vector<1x384x384xbf16>
    %26 = vector.shape_cast %25 : vector<1x384x384xbf16> to vector<384x384xbf16>
    %cst_18 = arith.constant dense<0.000000e+00> : vector<32x384xf32>
    %27 = tpu.matmul %24, %26, %cst_18 {dimension_numbers = #tpu.dot_dimension_numbers<[1], [0], [0], [1], [0, 0, 1, 1], [], []>} : vector<32x384xbf16>, vector<384x384xbf16>, vector<32x384xf32> -> vector<32x384xf32>
    %28 = arith.addf %20, %27 : vector<32x384xf32>
    %c1 = arith.constant 1 : index
    %c0_19 = arith.constant 0 : index
    %c0_20 = arith.constant 0 : index
    %29 = vector.load %arg5[%c1, %c0_19, %c0_20] : memref<3x384x384xbf16, #tpu.memory_space<vmem>>, vector<1x384x384xbf16>
    %30 = vector.shape_cast %29 : vector<1x384x384xbf16> to vector<384x384xbf16>
    %cst_21 = arith.constant dense<0.000000e+00> : vector<32x384xf32>
    %31 = tpu.matmul %19, %30, %cst_21 {dimension_numbers = #tpu.dot_dimension_numbers<[1], [0], [0], [1], [0, 0, 1, 1], [], []>} : vector<32x384xbf16>, vector<384x384xbf16>, vector<32x384xf32> -> vector<32x384xf32>
    %32 = arith.addf %28, %31 : vector<32x384xf32>
    %c2 = arith.constant 2 : index
    %c0_22 = arith.constant 0 : index
    %c0_23 = arith.constant 0 : index
    %33 = vector.load %arg6[%c2, %c0_22, %c0_23] : memref<3x32x32xbf16, #tpu.memory_space<vmem>>, vector<1x32x32xbf16>
    %34 = vector.shape_cast %33 : vector<1x32x32xbf16> to vector<32x32xbf16>
    %cst_24 = arith.constant dense<0.000000e+00> : vector<32x384xf32>
    %35 = tpu.matmul %34, %19, %cst_24 {dimension_numbers = #tpu.dot_dimension_numbers<[1], [0], [0], [1], [0, 0, 1, 1], [], []>} : vector<32x32xbf16>, vector<32x384xbf16>, vector<32x384xf32> -> vector<32x384xf32>
    %36 = arith.truncf %35 : vector<32x384xf32> to vector<32x384xbf16>
    %c2_25 = arith.constant 2 : index
    %c0_26 = arith.constant 0 : index
    %c0_27 = arith.constant 0 : index
    %37 = vector.load %arg5[%c2_25, %c0_26, %c0_27] : memref<3x384x384xbf16, #tpu.memory_space<vmem>>, vector<1x384x384xbf16>
    %38 = vector.shape_cast %37 : vector<1x384x384xbf16> to vector<384x384xbf16>
    %cst_28 = arith.constant dense<0.000000e+00> : vector<32x384xf32>
    %39 = tpu.matmul %36, %38, %cst_28 {dimension_numbers = #tpu.dot_dimension_numbers<[1], [0], [0], [1], [0, 0, 1, 1], [], []>} : vector<32x384xbf16>, vector<384x384xbf16>, vector<32x384xf32> -> vector<32x384xf32>
    %40 = arith.addf %32, %39 : vector<32x384xf32>
    %c0_29 = arith.constant 0 : index
    %c0_30 = arith.constant 0 : index
    %41 = vector.load %arg7[%c0_29, %c0_30] : memref<1x384xf32, #tpu.memory_space<vmem>>, vector<1x384xf32>
    %42 = vector.broadcast %41 : vector<1x384xf32> to vector<32x384xf32>
    %43 = arith.mulf %40, %42 : vector<32x384xf32>
    %c0_31 = arith.constant 0 : index
    %c0_32 = arith.constant 0 : index
    %44 = vector.load %arg8[%c0_31, %c0_32] : memref<1x384xf32, #tpu.memory_space<vmem>>, vector<1x384xf32>
    %45 = vector.broadcast %44 : vector<1x384xf32> to vector<32x384xf32>
    %46 = arith.addf %43, %45 : vector<32x384xf32>
    %cst_33 = arith.constant 0.000000e+00 : f32
    %47 = vector.broadcast %cst_33 : f32 to vector<32x384xf32>
    %48 = arith.cmpf oge, %46, %47 : vector<32x384xf32>
    %49 = vector.broadcast %0 : f32 to vector<32x384xf32>
    %50 = arith.mulf %49, %46 : vector<32x384xf32>
    %51 = arith.select %48, %46, %50 : vector<32x384xi1>, vector<32x384xf32>
    %52 = arith.truncf %51 : vector<32x384xf32> to vector<32x384xbf16>
    %c0_34 = arith.constant 0 : index
    %c0_35 = arith.constant 0 : index
    %53 = vector.load %arg9[%c0_34, %c0_35] : memref<384x128xbf16, #tpu.memory_space<vmem>>, vector<384x128xbf16>
    %cst_36 = arith.constant dense<0.000000e+00> : vector<32x128xf32>
    %54 = tpu.matmul %52, %53, %cst_36 {dimension_numbers = #tpu.dot_dimension_numbers<[1], [0], [0], [1], [0, 0, 1, 1], [], []>} : vector<32x384xbf16>, vector<384x128xbf16>, vector<32x128xf32> -> vector<32x128xf32>
    %c0_37 = arith.constant 0 : index
    %c0_38 = arith.constant 0 : index
    %55 = vector.load %arg10[%c0_37, %c0_38] : memref<1x128xf32, #tpu.memory_space<vmem>>, vector<1x128xf32>
    %56 = vector.broadcast %55 : vector<1x128xf32> to vector<32x128xf32>
    %57 = arith.mulf %54, %56 : vector<32x128xf32>
    %c0_39 = arith.constant 0 : index
    %c0_40 = arith.constant 0 : index
    %58 = vector.load %arg11[%c0_39, %c0_40] : memref<1x128xf32, #tpu.memory_space<vmem>>, vector<1x128xf32>
    %59 = vector.broadcast %58 : vector<1x128xf32> to vector<32x128xf32>
    %60 = arith.addf %57, %59 : vector<32x128xf32>
    %61 = arith.addf %60, %13 : vector<32x128xf32>
    %62 = vector.shape_cast %61 : vector<32x128xf32> to vector<2x16x128xf32>
    %c0_41 = arith.constant 0 : index
    %c0_42 = arith.constant 0 : index
    %c0_43 = arith.constant 0 : index
    %63 = vector.load %arg13[%c0_41, %c0_42, %c0_43] : memref<2x16x128xf32, #tpu.memory_space<vmem>>, vector<2x16x128xf32>
    tpu.vector_store %arg13[%c0_41, %c0_42, %c0_43], %62 {strides = array<i32>} : memref<2x16x128xf32, #tpu.memory_space<vmem>>, vector<2x16x128xf32>,
    return
  }
  func.func @transform_0(%arg0: i32) -> (i32, i32, i32) {
    %c0_i32 = arith.constant 0 : i32
    %c0_i32_0 = arith.constant 0 : i32
    %c0_i32_1 = arith.constant 0 : i32
    return %arg0, %c0_i32, %c0_i32_0 : i32, i32, i32
  }
  func.func @transform_1(%arg0: i32) -> (i32, i32) {
    %c0_i32 = arith.constant 0 : i32
    %c0_i32_0 = arith.constant 0 : i32
    %c0_i32_1 = arith.constant 0 : i32
    return %c0_i32, %c0_i32_0 : i32, i32
  }
  func.func @transform_2(%arg0: i32) -> (i32, i32) {
    %c0_i32 = arith.constant 0 : i32
    %c0_i32_0 = arith.constant 0 : i32
    %c0_i32_1 = arith.constant 0 : i32
    return %c0_i32, %c0_i32_0 : i32, i32
  }
  func.func @transform_3(%arg0: i32) -> (i32, i32) {
    %c0_i32 = arith.constant 0 : i32
    %c0_i32_0 = arith.constant 0 : i32
    %c0_i32_1 = arith.constant 0 : i32
    return %c0_i32, %c0_i32_0 : i32, i32
  }
  func.func @transform_4(%arg0: i32) -> (i32, i32, i32) {
    %c0_i32 = arith.constant 0 : i32
    %c0_i32_0 = arith.constant 0 : i32
    %c0_i32_1 = arith.constant 0 : i32
    %c0_i32_2 = arith.constant 0 : i32
    return %c0_i32, %c0_i32_0, %c0_i32_1 : i32, i32, i32
  }
  func.func @transform_5(%arg0: i32) -> (i32, i32, i32) {
    %c0_i32 = arith.constant 0 : i32
    %c0_i32_0 = arith.constant 0 : i32
    %c0_i32_1 = arith.constant 0 : i32
    %c0_i32_2 = arith.constant 0 : i32
    return %c0_i32, %c0_i32_0, %c0_i32_1 : i32, i32, i32
  }
  func.func @transform_6(%arg0: i32) -> (i32, i32) {
    %c0_i32 = arith.constant 0 : i32
    %c0_i32_0 = arith.constant 0 : i32
    %c0_i32_1 = arith.constant 0 : i32
    return %c0_i32, %c0_i32_0 : i32, i32
  }
  func.func @transform_7(%arg0: i32) -> (i32, i32) {
    %c0_i32 = arith.constant 0 : i32
    %c0_i32_0 = arith.constant 0 : i32
    %c0_i32_1 = arith.constant 0 : i32
    return %c0_i32, %c0_i32_0 : i32, i32
  }
  func.func @transform_8(%arg0: i32) -> (i32, i32) {
    %c0_i32 = arith.constant 0 : i32
    %c0_i32_0 = arith.constant 0 : i32
    %c0_i32_1 = arith.constant 0 : i32
    return %c0_i32, %c0_i32_0 : i32, i32
  }
  func.func @transform_9(%arg0: i32) -> (i32, i32) {
    %c0_i32 = arith.constant 0 : i32
    %c0_i32_0 = arith.constant 0 : i32
    %c0_i32_1 = arith.constant 0 : i32
    return %c0_i32, %c0_i32_0 : i32, i32
  }
  func.func @transform_10(%arg0: i32) -> (i32, i32) {
    %c0_i32 = arith.constant 0 : i32
    %c0_i32_0 = arith.constant 0 : i32
    %c0_i32_1 = arith.constant 0 : i32
    return %c0_i32, %c0_i32_0 : i32, i32
  }
  func.func @transform_11(%arg0: i32) -> i32 {
    %c0_i32 = arith.constant 0 : i32
    %c0_i32_0 = arith.constant 0 : i32
    return %c0_i32 : i32
  }
  func.func @transform_12(%arg0: i32) -> (i32, i32, i32) {
    %c0_i32 = arith.constant 0 : i32
    %c0_i32_0 = arith.constant 0 : i32
    %c0_i32_1 = arith.constant 0 : i32
    return %arg0, %c0_i32, %c0_i32_0 : i32, i32, i32
  }
}

</mosaic_0001>

<llo_original>
// kernel: tpu_custom_call.1
$region0: #{tpu_custom_call.1}
  #allocation0 [shape = 'u32[]', space=smem, size = 0x4, offset = 0x4, fixed_abs, tag = 'smem constant byte address 0x4 - core index']
  #allocation1 [shape = 'u32[144,128]{1,0:T(1,128)}', space=vmem, size = 0x12000, scoped, tag = 'internal scratch']
  #allocation2 [shape = 'f32[1]{0:T(128)S(6)}', space=smem, size = 0x200, scoped, tag = 'scoped memory for tpu_custom_call.1']
  %s0 = inlined_call_operand.hbm [shape: f32[4,16,64], index: 0, kind: input, shape index: {}]
  %s1 = inlined_call_operand.hbm [shape: bf16[64,512], index: 1, kind: input, shape index: {}]
  %s2 = inlined_call_operand.vmem [shape: f32[1,512], index: 2, kind: input, shape index: {}]
  %s3 = inlined_call_operand.vmem [shape: f32[1,512], index: 3, kind: input, shape index: {}]
  %s4 = inlined_call_operand.hbm [shape: bf16[3,384,384], index: 4, kind: input, shape index: {}]
  %s5 = inlined_call_operand.hbm [shape: bf16[3,32,32], index: 5, kind: input, shape index: {}]
  %s6 = inlined_call_operand.vmem [shape: f32[1,384], index: 6, kind: input, shape index: {}]
  %s7 = inlined_call_operand.vmem [shape: f32[1,384], index: 7, kind: input, shape index: {}]
  %s8 = inlined_call_operand.hbm [shape: bf16[384,128], index: 8, kind: input, shape index: {}]
  %s9 = inlined_call_operand.vmem [shape: f32[1,128], index: 9, kind: input, shape index: {}]
  %s10 = inlined_call_operand.vmem [shape: f32[1,128], index: 10, kind: input, shape index: {}]
  %s11 = inlined_call_operand.<no memory space> [shape: f32[1], index: 11, kind: input, shape index: {}]
  %s12 = inlined_call_operand.hbm [shape: f32[4,16,128], index: 12, kind: output, shape index: {}]
  %s13 = sld [smem:[#allocation0]]
  $region101: #{tpu_custom_call.1} parent=0
    _
  %s15 = ssub.s32 1, %s13
  %s16 = scalar_select 0, %s15, %s13
  %17 = sst [smem:[#allocation2]] %s11
  $region1: #{tpu_custom_call.1} parent=0
    #allocation3 [shape = 'u8[32768]{0}', space=vmem, size = 0x8000, scoped, tag = 'input window, operand 0']
    #allocation4 [shape = 's32[2]{0}', space=sflag, size = 0x8, scoped, tag = 'scoped memory for tpu_custom_call.1']
    #allocation5 [shape = 's32[2]{0}', space=sflag, size = 0x8, scoped, tag = 'scoped memory for tpu_custom_call.1']
    #allocation6 [shape = 'u8[65536]{0}', space=vmem, size = 0x10000, scoped, tag = 'input window, operand 1, single buffered']
    #allocation7 [shape = 's32[1]{0}', space=sflag, size = 0x4, scoped, tag = 'scoped memory for tpu_custom_call.1']
    #allocation8 [shape = 'u8[884736]{0}', space=vmem, size = 0xd8000, scoped, tag = 'input window, operand 4, single buffered']
    #allocation9 [shape = 'u8[24576]{0}', space=vmem, size = 0x6000, scoped, tag = 'input window, operand 5, single buffered']
    #allocation10 [shape = 's32[1]{0}', space=sflag, size = 0x4, scoped, tag = 'scoped memory for tpu_custom_call.1']
    #allocation11 [shape = 'u8[98304]{0}', space=vmem, size = 0x18000, scoped, tag = 'input window, operand 8, single buffered']
    #allocation12 [shape = 'u8[32768]{0}', space=vmem, size = 0x8000, scoped, tag = 'output window, operand 0']
    %18 = vsyncpa [#allocation4], 0
    %s19 = scalar_lea.sflag [#allocation4], 1
    %20 = vsyncpa %s19, 0
    %21 = vsyncpa [#allocation7], 0
    %22 = vsyncpa [#allocation10], 0
    %23 = vsyncpa [#allocation5], 0
    %s24 = scalar_lea.sflag [#allocation5], 1
    %25 = vsyncpa %s24, 0
    loop: start=0, step=1, limit=4
    $region2: #{tpu_custom_call.1} parent=1 // loop_pre_header
      _
    $region3: #{tpu_custom_call.1} parent=1 // loop_header
      %s27 = sphi 0, %s31
      %p28 = scmp.ge.s32.totalorder %s27, 4
      %s37 = sphi 0, %s39
      %s40 = sphi 0, %s37
      %s41 = sphi 0, %s40
      %s57 = sphi 0, %s41
      %s61 = sphi 0, %s61
      %s63 = sphi 0, %s61
      %s64 = sphi 0, %s63
      %s78 = sphi 0, %s64
      %s82 = sphi 0, %s82
      %s84 = sphi 0, %s82
      %s85 = sphi 0, %s84
      %s99 = sphi 0, %s85
      %s103 = sphi 0, %s103
      %s105 = sphi 0, %s103
      %s106 = sphi 0, %s105
      %s120 = sphi 0, %s106
      %s124 = sphi 0, %s124
      %s126 = sphi 0, %s124
      %s127 = sphi 0, %s126
      %s141 = sphi 0, %s127
      %s145 = sphi 0, %s145
      %s147 = sphi 0, %s145
      %s148 = sphi 0, %s147
      %s162 = sphi 0, %s148
      %s166 = sphi 0, %s166
      %s168 = sphi 0, %s166
      %s169 = sphi 0, %s168
      %s183 = sphi 0, %s169
      %s187 = sphi 0, %s187
      %s189 = sphi 0, %s187
      %s190 = sphi 0, %s189
      %s204 = sphi 0, %s190
      %s208 = sphi 0, %s208
      %s210 = sphi 0, %s208
      %s211 = sphi 0, %s210
      %s225 = sphi 0, %s211
      %s229 = sphi 0, %s229
      %s231 = sphi 0, %s229
      %s232 = sphi 0, %s231
      %s246 = sphi 0, %s232
      %s250 = sphi 0, %s250
      %s252 = sphi 0, %s250
      %s253 = sphi 0, %s252
      %s267 = sphi 0, %s253
      %s271 = sphi 0, %s271
      %s273 = sphi 0, %s271
      %s274 = sphi 0, %s273
      %s288 = sphi 0, %s274
      %s294 = sphi 0, %s296
      %s297 = sphi 0, %s294
      %s298 = sphi 0, %s297
      %s314 = sphi 0, %s298
    $region4: #{tpu_custom_call.1} parent=1 // loop_header_branch
      %30 = sbr.rel (%p28) target = $region8
    $region5: #{tpu_custom_call.1} parent=1 // loop_body
      %s32 = ssub.s32 %s27, 1
      %s33 = ssub.s32 %s27, 2
      %s34 = sadd.s32 %s27, 1
      %s35 = ssub.s32 %s27, %s34
      %p36 = scmp.eq.s32.totalorder %s35, 0
      %s38 = sadd.s32 %s37, 1
      %s39 = scalar_select %p36, %s37, %s38
      %p42 = pneg %p36
      %p43 = scmp.eq.s32.totalorder %s27, 1
      %p44 = por %p42, %p43
      %p45 = scmp.ne.s32.totalorder %s37, %s40
      %p46 = scmp.eq.s32.totalorder %s27, 0
      %p47 = por %p45, %p46
      %p48 = scmp.ne.s32.totalorder %s37, %s40
      %p49 = scmp.eq.s32.totalorder %s32, 1
      %p50 = por %p48, %p49
      %p51 = scmp.ne.s32.totalorder %s40, %s41
      %p52 = scmp.eq.s32.totalorder %s32, 0
      %p53 = por %p51, %p52
      %p54 = scmp.ne.s32.totalorder %s40, %s41
      %p55 = scmp.eq.s32.totalorder %s33, 1
      %p56 = por %p54, %p55
      %p58 = scmp.ne.s32.totalorder %s41, %s57
      %p59 = scmp.eq.s32.totalorder %s33, 0
      %p60 = por %p58, %p59
      %s62 = sadd.s32 %s61, 1
      %p65 = scmp.eq.s32.totalorder %s27, 1
      %p66 = scmp.ne.s32.totalorder %s61, %s63
      %p67 = scmp.eq.s32.totalorder %s27, 0
      %p68 = por %p66, %p67
      %p69 = scmp.ne.s32.totalorder %s61, %s63
      %p70 = scmp.eq.s32.totalorder %s32, 1
      %p71 = por %p69, %p70
      %p72 = scmp.ne.s32.totalorder %s63, %s64
      %p73 = scmp.eq.s32.totalorder %s32, 0
      %p74 = por %p72, %p73
      %p75 = scmp.ne.s32.totalorder %s63, %s64
      %p76 = scmp.eq.s32.totalorder %s33, 1
      %p77 = por %p75, %p76
      %p79 = scmp.ne.s32.totalorder %s64, %s78
      %p80 = scmp.eq.s32.totalorder %s33, 0
      %p81 = por %p79, %p80
      %s83 = sadd.s32 %s82, 1
      %p86 = scmp.eq.s32.totalorder %s27, 1
      %p87 = scmp.ne.s32.totalorder %s82, %s84
      %p88 = scmp.eq.s32.totalorder %s27, 0
      %p89 = por %p87, %p88
      %p90 = scmp.ne.s32.totalorder %s82, %s84
      %p91 = scmp.eq.s32.totalorder %s32, 1
      %p92 = por %p90, %p91
      %p93 = scmp.ne.s32.totalorder %s84, %s85
      %p94 = scmp.eq.s32.totalorder %s32, 0
      %p95 = por %p93, %p94
      %p96 = scmp.ne.s32.totalorder %s84, %s85
      %p97 = scmp.eq.s32.totalorder %s33, 1
      %p98 = por %p96, %p97
      %p100 = scmp.ne.s32.totalorder %s85, %s99
      %p101 = scmp.eq.s32.totalorder %s33, 0
      %p102 = por %p100, %p101
      %s104 = sadd.s32 %s103, 1
      %p107 = scmp.eq.s32.totalorder %s27, 1
      %p108 = scmp.ne.s32.totalorder %s103, %s105
      %p109 = scmp.eq.s32.totalorder %s27, 0
      %p110 = por %p108, %p109
      %p111 = scmp.ne.s32.totalorder %s103, %s105
      %p112 = scmp.eq.s32.totalorder %s32, 1
      %p113 = por %p111, %p112
      %p114 = scmp.ne.s32.totalorder %s105, %s106
      %p115 = scmp.eq.s32.totalorder %s32, 0
      %p116 = por %p114, %p115
      %p117 = scmp.ne.s32.totalorder %s105, %s106
      %p118 = scmp.eq.s32.totalorder %s33, 1
      %p119 = por %p117, %p118
      %p121 = scmp.ne.s32.totalorder %s106, %s120
      %p122 = scmp.eq.s32.totalorder %s33, 0
      %p123 = por %p121, %p122
      %s125 = sadd.s32 %s124, 1
      %p128 = scmp.eq.s32.totalorder %s27, 1
      %p129 = scmp.ne.s32.totalorder %s124, %s126
      %p130 = scmp.eq.s32.totalorder %s27, 0
      %p131 = por %p129, %p130
      %p132 = scmp.ne.s32.totalorder %s124, %s126
      %p133 = scmp.eq.s32.totalorder %s32, 1
      %p134 = por %p132, %p133
      %p135 = scmp.ne.s32.totalorder %s126, %s127
      %p136 = scmp.eq.s32.totalorder %s32, 0
      %p137 = por %p135, %p136
      %p138 = scmp.ne.s32.totalorder %s126, %s127
      %p139 = scmp.eq.s32.totalorder %s33, 1
      %p140 = por %p138, %p139
      %p142 = scmp.ne.s32.totalorder %s127, %s141
      %p143 = scmp.eq.s32.totalorder %s33, 0
      %p144 = por %p142, %p143
      %s146 = sadd.s32 %s145, 1
      %p149 = scmp.eq.s32.totalorder %s27, 1
      %p150 = scmp.ne.s32.totalorder %s145, %s147
      %p151 = scmp.eq.s32.totalorder %s27, 0
      %p152 = por %p150, %p151
      %p153 = scmp.ne.s32.totalorder %s145, %s147
      %p154 = scmp.eq.s32.totalorder %s32, 1
      %p155 = por %p153, %p154
      %p156 = scmp.ne.s32.totalorder %s147, %s148
      %p157 = scmp.eq.s32.totalorder %s32, 0
      %p158 = por %p156, %p157
      %p159 = scmp.ne.s32.totalorder %s147, %s148
      %p160 = scmp.eq.s32.totalorder %s33, 1
      %p161 = por %p159, %p160
      %p163 = scmp.ne.s32.totalorder %s148, %s162
      %p164 = scmp.eq.s32.totalorder %s33, 0
      %p165 = por %p163, %p164
      %s167 = sadd.s32 %s166, 1
      %p170 = scmp.eq.s32.totalorder %s27, 1
      %p171 = scmp.ne.s32.totalorder %s166, %s168
      %p172 = scmp.eq.s32.totalorder %s27, 0
      %p173 = por %p171, %p172
      %p174 = scmp.ne.s32.totalorder %s166, %s168
      %p175 = scmp.eq.s32.totalorder %s32, 1
      %p176 = por %p174, %p175
      %p177 = scmp.ne.s32.totalorder %s168, %s169
      %p178 = scmp.eq.s32.totalorder %s32, 0
      %p179 = por %p177, %p178
      %p180 = scmp.ne.s32.totalorder %s168, %s169
      %p181 = scmp.eq.s32.totalorder %s33, 1
      %p182 = por %p180, %p181
      %p184 = scmp.ne.s32.totalorder %s169, %s183
      %p185 = scmp.eq.s32.totalorder %s33, 0
      %p186 = por %p184, %p185
      %s188 = sadd.s32 %s187, 1
      %p191 = scmp.eq.s32.totalorder %s27, 1
      %p192 = scmp.ne.s32.totalorder %s187, %s189
      %p193 = scmp.eq.s32.totalorder %s27, 0
      %p194 = por %p192, %p193
      %p195 = scmp.ne.s32.totalorder %s187, %s189
      %p196 = scmp.eq.s32.totalorder %s32, 1
      %p197 = por %p195, %p196
      %p198 = scmp.ne.s32.totalorder %s189, %s190
      %p199 = scmp.eq.s32.totalorder %s32, 0
      %p200 = por %p198, %p199
      %p201 = scmp.ne.s32.totalorder %s189, %s190
      %p202 = scmp.eq.s32.totalorder %s33, 1
      %p203 = por %p201, %p202
      %p205 = scmp.ne.s32.totalorder %s190, %s204
      %p206 = scmp.eq.s32.totalorder %s33, 0
      %p207 = por %p205, %p206
      %s209 = sadd.s32 %s208, 1
      %p212 = scmp.eq.s32.totalorder %s27, 1
      %p213 = scmp.ne.s32.totalorder %s208, %s210
      %p214 = scmp.eq.s32.totalorder %s27, 0
      %p215 = por %p213, %p214
      %p216 = scmp.ne.s32.totalorder %s208, %s210
      %p217 = scmp.eq.s32.totalorder %s32, 1
      %p218 = por %p216, %p217
      %p219 = scmp.ne.s32.totalorder %s210, %s211
      %p220 = scmp.eq.s32.totalorder %s32, 0
      %p221 = por %p219, %p220
      %p222 = scmp.ne.s32.totalorder %s210, %s211
      %p223 = scmp.eq.s32.totalorder %s33, 1
      %p224 = por %p222, %p223
      %p226 = scmp.ne.s32.totalorder %s211, %s225
      %p227 = scmp.eq.s32.totalorder %s33, 0
      %p228 = por %p226, %p227
      %s230 = sadd.s32 %s229, 1
      %p233 = scmp.eq.s32.totalorder %s27, 1
      %p234 = scmp.ne.s32.totalorder %s229, %s231
      %p235 = scmp.eq.s32.totalorder %s27, 0
      %p236 = por %p234, %p235
      %p237 = scmp.ne.s32.totalorder %s229, %s231
      %p238 = scmp.eq.s32.totalorder %s32, 1
      %p239 = por %p237, %p238
      %p240 = scmp.ne.s32.totalorder %s231, %s232
      %p241 = scmp.eq.s32.totalorder %s32, 0
      %p242 = por %p240, %p241
      %p243 = scmp.ne.s32.totalorder %s231, %s232
      %p244 = scmp.eq.s32.totalorder %s33, 1
      %p245 = por %p243, %p244
      %p247 = scmp.ne.s32.totalorder %s232, %s246
      %p248 = scmp.eq.s32.totalorder %s33, 0
      %p249 = por %p247, %p248
      %s251 = sadd.s32 %s250, 1
      %p254 = scmp.eq.s32.totalorder %s27, 1
      %p255 = scmp.ne.s32.totalorder %s250, %s252
      %p256 = scmp.eq.s32.totalorder %s27, 0
      %p257 = por %p255, %p256
      %p258 = scmp.ne.s32.totalorder %s250, %s252
      %p259 = scmp.eq.s32.totalorder %s32, 1
      %p260 = por %p258, %p259
      %p261 = scmp.ne.s32.totalorder %s252, %s253
      %p262 = scmp.eq.s32.totalorder %s32, 0
      %p263 = por %p261, %p262
      %p264 = scmp.ne.s32.totalorder %s252, %s253
      %p265 = scmp.eq.s32.totalorder %s33, 1
      %p266 = por %p264, %p265
      %p268 = scmp.ne.s32.totalorder %s253, %s267
      %p269 = scmp.eq.s32.totalorder %s33, 0
      %p270 = por %p268, %p269
      %s272 = sadd.s32 %s271, 1
      %p275 = scmp.eq.s32.totalorder %s27, 1
      %p276 = scmp.ne.s32.totalorder %s271, %s273
      %p277 = scmp.eq.s32.totalorder %s27, 0
      %p278 = por %p276, %p277
      %p279 = scmp.ne.s32.totalorder %s271, %s273
      %p280 = scmp.eq.s32.totalorder %s32, 1
      %p281 = por %p279, %p280
      %p282 = scmp.ne.s32.totalorder %s273, %s274
      %p283 = scmp.eq.s32.totalorder %s32, 0
      %p284 = por %p282, %p283
      %p285 = scmp.ne.s32.totalorder %s273, %s274
      %p286 = scmp.eq.s32.totalorder %s33, 1
      %p287 = por %p285, %p286
      %p289 = scmp.ne.s32.totalorder %s274, %s288
      %p290 = scmp.eq.s32.totalorder %s33, 0
      %p291 = por %p289, %p290
      %s292 = ssub.s32 %s27, %s34
      %p293 = scmp.eq.s32.totalorder %s292, 0
      %s295 = sadd.s32 %s294, 1
      %s296 = scalar_select %p293, %s294, %s295
      %p299 = pneg %p293
      %p300 = scmp.eq.s32.totalorder %s27, 1
      %p301 = por %p299, %p300
      %p302 = scmp.ne.s32.totalorder %s294, %s297
      %p303 = scmp.eq.s32.totalorder %s27, 0
      %p304 = por %p302, %p303
      %p305 = scmp.ne.s32.totalorder %s294, %s297
      %p306 = scmp.eq.s32.totalorder %s32, 1
      %p307 = por %p305, %p306
      %p308 = scmp.ne.s32.totalorder %s297, %s298
      %p309 = scmp.eq.s32.totalorder %s32, 0
      %p310 = por %p308, %p309
      %p311 = scmp.ne.s32.totalorder %s297, %s298
      %p312 = scmp.eq.s32.totalorder %s33, 1
      %p313 = por %p311, %p312
      %p315 = scmp.ne.s32.totalorder %s298, %s314
      %p316 = scmp.eq.s32.totalorder %s33, 0
      %p317 = por %p315, %p316
      %p318 = scmp.le.s32.totalorder 1, %s27
      %p319 = scmp.lt.s32.totalorder %s27, 3
      %p320 = pnand %p318, %p319
      %p321 = pneg %p320
      // Predicated region
      $region9: #{tpu_custom_call.1} parent=5 // pred_check
        _
      $region10: #{tpu_custom_call.1} parent=5 // pred_check_branch
        %323 = sbr.rel (%p320) target = $region12
      $region11: #{tpu_custom_call.1} parent=5 // pred_region
        %s324 = ssub.s32 %s27, 1
        // Predicated region
        $region13: #{tpu_custom_call.1} parent=11 // pred_check
          %p325 = pneg %p74
        $region14: #{tpu_custom_call.1} parent=11 // pred_check_branch
          %327 = sbr.rel (%p325) target = $region16
        $region15: #{tpu_custom_call.1} parent=11 // pred_region
          %s329 = ssub.s32 2048, 2048
          %330 = vsyncadd [#allocation7], %s329
          %s331 = sshll.u32 [#allocation6], 4
          %s332 = int_to_ptr.vmem [resolvable:$true] %s331
          %337 = dma.hbm_to_vmem [thread:$0]  %s1, 2048, %s332, [#allocation7], 256, 256, 16
        $region16: #{tpu_custom_call.1} parent=11 // pred_fallthru
          _
        // Predicated region
        $region17: #{tpu_custom_call.1} parent=11 // pred_check
          %p338 = pneg %p95
        $region18: #{tpu_custom_call.1} parent=11 // pred_check_branch
          %340 = sbr.rel (%p338) target = $region20
        $region19: #{tpu_custom_call.1} parent=11 // pred_region
          _
        $region20: #{tpu_custom_call.1} parent=11 // pred_fallthru
          _
        // Predicated region
        $region21: #{tpu_custom_call.1} parent=11 // pred_check
          %p341 = pneg %p116
        $region22: #{tpu_custom_call.1} parent=11 // pred_check_branch
          %343 = sbr.rel (%p341) target = $region24
        $region23: #{tpu_custom_call.1} parent=11 // pred_region
          _
        $region24: #{tpu_custom_call.1} parent=11 // pred_fallthru
          _
        // Predicated region
        $region25: #{tpu_custom_call.1} parent=11 // pred_check
          %p344 = pneg %p137
        $region26: #{tpu_custom_call.1} parent=11 // pred_check_branch
          %346 = sbr.rel (%p344) target = $region28
        $region27: #{tpu_custom_call.1} parent=11 // pred_region
          %s348 = ssub.s32 27648, 27648
          %349 = vsyncadd [#allocation7], %s348
          %s350 = sshll.u32 [#allocation8], 4
          %s351 = int_to_ptr.vmem [resolvable:$true] %s350
          %356 = dma.hbm_to_vmem [thread:$0]  %s4, 27648, %s351, [#allocation7], 192, 192, 12
        $region28: #{tpu_custom_call.1} parent=11 // pred_fallthru
          _
        // Predicated region
        $region29: #{tpu_custom_call.1} parent=11 // pred_check
          %p357 = pneg %p158
        $region30: #{tpu_custom_call.1} parent=11 // pred_check_branch
          %359 = sbr.rel (%p357) target = $region32
        $region31: #{tpu_custom_call.1} parent=11 // pred_region
          %s361 = ssub.s32 768, 768
          %362 = vsyncadd [#allocation10], %s361
          %s363 = sshll.u32 [#allocation9], 4
          %s364 = int_to_ptr.vmem [resolvable:$true] %s363
          %369 = dma.hbm_to_vmem [thread:$0]  %s5, 768, %s364, [#allocation10], 64, 64, 4
        $region32: #{tpu_custom_call.1} parent=11 // pred_fallthru
          _
        // Predicated region
        $region33: #{tpu_custom_call.1} parent=11 // pred_check
          %p370 = pneg %p179
        $region34: #{tpu_custom_call.1} parent=11 // pred_check_branch
          %372 = sbr.rel (%p370) target = $region36
        $region35: #{tpu_custom_call.1} parent=11 // pred_region
          _
        $region36: #{tpu_custom_call.1} parent=11 // pred_fallthru
          _
        // Predicated region
        $region37: #{tpu_custom_call.1} parent=11 // pred_check
          %p373 = pneg %p200
        $region38: #{tpu_custom_call.1} parent=11 // pred_check_branch
          %375 = sbr.rel (%p373) target = $region40
        $region39: #{tpu_custom_call.1} parent=11 // pred_region
          _
        $region40: #{tpu_custom_call.1} parent=11 // pred_fallthru
          _
        // Predicated region
        $region41: #{tpu_custom_call.1} parent=11 // pred_check
          %p376 = pneg %p221
        $region42: #{tpu_custom_call.1} parent=11 // pred_check_branch
          %378 = sbr.rel (%p376) target = $region44
        $region43: #{tpu_custom_call.1} parent=11 // pred_region
          %s380 = ssub.s32 3072, 3072
          %381 = vsyncadd [#allocation10], %s380
          %s382 = sshll.u32 [#allocation11], 4
          %s383 = int_to_ptr.vmem [resolvable:$true] %s382
          %388 = dma.hbm_to_vmem [thread:$0]  %s8, 3072, %s383, [#allocation10], 64, 64, 4
        $region44: #{tpu_custom_call.1} parent=11 // pred_fallthru
          _
        // Predicated region
        $region45: #{tpu_custom_call.1} parent=11 // pred_check
          %p389 = pneg %p242
        $region46: #{tpu_custom_call.1} parent=11 // pred_check_branch
          %391 = sbr.rel (%p389) target = $region48
        $region47: #{tpu_custom_call.1} parent=11 // pred_region
          _
        $region48: #{tpu_custom_call.1} parent=11 // pred_fallthru
          _
        // Predicated region
        $region49: #{tpu_custom_call.1} parent=11 // pred_check
          %p392 = pneg %p263
        $region50: #{tpu_custom_call.1} parent=11 // pred_check_branch
          %394 = sbr.rel (%p392) target = $region52
        $region51: #{tpu_custom_call.1} parent=11 // pred_region
          _
        $region52: #{tpu_custom_call.1} parent=11 // pred_fallthru
          _
        // Predicated region
        $region53: #{tpu_custom_call.1} parent=11 // pred_check
          %p395 = pneg %p284
        $region54: #{tpu_custom_call.1} parent=11 // pred_check_branch
          %397 = sbr.rel (%p395) target = $region56
        $region55: #{tpu_custom_call.1} parent=11 // pred_region
          _
        $region56: #{tpu_custom_call.1} parent=11 // pred_fallthru
          _
      $region12: #{tpu_custom_call.1} parent=5 // pred_fallthru
        _
      %p398 = scmp.lt.s32.totalorder %s27, 2
      // Predicated region
      $region57: #{tpu_custom_call.1} parent=5 // pred_check
        %p399 = pneg %p398
      $region58: #{tpu_custom_call.1} parent=5 // pred_check_branch
        %401 = sbr.rel (%p399) target = $region60
      $region59: #{tpu_custom_call.1} parent=5 // pred_region
        // Predicated region
        $region61: #{tpu_custom_call.1} parent=59 // pred_check
          %p402 = pneg %p47
        $region62: #{tpu_custom_call.1} parent=59 // pred_check_branch
          %404 = sbr.rel (%p402) target = $region64
        $region63: #{tpu_custom_call.1} parent=59 // pred_region
          %s405 = sand.u32 %s37, 1
          %s406 = scalar_lea.sflag [#allocation4], %s405
          %s407 = sand.u32 %s37, 1
          %s408 = smul.addr %s407, 32
          %s409 = scalar_lea.vmem [#allocation3], %s408
          %s410 = smul.u32 2, %s27
          %s412 = ssub.s32 512, 512
          %413 = vsyncadd %s406, %s412
          %s414 = smul.addr %s410, 2
          %s415 = smul.addr %s414, 128
          %s416 = scalar_lea.hbm %s0, %s415
          %s417 = sshll.u32 %s409, 4
          %s418 = int_to_ptr.vmem [resolvable:$true] %s417
          %423 = dma.hbm_to_vmem [thread:$0]  %s416, 512, %s418, %s406, 128, 128, 8
        $region64: #{tpu_custom_call.1} parent=59 // pred_fallthru
          _
      $region60: #{tpu_custom_call.1} parent=5 // pred_fallthru
        _
      %p424 = scmp.le.s32.totalorder 1, %s27
      %p425 = scmp.lt.s32.totalorder %s27, 3
      %p426 = pnand %p424, %p425
      %p427 = pneg %p426
      // Predicated region
      $region65: #{tpu_custom_call.1} parent=5 // pred_check
        _
      $region66: #{tpu_custom_call.1} parent=5 // pred_check_branch
        %429 = sbr.rel (%p426) target = $region68
      $region67: #{tpu_custom_call.1} parent=5 // pred_region
        %s430 = ssub.s32 %s27, 1
        %s431 = sand.u32 %s40, 1
        %s432 = scalar_lea.sflag [#allocation4], %s431
        %s433 = sand.u32 %s40, 1
        %s434 = smul.addr %s433, 32
        %s435 = scalar_lea.vmem [#allocation3], %s434
        // Predicated region
        $region69: #{tpu_custom_call.1} parent=67 // pred_check
          %p436 = pneg %p53
        $region70: #{tpu_custom_call.1} parent=67 // pred_check_branch
          %438 = sbr.rel (%p436) target = $region72
        $region71: #{tpu_custom_call.1} parent=67 // pred_region
          %439 = dma.done %s432, 512
        $region72: #{tpu_custom_call.1} parent=67 // pred_fallthru
          _
        // Predicated region
        $region73: #{tpu_custom_call.1} parent=67 // pred_check
          %p440 = pneg %p74
        $region74: #{tpu_custom_call.1} parent=67 // pred_check_branch
          %442 = sbr.rel (%p440) target = $region76
        $region75: #{tpu_custom_call.1} parent=67 // pred_region
          %443 = dma.done [#allocation7], 2048
        $region76: #{tpu_custom_call.1} parent=67 // pred_fallthru
          _
        // Predicated region
        $region77: #{tpu_custom_call.1} parent=67 // pred_check
          %p444 = pneg %p137
        $region78: #{tpu_custom_call.1} parent=67 // pred_check_branch
          %446 = sbr.rel (%p444) target = $region80
        $region79: #{tpu_custom_call.1} parent=67 // pred_region
          %447 = dma.done [#allocation7], 27648
        $region80: #{tpu_custom_call.1} parent=67 // pred_fallthru
          _
        // Predicated region
        $region81: #{tpu_custom_call.1} parent=67 // pred_check
          %p448 = pneg %p158
        $region82: #{tpu_custom_call.1} parent=67 // pred_check_branch
          %450 = sbr.rel (%p448) target = $region84
        $region83: #{tpu_custom_call.1} parent=67 // pred_region
          %451 = dma.done [#allocation10], 768
        $region84: #{tpu_custom_call.1} parent=67 // pred_fallthru
          _
        // Predicated region
        $region85: #{tpu_custom_call.1} parent=67 // pred_check
          %p452 = pneg %p221
        $region86: #{tpu_custom_call.1} parent=67 // pred_check_branch
          %454 = sbr.rel (%p452) target = $region88
        $region87: #{tpu_custom_call.1} parent=67 // pred_region
          %455 = dma.done [#allocation10], 3072
        $region88: #{tpu_custom_call.1} parent=67 // pred_fallthru
          _
        %s456 = sand.u32 %s40, 1
        %s457 = scalar_lea.sflag [#allocation4], %s456
        %s458 = sand.u32 %s40, 1
        %s459 = smul.addr %s458, 32
        %s460 = scalar_lea.vmem [#allocation3], %s459
        %p461 = pneg %p53
        %p462 = pneg %p50
        %p463 = pneg %p74
        %p464 = pneg %p71
        %p465 = pneg %p95
        %p466 = pneg %p92
        %p467 = pneg %p116
        %p468 = pneg %p113
        %p469 = pneg %p137
        %p470 = pneg %p134
        %p471 = pneg %p158
        %p472 = pneg %p155
        %p473 = pneg %p179
        %p474 = pneg %p176
        %p475 = pneg %p200
        %p476 = pneg %p197
        %p477 = pneg %p221
        %p478 = pneg %p218
        %p479 = pneg %p242
        %p480 = pneg %p239
        %p481 = pneg %p263
        %p482 = pneg %p260
        %p483 = pneg %p284
        %p484 = pneg %p281
        %p485 = pneg %p310
        %p486 = pneg %p307
        %s487 = sand.u32 %s297, 1
        %s488 = scalar_lea.sflag [#allocation5], %s487
        %s489 = sand.u32 %s297, 1
        %s490 = smul.addr %s489, 32
        %s491 = scalar_lea.vmem [#allocation12], %s490
        %s492 = smul.u32 2, %s32
        %s493 = smul.u32 2, %s32
        %s495 = sld [smem:[#allocation2]]
        %v496 = vld [vmem:[%s435] sm:$0xff]
        %v497 = vld [vmem:[%s435 + $0x8] sm:$0xff]
        %v498 = vld [vmem:[%s435 + $0x10] sm:$0xff]
        %v499 = vld [vmem:[%s435 + $0x18] sm:$0xff]
        %v500 = vpack.c.bf16 %v497, %v496
        %v501 = vpack.c.bf16 %v499, %v498
        %v502 = vld [vmem:[#allocation6] sm:$0xff]
        %v503 = vld [vmem:[#allocation6 + $0x8] sm:$0xff]
        %v504 = vld [vmem:[#allocation6 + $0x10] sm:$0xff]
        %v505 = vld [vmem:[#allocation6 + $0x18] sm:$0xff]
        %v506 = vld [vmem:[#allocation6 + $0x20] sm:$0xff]
        %v507 = vld [vmem:[#allocation6 + $0x28] sm:$0xff]
        %v508 = vld [vmem:[#allocation6 + $0x30] sm:$0xff]
        %v509 = vld [vmem:[#allocation6 + $0x38] sm:$0xff]
        %v510 = vld [vmem:[#allocation6 + $0x40] sm:$0xff]
        %v511 = vld [vmem:[#allocation6 + $0x48] sm:$0xff]
        %v512 = vld [vmem:[#allocation6 + $0x50] sm:$0xff]
        %v513 = vld [vmem:[#allocation6 + $0x58] sm:$0xff]
        %v514 = vld [vmem:[#allocation6 + $0x60] sm:$0xff]
        %v515 = vld [vmem:[#allocation6 + $0x68] sm:$0xff]
        %v516 = vld [vmem:[#allocation6 + $0x70] sm:$0xff]
        %v517 = vld [vmem:[#allocation6 + $0x78] sm:$0xff]
        %v534 = vunpack.c.l.b16 %v502
        %v535 = vunpack.c.h.b16 %v502
        %v536 = vunpack.c.l.b16 %v503
        %v537 = vunpack.c.h.b16 %v503
        %v538 = vunpack.c.l.b16 %v504
        %v539 = vunpack.c.h.b16 %v504
        %v540 = vunpack.c.l.b16 %v505
        %v541 = vunpack.c.h.b16 %v505
        %v542 = vunpack.c.l.b16 %v506
        %v543 = vunpack.c.h.b16 %v506
        %v544 = vunpack.c.l.b16 %v507
        %v545 = vunpack.c.h.b16 %v507
        %v546 = vunpack.c.l.b16 %v508
        %v547 = vunpack.c.h.b16 %v508
        %v548 = vunpack.c.l.b16 %v509
        %v549 = vunpack.c.h.b16 %v509
        %v550 = vunpack.c.l.b16 %v510
        %v551 = vunpack.c.h.b16 %v510
        %v552 = vunpack.c.l.b16 %v511
        %v553 = vunpack.c.h.b16 %v511
        %v554 = vunpack.c.l.b16 %v512
        %v555 = vunpack.c.h.b16 %v512
        %v556 = vunpack.c.l.b16 %v513
        %v557 = vunpack.c.h.b16 %v513
        %v558 = vunpack.c.l.b16 %v514
        %v559 = vunpack.c.h.b16 %v514
        %v560 = vunpack.c.l.b16 %v515
        %v561 = vunpack.c.h.b16 %v515
        %v562 = vunpack.c.l.b16 %v516
        %v563 = vunpack.c.h.b16 %v516
        %v564 = vunpack.c.l.b16 %v517
        %v565 = vunpack.c.h.b16 %v517
        %v566 = vpack.c.b16 %v538, %v534
        %v567 = vpack.c.b16 %v539, %v535
        %v568 = vpack.c.b16 %v540, %v536
        %v569 = vpack.c.b16 %v541, %v537
        %v570 = vpack.c.b16 %v546, %v542
        %v571 = vpack.c.b16 %v547, %v543
        %v572 = vpack.c.b16 %v548, %v544
        %v573 = vpack.c.b16 %v549, %v545
        %v574 = vpack.c.b16 %v554, %v550
        %v575 = vpack.c.b16 %v555, %v551
        %v576 = vpack.c.b16 %v556, %v552
        %v577 = vpack.c.b16 %v557, %v553
        %v578 = vpack.c.b16 %v562, %v558
        %v579 = vpack.c.b16 %v563, %v559
        %v580 = vpack.c.b16 %v564, %v560
        %v581 = vpack.c.b16 %v565, %v561
        %vm598 = vcmask 523264
        %v600 = vsel %vm598, %v500, 0
        %v603 = vsel %vm598, %v501, 0
        %605 = vmatprep.subr.bf16.mxu0 %v567
        %606 = vmatpush1.bf16.msra.mxu0 %v566
        %607 = vmatprep.subr.bf16.mxu0 %v571
        %608 = vmatpush1.bf16.msra.mxu0 %v570
        %609 = vmatprep.subr.bf16.mxu0 %v575
        %610 = vmatpush1.bf16.msra.mxu0 %v574
        %611 = vmatprep.subr.bf16.mxu0 %v579
        %612 = vmatpush1.bf16.msra.mxu0 %v578
        %613 = vmatprep.subr.bf16.mxu0 0
        %614 = vmatpush1.bf16.msra.mxu0 0
        %615 = vmatprep.subr.bf16.mxu0 0
        %616 = vmatpush1.bf16.msra.mxu0 0
        %617 = vmatprep.subr.bf16.mxu0 0
        %618 = vmatpush1.bf16.msra.mxu0 0
        %619 = vmatprep.subr.bf16.mxu0 0
        %620 = vmatpush1.bf16.msra.mxu0 0
        %621 = vmatprep.subr.bf16.mxu0 0
        %622 = vmatpush1.bf16.msra.mxu0 0
        %623 = vmatprep.subr.bf16.mxu0 0
        %624 = vmatpush1.bf16.msra.mxu0 0
        %625 = vmatprep.subr.bf16.mxu0 0
        %626 = vmatpush1.bf16.msra.mxu0 0
        %627 = vmatprep.subr.bf16.mxu0 0
        %628 = vmatpush1.bf16.msra.mxu0 0
        %629 = vmatprep.subr.bf16.mxu0 0
        %630 = vmatpush1.bf16.msra.mxu0 0
        %631 = vmatprep.subr.bf16.mxu0 0
        %632 = vmatpush1.bf16.msra.mxu0 0
        %633 = vmatprep.subr.bf16.mxu0 0
        %634 = vmatpush1.bf16.msra.mxu0 0
        %635 = vmatprep.subr.bf16.mxu0 0
        %636 = vmatpush1.bf16.msra.mxu0 0
        %637 = vmatprep.mubr.bf16.mxu0 0
        %638 = vmatmul.mubr.bf16.gmra.mrb[0].mxu0 %v600
        %v639 = vpop.f32.mrb[0].mxu0
        %v640 = vadd.f32 0.0, %v639
        %v641 = vpop.f32.mrb[0].mxu0
        %v642 = vadd.f32 0.0, %v641
        %v643 = vpop.f32.mrb[0].mxu0
        %v644 = vadd.f32 0.0, %v643
        %v645 = vpop.f32.mrb[0].mxu0
        %v646 = vadd.f32 0.0, %v645
        %647 = vmatprep.mubr.bf16.mxu0 0
        %648 = vmatmul.mubr.bf16.gmra.mrb[0].mxu0 %v603
        %v649 = vpop.f32.mrb[0].mxu0
        %v650 = vadd.f32 0.0, %v649
        %v651 = vpop.f32.mrb[0].mxu0
        %v652 = vadd.f32 0.0, %v651
        %v653 = vpop.f32.mrb[0].mxu0
        %v654 = vadd.f32 0.0, %v653
        %v655 = vpop.f32.mrb[0].mxu0
        %v656 = vadd.f32 0.0, %v655
        %657 = vdwg.mxu0
        %658 = vmatprep.subr.bf16.mxu0 %v569
        %659 = vmatpush1.bf16.msra.mxu0 %v568
        %660 = vmatprep.subr.bf16.mxu0 %v573
        %661 = vmatpush1.bf16.msra.mxu0 %v572
        %662 = vmatprep.subr.bf16.mxu0 %v577
        %663 = vmatpush1.bf16.msra.mxu0 %v576
        %664 = vmatprep.subr.bf16.mxu0 %v581
        %665 = vmatpush1.bf16.msra.mxu0 %v580
        %666 = vmatprep.subr.bf16.mxu0 0
        %667 = vmatpush1.bf16.msra.mxu0 0
        %668 = vmatprep.subr.bf16.mxu0 0
        %669 = vmatpush1.bf16.msra.mxu0 0
        %670 = vmatprep.subr.bf16.mxu0 0
        %671 = vmatpush1.bf16.msra.mxu0 0
        %672 = vmatprep.subr.bf16.mxu0 0
        %673 = vmatpush1.bf16.msra.mxu0 0
        %674 = vmatprep.subr.bf16.mxu0 0
        %675 = vmatpush1.bf16.msra.mxu0 0
        %676 = vmatprep.subr.bf16.mxu0 0
        %677 = vmatpush1.bf16.msra.mxu0 0
        %678 = vmatprep.subr.bf16.mxu0 0
        %679 = vmatpush1.bf16.msra.mxu0 0
        %680 = vmatprep.subr.bf16.mxu0 0
        %681 = vmatpush1.bf16.msra.mxu0 0
        %682 = vmatprep.subr.bf16.mxu0 0
        %683 = vmatpush1.bf16.msra.mxu0 0
        %684 = vmatprep.subr.bf16.mxu0 0
        %685 = vmatpush1.bf16.msra.mxu0 0
        %686 = vmatprep.subr.bf16.mxu0 0
        %687 = vmatpush1.bf16.msra.mxu0 0
        %688 = vmatprep.subr.bf16.mxu0 0
        %689 = vmatpush1.bf16.msra.mxu0 0
        %690 = vmatprep.mubr.bf16.mxu0 0
        %691 = vmatmul.mubr.bf16.gmra.mrb[0].mxu0 %v600
        %v692 = vpop.f32.mrb[0].mxu0
        %v693 = vadd.f32 0.0, %v692
        %v694 = vpop.f32.mrb[0].mxu0
        %v695 = vadd.f32 0.0, %v694
        %v696 = vpop.f32.mrb[0].mxu0
        %v697 = vadd.f32 0.0, %v696
        %v698 = vpop.f32.mrb[0].mxu0
        %v699 = vadd.f32 0.0, %v698
        %700 = vmatprep.mubr.bf16.mxu0 0
        %701 = vmatmul.mubr.bf16.gmra.mrb[0].mxu0 %v603
        %v702 = vpop.f32.mrb[0].mxu0
        %v703 = vadd.f32 0.0, %v702
        %v704 = vpop.f32.mrb[0].mxu0
        %v705 = vadd.f32 0.0, %v704
        %v706 = vpop.f32.mrb[0].mxu0
        %v707 = vadd.f32 0.0, %v706
        %v708 = vpop.f32.mrb[0].mxu0
        %v709 = vadd.f32 0.0, %v708
        %710 = vdwg.mxu0
        %v711 = vld [vmem:[%s2] sm:$0xf]
        %v713 = vlaneseq
        %v714 = vshrl.u32 %v713, 7
        %v715 = vsub.s32 0, %v714
        %v716 = vrot.slane %v711, %v715
        %v717 = vlaneseq
        %v718 = vshrl.u32 %v717, 7
        %v719 = vsub.s32 1, %v718
        %v720 = vrot.slane %v711, %v719
        %v721 = vlaneseq
        %v722 = vshrl.u32 %v721, 7
        %v723 = vsub.s32 2, %v722
        %v724 = vrot.slane %v711, %v723
        %v725 = vlaneseq
        %v726 = vshrl.u32 %v725, 7
        %v727 = vsub.s32 3, %v726
        %v728 = vrot.slane %v711, %v727
        %v733 = vmul.f32 %v640, %v716
        %v734 = vmul.f32 %v642, %v720
        %v735 = vmul.f32 %v693, %v724
        %v736 = vmul.f32 %v695, %v728
        %v737 = vmul.f32 %v644, %v716
        %v738 = vmul.f32 %v646, %v720
        %v739 = vmul.f32 %v697, %v724
        %v740 = vmul.f32 %v699, %v728
        %v741 = vmul.f32 %v650, %v716
        %v742 = vmul.f32 %v652, %v720
        %v743 = vmul.f32 %v703, %v724
        %v744 = vmul.f32 %v705, %v728
        %v745 = vmul.f32 %v654, %v716
        %v746 = vmul.f32 %v656, %v720
        %v747 = vmul.f32 %v707, %v724
        %v748 = vmul.f32 %v709, %v728
        %v749 = vld [vmem:[%s3] sm:$0xf]
        %v751 = vlaneseq
        %v752 = vshrl.u32 %v751, 7
        %v753 = vsub.s32 0, %v752
        %v754 = vrot.slane %v749, %v753
        %v755 = vlaneseq
        %v756 = vshrl.u32 %v755, 7
        %v757 = vsub.s32 1, %v756
        %v758 = vrot.slane %v749, %v757
        %v759 = vlaneseq
        %v760 = vshrl.u32 %v759, 7
        %v761 = vsub.s32 2, %v760
        %v762 = vrot.slane %v749, %v761
        %v763 = vlaneseq
        %v764 = vshrl.u32 %v763, 7
        %v765 = vsub.s32 3, %v764
        %v766 = vrot.slane %v749, %v765
        %v771 = vadd.f32 %v733, %v754
        %v772 = vadd.f32 %v734, %v758
        %v773 = vadd.f32 %v735, %v762
        %v774 = vadd.f32 %v736, %v766
        %v775 = vadd.f32 %v737, %v754
        %v776 = vadd.f32 %v738, %v758
        %v777 = vadd.f32 %v739, %v762
        %v778 = vadd.f32 %v740, %v766
        %v779 = vadd.f32 %v741, %v754
        %v780 = vadd.f32 %v742, %v758
        %v781 = vadd.f32 %v743, %v762
        %v782 = vadd.f32 %v744, %v766
        %v783 = vadd.f32 %v745, %v754
        %v784 = vadd.f32 %v746, %v758
        %v785 = vadd.f32 %v747, %v762
        %v786 = vadd.f32 %v748, %v766
        %vm787 = vcmp.ge.f32.partialorder %v771, 0.0
        %vm788 = vcmp.ge.f32.partialorder %v772, 0.0
        %vm789 = vcmp.ge.f32.partialorder %v773, 0.0
        %vm790 = vcmp.ge.f32.partialorder %v775, 0.0
        %vm791 = vcmp.ge.f32.partialorder %v776, 0.0
        %vm792 = vcmp.ge.f32.partialorder %v777, 0.0
        %vm793 = vcmp.ge.f32.partialorder %v779, 0.0
        %vm794 = vcmp.ge.f32.partialorder %v780, 0.0
        %vm795 = vcmp.ge.f32.partialorder %v781, 0.0
        %vm796 = vcmp.ge.f32.partialorder %v783, 0.0
        %vm797 = vcmp.ge.f32.partialorder %v784, 0.0
        %vm798 = vcmp.ge.f32.partialorder %v785, 0.0
        %v799 = vstv %s495
        %v800 = vmul.f32 %v799, %v771
        %v801 = vmul.f32 %v799, %v772
        %v802 = vmul.f32 %v799, %v773
        %v803 = vmul.f32 %v799, %v775
        %v804 = vmul.f32 %v799, %v776
        %v805 = vmul.f32 %v799, %v777
        %v806 = vmul.f32 %v799, %v779
        %v807 = vmul.f32 %v799, %v780
        %v808 = vmul.f32 %v799, %v781
        %v809 = vmul.f32 %v799, %v783
        %v810 = vmul.f32 %v799, %v784
        %v811 = vmul.f32 %v799, %v785
        %v812 = vsel %vm787, %v771, %v800
        %v813 = vsel %vm788, %v772, %v801
        %v814 = vsel %vm789, %v773, %v802
        %v815 = vsel %vm790, %v775, %v803
        %v816 = vsel %vm791, %v776, %v804
        %v817 = vsel %vm792, %v777, %v805
        %v818 = vsel %vm793, %v779, %v806
        %v819 = vsel %vm794, %v780, %v807
        %v820 = vsel %vm795, %v781, %v808
        %v821 = vsel %vm796, %v783, %v809
        %v822 = vsel %vm797, %v784, %v810
        %v823 = vsel %vm798, %v785, %v811
        %v824 = vpack.c.bf16 %v815, %v812
        %v825 = vpack.c.bf16 %v816, %v813
        %v826 = vpack.c.bf16 %v817, %v814
        %v827 = vpack.c.bf16 %v821, %v818
        %v828 = vpack.c.bf16 %v822, %v819
        %v829 = vpack.c.bf16 %v823, %v820
        %v830 = vld [vmem:[#allocation9] sm:$0xf]
        %v831 = vld [vmem:[#allocation9 + $0x4] sm:$0xf]
        %v832 = vld [vmem:[#allocation9 + $0x8] sm:$0xf]
        %v833 = vld [vmem:[#allocation9 + $0xc] sm:$0xf]
        %v838 = vunpack.c.l.b16 %v830
        %v839 = vunpack.c.l.b16 %v831
        %v840 = vunpack.c.l.b16 %v832
        %v841 = vunpack.c.l.b16 %v833
        %v842 = vpack.c.b16 %v839, %v838
        %v843 = vpack.c.b16 %v841, %v840
        %vm844 = vcmask 261120
        %v846 = vsel %vm844, %v842, 0
        %v849 = vsel %vm844, %v843, 0
        %851 = vmatprep.subr.bf16.mxu0 %v825
        %852 = vmatpush1.bf16.msra.mxu0 %v824
        %853 = vmatprep.subr.bf16.mxu0 %v828
        %854 = vmatpush1.bf16.msra.mxu0 %v827
        %855 = vmatprep.subr.bf16.mxu0 0
        %856 = vmatpush1.bf16.msra.mxu0 0
        %857 = vmatprep.subr.bf16.mxu0 0
        %858 = vmatpush1.bf16.msra.mxu0 0
        %859 = vmatprep.subr.bf16.mxu0 0
        %860 = vmatpush1.bf16.msra.mxu0 0
        %861 = vmatprep.subr.bf16.mxu0 0
        %862 = vmatpush1.bf16.msra.mxu0 0
        %863 = vmatprep.subr.bf16.mxu0 0
        %864 = vmatpush1.bf16.msra.mxu0 0
        %865 = vmatprep.subr.bf16.mxu0 0
        %866 = vmatpush1.bf16.msra.mxu0 0
        %867 = vmatprep.subr.bf16.mxu0 0
        %868 = vmatpush1.bf16.msra.mxu0 0
        %869 = vmatprep.subr.bf16.mxu0 0
        %870 = vmatpush1.bf16.msra.mxu0 0
        %871 = vmatprep.subr.bf16.mxu0 0
        %872 = vmatpush1.bf16.msra.mxu0 0
        %873 = vmatprep.subr.bf16.mxu0 0
        %874 = vmatpush1.bf16.msra.mxu0 0
        %875 = vmatprep.subr.bf16.mxu0 0
        %876 = vmatpush1.bf16.msra.mxu0 0
        %877 = vmatprep.subr.bf16.mxu0 0
        %878 = vmatpush1.bf16.msra.mxu0 0
        %879 = vmatprep.subr.bf16.mxu0 0
        %880 = vmatpush1.bf16.msra.mxu0 0
        %881 = vmatprep.subr.bf16.mxu0 0
        %882 = vmatpush1.bf16.msra.mxu0 0
        %883 = vmatprep.mubr.bf16.mxu0 0
        %884 = vmatmul.mubr.bf16.gmra.mrb[0].mxu0 %v846
        %v885 = vpop.f32.mrb[0].mxu0
        %v886 = vadd.f32 0.0, %v885
        %v887 = vpop.f32.mrb[0].mxu0
        %v888 = vadd.f32 0.0, %v887
        %v889 = vpop.f32.mrb[0].mxu0
        %v890 = vadd.f32 0.0, %v889
        %v891 = vpop.f32.mrb[0].mxu0
        %v892 = vadd.f32 0.0, %v891
        %893 = vmatprep.mubr.bf16.mxu0 0
        %894 = vmatmul.mubr.bf16.gmra.mrb[0].mxu0 %v849
        %v895 = vpop.f32.mrb[0].mxu0
        %v896 = vadd.f32 0.0, %v895
        %v897 = vpop.f32.mrb[0].mxu0
        %v898 = vadd.f32 0.0, %v897
        %v899 = vpop.f32.mrb[0].mxu0
        %v900 = vadd.f32 0.0, %v899
        %v901 = vpop.f32.mrb[0].mxu0
        %v902 = vadd.f32 0.0, %v901
        %903 = vdwg.mxu0
        %904 = vmatprep.subr.bf16.mxu0 0
        %905 = vmatpush1.bf16.msra.mxu0 %v826
        %906 = vmatprep.subr.bf16.mxu0 0
        %907 = vmatpush1.bf16.msra.mxu0 %v829
        %908 = vmatprep.subr.bf16.mxu0 0
        %909 = vmatpush1.bf16.msra.mxu0 0
        %910 = vmatprep.subr.bf16.mxu0 0
        %911 = vmatpush1.bf16.msra.mxu0 0
        %912 = vmatprep.subr.bf16.mxu0 0
        %913 = vmatpush1.bf16.msra.mxu0 0
        %914 = vmatprep.subr.bf16.mxu0 0
        %915 = vmatpush1.bf16.msra.mxu0 0
        %916 = vmatprep.subr.bf16.mxu0 0
        %917 = vmatpush1.bf16.msra.mxu0 0
        %918 = vmatprep.subr.bf16.mxu0 0
        %919 = vmatpush1.bf16.msra.mxu0 0
        %920 = vmatprep.subr.bf16.mxu0 0
        %921 = vmatpush1.bf16.msra.mxu0 0
        %922 = vmatprep.subr.bf16.mxu0 0
        %923 = vmatpush1.bf16.msra.mxu0 0
        %924 = vmatprep.subr.bf16.mxu0 0
        %925 = vmatpush1.bf16.msra.mxu0 0
        %926 = vmatprep.subr.bf16.mxu0 0
        %927 = vmatpush1.bf16.msra.mxu0 0
        %928 = vmatprep.subr.bf16.mxu0 0
        %929 = vmatpush1.bf16.msra.mxu0 0
        %930 = vmatprep.subr.bf16.mxu0 0
        %931 = vmatpush1.bf16.msra.mxu0 0
        %932 = vmatprep.subr.bf16.mxu0 0
        %933 = vmatpush1.bf16.msra.mxu0 0
        %934 = vmatprep.subr.bf16.mxu0 0
        %935 = vmatpush1.bf16.msra.mxu0 0
        %936 = vmatprep.mubr.bf16.mxu0 0
        %937 = vmatmul.mubr.bf16.gmra.mrb[0].mxu0 %v846
        %v938 = vpop.f32.mrb[0].mxu0
        %v939 = vadd.f32 0.0, %v938
        %v940 = vpop.f32.mrb[0].mxu0
        %v941 = vpop.f32.mrb[0].mxu0
        %v942 = vadd.f32 0.0, %v941
        %v943 = vpop.f32.mrb[0].mxu0
        %944 = vmatprep.mubr.bf16.mxu0 0
        %945 = vmatmul.mubr.bf16.gmra.mrb[0].mxu0 %v849
        %v946 = vpop.f32.mrb[0].mxu0
        %v947 = vadd.f32 0.0, %v946
        %v948 = vpop.f32.mrb[0].mxu0
        %v949 = vpop.f32.mrb[0].mxu0
        %v950 = vadd.f32 0.0, %v949
        %v951 = vpop.f32.mrb[0].mxu0
        %952 = vdwg.mxu0
        %v953 = vpack.c.bf16 %v890, %v886
        %v954 = vpack.c.bf16 %v892, %v888
        %v955 = vpack.c.bf16 %v942, %v939
        %v956 = vpack.c.bf16 %v900, %v896
        %v957 = vpack.c.bf16 %v902, %v898
        %v958 = vpack.c.bf16 %v950, %v947
        %v959 = vld [vmem:[#allocation8] sm:$0xff]
        %v960 = vld [vmem:[#allocation8 + $0x8] sm:$0xf]
        %v961 = vld [vmem:[#allocation8 + $0xc] sm:$0xff]
        %v962 = vld [vmem:[#allocation8 + $0x14] sm:$0xf]
        %v963 = vld [vmem:[#allocation8 + $0x18] sm:$0xff]
        %v964 = vld [vmem:[#allocation8 + $0x20] sm:$0xf]
        %v965 = vld [vmem:[#allocation8 + $0x24] sm:$0xff]
        %v966 = vld [vmem:[#allocation8 + $0x2c] sm:$0xf]
        %v967 = vld [vmem:[#allocation8 + $0x30] sm:$0xff]
        %v968 = vld [vmem:[#allocation8 + $0x38] sm:$0xf]
        %v969 = vld [vmem:[#allocation8 + $0x3c] sm:$0xff]
        %v970 = vld [vmem:[#allocation8 + $0x44] sm:$0xf]
        %v971 = vld [vmem:[#allocation8 + $0x48] sm:$0xff]
        %v972 = vld [vmem:[#allocation8 + $0x50] sm:$0xf]
        %v973 = vld [vmem:[#allocation8 + $0x54] sm:$0xff]
        %v974 = vld [vmem:[#allocation8 + $0x5c] sm:$0xf]
        %v975 = vld [vmem:[#allocation8 + $0x60] sm:$0xff]
        %v976 = vld [vmem:[#allocation8 + $0x68] sm:$0xf]
        %v977 = vld [vmem:[#allocation8 + $0x6c] sm:$0xff]
        %v978 = vld [vmem:[#allocation8 + $0x74] sm:$0xf]
        %v979 = vld [vmem:[#allocation8 + $0x78] sm:$0xff]
        %v980 = vld [vmem:[#allocation8 + $0x80] sm:$0xf]
        %v981 = vld [vmem:[#allocation8 + $0x84] sm:$0xff]
        %v982 = vld [vmem:[#allocation8 + $0x8c] sm:$0xf]
        %v983 = vld [vmem:[#allocation8 + $0x90] sm:$0xff]
        %v984 = vld [vmem:[#allocation8 + $0x98] sm:$0xf]
        %v985 = vld [vmem:[#allocation8 + $0x9c] sm:$0xff]
        %v986 = vld [vmem:[#allocation8 + $0xa4] sm:$0xf]
        %v987 = vld [vmem:[#allocation8 + $0xa8] sm:$0xff]
        %v988 = vld [vmem:[#allocation8 + $0xb0] sm:$0xf]
        %v989 = vld [vmem:[#allocation8 + $0xb4] sm:$0xff]
        %v990 = vld [vmem:[#allocation8 + $0xbc] sm:$0xf]
        %v991 = vld [vmem:[#allocation8 + $0xc0] sm:$0xff]
        %v992 = vld [vmem:[#allocation8 + $0xc8] sm:$0xf]
        %v993 = vld [vmem:[#allocation8 + $0xcc] sm:$0xff]
        %v994 = vld [vmem:[#allocation8 + $0xd4] sm:$0xf]
        %v995 = vld [vmem:[#allocation8 + $0xd8] sm:$0xff]
        %v996 = vld [vmem:[#allocation8 + $0xe0] sm:$0xf]
        %v997 = vld [vmem:[#allocation8 + $0xe4] sm:$0xff]
        %v998 = vld [vmem:[#allocation8 + $0xec] sm:$0xf]
        %v999 = vld [vmem:[#allocation8 + $0xf0] sm:$0xff]
        %v1000 = vld [vmem:[#allocation8 + $0xf8] sm:$0xf]
        %v1001 = vld [vmem:[#allocation8 + $0xfc] sm:$0xff]
        %v1002 = vld [vmem:[#allocation8 + $0x104] sm:$0xf]
        %v1003 = vld [vmem:[#allocation8 + $0x108] sm:$0xff]
        %v1004 = vld [vmem:[#allocation8 + $0x110] sm:$0xf]
        %v1005 = vld [vmem:[#allocation8 + $0x114] sm:$0xff]
        %v1006 = vld [vmem:[#allocation8 + $0x11c] sm:$0xf]
        %v1007 = vld [vmem:[#allocation8 + $0x120] sm:$0xff]
        %v1008 = vld [vmem:[#allocation8 + $0x128] sm:$0xf]
        %v1009 = vld [vmem:[#allocation8 + $0x12c] sm:$0xff]
        %v1010 = vld [vmem:[#allocation8 + $0x134] sm:$0xf]
        %v1011 = vld [vmem:[#allocation8 + $0x138] sm:$0xff]
        %v1012 = vld [vmem:[#allocation8 + $0x140] sm:$0xf]
        %v1013 = vld [vmem:[#allocation8 + $0x144] sm:$0xff]
        %v1014 = vld [vmem:[#allocation8 + $0x14c] sm:$0xf]
        %v1015 = vld [vmem:[#allocation8 + $0x150] sm:$0xff]
        %v1016 = vld [vmem:[#allocation8 + $0x158] sm:$0xf]
        %v1017 = vld [vmem:[#allocation8 + $0x15c] sm:$0xff]
        %v1018 = vld [vmem:[#allocation8 + $0x164] sm:$0xf]
        %v1019 = vld [vmem:[#allocation8 + $0x168] sm:$0xff]
        %v1020 = vld [vmem:[#allocation8 + $0x170] sm:$0xf]
        %v1021 = vld [vmem:[#allocation8 + $0x174] sm:$0xff]
        %v1022 = vld [vmem:[#allocation8 + $0x17c] sm:$0xf]
        %v1023 = vld [vmem:[#allocation8 + $0x180] sm:$0xff]
        %v1024 = vld [vmem:[#allocation8 + $0x188] sm:$0xf]
        %v1025 = vld [vmem:[#allocation8 + $0x18c] sm:$0xff]
        %v1026 = vld [vmem:[#allocation8 + $0x194] sm:$0xf]
        %v1027 = vld [vmem:[#allocation8 + $0x198] sm:$0xff]
        %v1028 = vld [vmem:[#allocation8 + $0x1a0] sm:$0xf]
        %v1029 = vld [vmem:[#allocation8 + $0x1a4] sm:$0xff]
        %v1030 = vld [vmem:[#allocation8 + $0x1ac] sm:$0xf]
        %v1031 = vld [vmem:[#allocation8 + $0x1b0] sm:$0xff]
        %v1032 = vld [vmem:[#allocation8 + $0x1b8] sm:$0xf]
        %v1033 = vld [vmem:[#allocation8 + $0x1bc] sm:$0xff]
        %v1034 = vld [vmem:[#allocation8 + $0x1c4] sm:$0xf]
        %v1035 = vld [vmem:[#allocation8 + $0x1c8] sm:$0xff]
        %v1036 = vld [vmem:[#allocation8 + $0x1d0] sm:$0xf]
        %v1037 = vld [vmem:[#allocation8 + $0x1d4] sm:$0xff]
        %v1038 = vld [vmem:[#allocation8 + $0x1dc] sm:$0xf]
        %v1039 = vld [vmem:[#allocation8 + $0x1e0] sm:$0xff]
        %v1040 = vld [vmem:[#allocation8 + $0x1e8] sm:$0xf]
        %v1041 = vld [vmem:[#allocation8 + $0x1ec] sm:$0xff]
        %v1042 = vld [vmem:[#allocation8 + $0x1f4] sm:$0xf]
        %v1043 = vld [vmem:[#allocation8 + $0x1f8] sm:$0xff]
        %v1044 = vld [vmem:[#allocation8 + $0x200] sm:$0xf]
        %v1045 = vld [vmem:[#allocation8 + $0x204] sm:$0xff]
        %v1046 = vld [vmem:[#allocation8 + $0x20c] sm:$0xf]
        %v1047 = vld [vmem:[#allocation8 + $0x210] sm:$0xff]
        %v1048 = vld [vmem:[#allocation8 + $0x218] sm:$0xf]
        %v1049 = vld [vmem:[#allocation8 + $0x21c] sm:$0xff]
        %v1050 = vld [vmem:[#allocation8 + $0x224] sm:$0xf]
        %v1051 = vld [vmem:[#allocation8 + $0x228] sm:$0xff]
        %v1052 = vld [vmem:[#allocation8 + $0x230] sm:$0xf]
        %v1053 = vld [vmem:[#allocation8 + $0x234] sm:$0xff]
        %v1054 = vld [vmem:[#allocation8 + $0x23c] sm:$0xf]
        %s1055 = scalar_lea.vmem [#allocation8], 576
        %v1056 = vld [vmem:[%s1055] sm:$0xff]
        %v1057 = vld [vmem:[%s1055 + $0x8] sm:$0xf]
        %v1058 = vld [vmem:[%s1055 + $0xc] sm:$0xff]
        %v1059 = vld [vmem:[%s1055 + $0x14] sm:$0xf]
        %v1060 = vld [vmem:[%s1055 + $0x18] sm:$0xff]
        %v1061 = vld [vmem:[%s1055 + $0x20] sm:$0xf]
        %v1062 = vld [vmem:[%s1055 + $0x24] sm:$0xff]
        %v1063 = vld [vmem:[%s1055 + $0x2c] sm:$0xf]
        %v1064 = vld [vmem:[%s1055 + $0x30] sm:$0xff]
        %v1065 = vld [vmem:[%s1055 + $0x38] sm:$0xf]
        %v1066 = vld [vmem:[%s1055 + $0x3c] sm:$0xff]
        %v1067 = vld [vmem:[%s1055 + $0x44] sm:$0xf]
        %v1068 = vld [vmem:[%s1055 + $0x48] sm:$0xff]
        %v1069 = vld [vmem:[%s1055 + $0x50] sm:$0xf]
        %v1070 = vld [vmem:[%s1055 + $0x54] sm:$0xff]
        %v1071 = vld [vmem:[%s1055 + $0x5c] sm:$0xf]
        %v1072 = vld [vmem:[%s1055 + $0x60] sm:$0xff]
        %v1073 = vld [vmem:[%s1055 + $0x68] sm:$0xf]
        %v1074 = vld [vmem:[%s1055 + $0x6c] sm:$0xff]
        %v1075 = vld [vmem:[%s1055 + $0x74] sm:$0xf]
        %v1076 = vld [vmem:[%s1055 + $0x78] sm:$0xff]
        %v1077 = vld [vmem:[%s1055 + $0x80] sm:$0xf]
        %v1078 = vld [vmem:[%s1055 + $0x84] sm:$0xff]
        %v1079 = vld [vmem:[%s1055 + $0x8c] sm:$0xf]
        %v1080 = vld [vmem:[%s1055 + $0x90] sm:$0xff]
        %v1081 = vld [vmem:[%s1055 + $0x98] sm:$0xf]
        %v1082 = vld [vmem:[%s1055 + $0x9c] sm:$0xff]
        %v1083 = vld [vmem:[%s1055 + $0xa4] sm:$0xf]
        %v1084 = vld [vmem:[%s1055 + $0xa8] sm:$0xff]
        %v1085 = vld [vmem:[%s1055 + $0xb0] sm:$0xf]
        %v1086 = vld [vmem:[%s1055 + $0xb4] sm:$0xff]
        %v1087 = vld [vmem:[%s1055 + $0xbc] sm:$0xf]
        %v1088 = vld [vmem:[%s1055 + $0xc0] sm:$0xff]
        %v1089 = vld [vmem:[%s1055 + $0xc8] sm:$0xf]
        %v1090 = vld [vmem:[%s1055 + $0xcc] sm:$0xff]
        %v1091 = vld [vmem:[%s1055 + $0xd4] sm:$0xf]
        %v1092 = vld [vmem:[%s1055 + $0xd8] sm:$0xff]
        %v1093 = vld [vmem:[%s1055 + $0xe0] sm:$0xf]
        %v1094 = vld [vmem:[%s1055 + $0xe4] sm:$0xff]
        %v1095 = vld [vmem:[%s1055 + $0xec] sm:$0xf]
        %v1096 = vld [vmem:[%s1055 + $0xf0] sm:$0xff]
        %v1097 = vld [vmem:[%s1055 + $0xf8] sm:$0xf]
        %v1098 = vld [vmem:[%s1055 + $0xfc] sm:$0xff]
        %v1099 = vld [vmem:[%s1055 + $0x104] sm:$0xf]
        %v1100 = vld [vmem:[%s1055 + $0x108] sm:$0xff]
        %v1101 = vld [vmem:[%s1055 + $0x110] sm:$0xf]
        %v1102 = vld [vmem:[%s1055 + $0x114] sm:$0xff]
        %v1103 = vld [vmem:[%s1055 + $0x11c] sm:$0xf]
        %v1104 = vld [vmem:[%s1055 + $0x120] sm:$0xff]
        %v1105 = vld [vmem:[%s1055 + $0x128] sm:$0xf]
        %v1106 = vld [vmem:[%s1055 + $0x12c] sm:$0xff]
        %v1107 = vld [vmem:[%s1055 + $0x134] sm:$0xf]
        %v1108 = vld [vmem:[%s1055 + $0x138] sm:$0xff]
        %v1109 = vld [vmem:[%s1055 + $0x140] sm:$0xf]
        %v1110 = vld [vmem:[%s1055 + $0x144] sm:$0xff]
        %v1111 = vld [vmem:[%s1055 + $0x14c] sm:$0xf]
        %v1112 = vld [vmem:[%s1055 + $0x150] sm:$0xff]
        %v1113 = vld [vmem:[%s1055 + $0x158] sm:$0xf]
        %v1114 = vld [vmem:[%s1055 + $0x15c] sm:$0xff]
        %v1115 = vld [vmem:[%s1055 + $0x164] sm:$0xf]
        %v1116 = vld [vmem:[%s1055 + $0x168] sm:$0xff]
        %v1117 = vld [vmem:[%s1055 + $0x170] sm:$0xf]
        %v1118 = vld [vmem:[%s1055 + $0x174] sm:$0xff]
        %v1119 = vld [vmem:[%s1055 + $0x17c] sm:$0xf]
        %v1120 = vld [vmem:[%s1055 + $0x180] sm:$0xff]
        %v1121 = vld [vmem:[%s1055 + $0x188] sm:$0xf]
        %v1122 = vld [vmem:[%s1055 + $0x18c] sm:$0xff]
        %v1123 = vld [vmem:[%s1055 + $0x194] sm:$0xf]
        %v1124 = vld [vmem:[%s1055 + $0x198] sm:$0xff]
        %v1125 = vld [vmem:[%s1055 + $0x1a0] sm:$0xf]
        %v1126 = vld [vmem:[%s1055 + $0x1a4] sm:$0xff]
        %v1127 = vld [vmem:[%s1055 + $0x1ac] sm:$0xf]
        %v1128 = vld [vmem:[%s1055 + $0x1b0] sm:$0xff]
        %v1129 = vld [vmem:[%s1055 + $0x1b8] sm:$0xf]
        %v1130 = vld [vmem:[%s1055 + $0x1bc] sm:$0xff]
        %v1131 = vld [vmem:[%s1055 + $0x1c4] sm:$0xf]
        %v1132 = vld [vmem:[%s1055 + $0x1c8] sm:$0xff]
        %v1133 = vld [vmem:[%s1055 + $0x1d0] sm:$0xf]
        %v1134 = vld [vmem:[%s1055 + $0x1d4] sm:$0xff]
        %v1135 = vld [vmem:[%s1055 + $0x1dc] sm:$0xf]
        %v1136 = vld [vmem:[%s1055 + $0x1e0] sm:$0xff]
        %v1137 = vld [vmem:[%s1055 + $0x1e8] sm:$0xf]
        %v1138 = vld [vmem:[%s1055 + $0x1ec] sm:$0xff]
        %v1139 = vld [vmem:[%s1055 + $0x1f4] sm:$0xf]
        %v1140 = vld [vmem:[%s1055 + $0x1f8] sm:$0xff]
        %v1141 = vld [vmem:[%s1055 + $0x200] sm:$0xf]
        %v1142 = vld [vmem:[%s1055 + $0x204] sm:$0xff]
        %v1143 = vld [vmem:[%s1055 + $0x20c] sm:$0xf]
        %v1144 = vld [vmem:[%s1055 + $0x210] sm:$0xff]
        %v1145 = vld [vmem:[%s1055 + $0x218] sm:$0xf]
        %v1146 = vld [vmem:[%s1055 + $0x21c] sm:$0xff]
        %v1147 = vld [vmem:[%s1055 + $0x224] sm:$0xf]
        %v1148 = vld [vmem:[%s1055 + $0x228] sm:$0xff]
        %v1149 = vld [vmem:[%s1055 + $0x230] sm:$0xf]
        %v1150 = vld [vmem:[%s1055 + $0x234] sm:$0xff]
        %v1151 = vld [vmem:[%s1055 + $0x23c] sm:$0xf]
        %v1248 = vunpack.c.l.b16 %v1056
        %v1249 = vunpack.c.h.b16 %v1056
        %v1250 = vunpack.c.l.b16 %v1057
        %v1251 = vunpack.c.l.b16 %v1058
        %v1252 = vunpack.c.h.b16 %v1058
        %v1253 = vunpack.c.l.b16 %v1059
        %v1254 = vunpack.c.l.b16 %v1060
        %v1255 = vunpack.c.h.b16 %v1060
        %v1256 = vunpack.c.l.b16 %v1061
        %v1257 = vunpack.c.l.b16 %v1062
        %v1258 = vunpack.c.h.b16 %v1062
        %v1259 = vunpack.c.l.b16 %v1063
        %v1260 = vunpack.c.l.b16 %v1064
        %v1261 = vunpack.c.h.b16 %v1064
        %v1262 = vunpack.c.l.b16 %v1065
        %v1263 = vunpack.c.l.b16 %v1066
        %v1264 = vunpack.c.h.b16 %v1066
        %v1265 = vunpack.c.l.b16 %v1067
        %v1266 = vunpack.c.l.b16 %v1068
        %v1267 = vunpack.c.h.b16 %v1068
        %v1268 = vunpack.c.l.b16 %v1069
        %v1269 = vunpack.c.l.b16 %v1070
        %v1270 = vunpack.c.h.b16 %v1070
        %v1271 = vunpack.c.l.b16 %v1071
        %v1272 = vunpack.c.l.b16 %v1072
        %v1273 = vunpack.c.h.b16 %v1072
        %v1274 = vunpack.c.l.b16 %v1073
        %v1275 = vunpack.c.l.b16 %v1074
        %v1276 = vunpack.c.h.b16 %v1074
        %v1277 = vunpack.c.l.b16 %v1075
        %v1278 = vunpack.c.l.b16 %v1076
        %v1279 = vunpack.c.h.b16 %v1076
        %v1280 = vunpack.c.l.b16 %v1077
        %v1281 = vunpack.c.l.b16 %v1078
        %v1282 = vunpack.c.h.b16 %v1078
        %v1283 = vunpack.c.l.b16 %v1079
        %v1284 = vunpack.c.l.b16 %v1080
        %v1285 = vunpack.c.h.b16 %v1080
        %v1286 = vunpack.c.l.b16 %v1081
        %v1287 = vunpack.c.l.b16 %v1082
        %v1288 = vunpack.c.h.b16 %v1082
        %v1289 = vunpack.c.l.b16 %v1083
        %v1290 = vunpack.c.l.b16 %v1084
        %v1291 = vunpack.c.h.b16 %v1084
        %v1292 = vunpack.c.l.b16 %v1085
        %v1293 = vunpack.c.l.b16 %v1086
        %v1294 = vunpack.c.h.b16 %v1086
        %v1295 = vunpack.c.l.b16 %v1087
        %v1296 = vunpack.c.l.b16 %v1088
        %v1297 = vunpack.c.h.b16 %v1088
        %v1298 = vunpack.c.l.b16 %v1089
        %v1299 = vunpack.c.l.b16 %v1090
        %v1300 = vunpack.c.h.b16 %v1090
        %v1301 = vunpack.c.l.b16 %v1091
        %v1302 = vunpack.c.l.b16 %v1092
        %v1303 = vunpack.c.h.b16 %v1092
        %v1304 = vunpack.c.l.b16 %v1093
        %v1305 = vunpack.c.l.b16 %v1094
        %v1306 = vunpack.c.h.b16 %v1094
        %v1307 = vunpack.c.l.b16 %v1095
        %v1308 = vunpack.c.l.b16 %v1096
        %v1309 = vunpack.c.h.b16 %v1096
        %v1310 = vunpack.c.l.b16 %v1097
        %v1311 = vunpack.c.l.b16 %v1098
        %v1312 = vunpack.c.h.b16 %v1098
        %v1313 = vunpack.c.l.b16 %v1099
        %v1314 = vunpack.c.l.b16 %v1100
        %v1315 = vunpack.c.h.b16 %v1100
        %v1316 = vunpack.c.l.b16 %v1101
        %v1317 = vunpack.c.l.b16 %v1102
        %v1318 = vunpack.c.h.b16 %v1102
        %v1319 = vunpack.c.l.b16 %v1103
        %v1320 = vunpack.c.l.b16 %v1104
        %v1321 = vunpack.c.h.b16 %v1104
        %v1322 = vunpack.c.l.b16 %v1105
        %v1323 = vunpack.c.l.b16 %v1106
        %v1324 = vunpack.c.h.b16 %v1106
        %v1325 = vunpack.c.l.b16 %v1107
        %v1326 = vunpack.c.l.b16 %v1108
        %v1327 = vunpack.c.h.b16 %v1108
        %v1328 = vunpack.c.l.b16 %v1109
        %v1329 = vunpack.c.l.b16 %v1110
        %v1330 = vunpack.c.h.b16 %v1110
        %v1331 = vunpack.c.l.b16 %v1111
        %v1332 = vunpack.c.l.b16 %v1112
        %v1333 = vunpack.c.h.b16 %v1112
        %v1334 = vunpack.c.l.b16 %v1113
        %v1335 = vunpack.c.l.b16 %v1114
        %v1336 = vunpack.c.h.b16 %v1114
        %v1337 = vunpack.c.l.b16 %v1115
        %v1338 = vunpack.c.l.b16 %v1116
        %v1339 = vunpack.c.h.b16 %v1116
        %v1340 = vunpack.c.l.b16 %v1117
        %v1341 = vunpack.c.l.b16 %v1118
        %v1342 = vunpack.c.h.b16 %v1118
        %v1343 = vunpack.c.l.b16 %v1119
        %v1344 = vunpack.c.l.b16 %v1120
        %v1345 = vunpack.c.h.b16 %v1120
        %v1346 = vunpack.c.l.b16 %v1121
        %v1347 = vunpack.c.l.b16 %v1122
        %v1348 = vunpack.c.h.b16 %v1122
        %v1349 = vunpack.c.l.b16 %v1123
        %v1350 = vunpack.c.l.b16 %v1124
        %v1351 = vunpack.c.h.b16 %v1124
        %v1352 = vunpack.c.l.b16 %v1125
        %v1353 = vunpack.c.l.b16 %v1126
        %v1354 = vunpack.c.h.b16 %v1126
        %v1355 = vunpack.c.l.b16 %v1127
        %v1356 = vunpack.c.l.b16 %v1128
        %v1357 = vunpack.c.h.b16 %v1128
        %v1358 = vunpack.c.l.b16 %v1129
        %v1359 = vunpack.c.l.b16 %v1130
        %v1360 = vunpack.c.h.b16 %v1130
        %v1361 = vunpack.c.l.b16 %v1131
        %v1362 = vunpack.c.l.b16 %v1132
        %v1363 = vunpack.c.h.b16 %v1132
        %v1364 = vunpack.c.l.b16 %v1133
        %v1365 = vunpack.c.l.b16 %v1134
        %v1366 = vunpack.c.h.b16 %v1134
        %v1367 = vunpack.c.l.b16 %v1135
        %v1368 = vunpack.c.l.b16 %v1136
        %v1369 = vunpack.c.h.b16 %v1136
        %v1370 = vunpack.c.l.b16 %v1137
        %v1371 = vunpack.c.l.b16 %v1138
        %v1372 = vunpack.c.h.b16 %v1138
        %v1373 = vunpack.c.l.b16 %v1139
        %v1374 = vunpack.c.l.b16 %v1140
        %v1375 = vunpack.c.h.b16 %v1140
        %v1376 = vunpack.c.l.b16 %v1141
        %v1377 = vunpack.c.l.b16 %v1142
        %v1378 = vunpack.c.h.b16 %v1142
        %v1379 = vunpack.c.l.b16 %v1143
        %v1380 = vunpack.c.l.b16 %v1144
        %v1381 = vunpack.c.h.b16 %v1144
        %v1382 = vunpack.c.l.b16 %v1145
        %v1383 = vunpack.c.l.b16 %v1146
        %v1384 = vunpack.c.h.b16 %v1146
        %v1385 = vunpack.c.l.b16 %v1147
        %v1386 = vunpack.c.l.b16 %v1148
        %v1387 = vunpack.c.h.b16 %v1148
        %v1388 = vunpack.c.l.b16 %v1149
        %v1389 = vunpack.c.l.b16 %v1150
        %v1390 = vunpack.c.h.b16 %v1150
        %v1391 = vunpack.c.l.b16 %v1151
        %v1392 = vpack.c.b16 %v1251, %v1248
        %v1393 = vpack.c.b16 %v1252, %v1249
        %v1394 = vpack.c.b16 %v1253, %v1250
        %v1395 = vpack.c.b16 %v1257, %v1254
        %v1396 = vpack.c.b16 %v1258, %v1255
        %v1397 = vpack.c.b16 %v1259, %v1256
        %v1398 = vpack.c.b16 %v1263, %v1260
        %v1399 = vpack.c.b16 %v1264, %v1261
        %v1400 = vpack.c.b16 %v1265, %v1262
        %v1401 = vpack.c.b16 %v1269, %v1266
        %v1402 = vpack.c.b16 %v1270, %v1267
        %v1403 = vpack.c.b16 %v1271, %v1268
        %v1404 = vpack.c.b16 %v1275, %v1272
        %v1405 = vpack.c.b16 %v1276, %v1273
        %v1406 = vpack.c.b16 %v1277, %v1274
        %v1407 = vpack.c.b16 %v1281, %v1278
        %v1408 = vpack.c.b16 %v1282, %v1279
        %v1409 = vpack.c.b16 %v1283, %v1280
        %v1410 = vpack.c.b16 %v1287, %v1284
        %v1411 = vpack.c.b16 %v1288, %v1285
        %v1412 = vpack.c.b16 %v1289, %v1286
        %v1413 = vpack.c.b16 %v1293, %v1290
        %v1414 = vpack.c.b16 %v1294, %v1291
        %v1415 = vpack.c.b16 %v1295, %v1292
        %v1416 = vpack.c.b16 %v1299, %v1296
        %v1417 = vpack.c.b16 %v1300, %v1297
        %v1418 = vpack.c.b16 %v1301, %v1298
        %v1419 = vpack.c.b16 %v1305, %v1302
        %v1420 = vpack.c.b16 %v1306, %v1303
        %v1421 = vpack.c.b16 %v1307, %v1304
        %v1422 = vpack.c.b16 %v1311, %v1308
        %v1423 = vpack.c.b16 %v1312, %v1309
        %v1424 = vpack.c.b16 %v1313, %v1310
        %v1425 = vpack.c.b16 %v1317, %v1314
        %v1426 = vpack.c.b16 %v1318, %v1315
        %v1427 = vpack.c.b16 %v1319, %v1316
        %v1428 = vpack.c.b16 %v1323, %v1320
        %v1429 = vpack.c.b16 %v1324, %v1321
        %v1430 = vpack.c.b16 %v1325, %v1322
        %v1431 = vpack.c.b16 %v1329, %v1326
        %v1432 = vpack.c.b16 %v1330, %v1327
        %v1433 = vpack.c.b16 %v1331, %v1328
        %v1434 = vpack.c.b16 %v1335, %v1332
        %v1435 = vpack.c.b16 %v1336, %v1333
        %v1436 = vpack.c.b16 %v1337, %v1334
        %v1437 = vpack.c.b16 %v1341, %v1338
        %v1438 = vpack.c.b16 %v1342, %v1339
        %v1439 = vpack.c.b16 %v1343, %v1340
        %v1440 = vpack.c.b16 %v1347, %v1344
        %v1441 = vpack.c.b16 %v1348, %v1345
        %v1442 = vpack.c.b16 %v1349, %v1346
        %v1443 = vpack.c.b16 %v1353, %v1350
        %v1444 = vpack.c.b16 %v1354, %v1351
        %v1445 = vpack.c.b16 %v1355, %v1352
        %v1446 = vpack.c.b16 %v1359, %v1356
        %v1447 = vpack.c.b16 %v1360, %v1357
        %v1448 = vpack.c.b16 %v1361, %v1358
        %v1449 = vpack.c.b16 %v1365, %v1362
        %v1450 = vpack.c.b16 %v1366, %v1363
        %v1451 = vpack.c.b16 %v1367, %v1364
        %v1452 = vpack.c.b16 %v1371, %v1368
        %v1453 = vpack.c.b16 %v1372, %v1369
        %v1454 = vpack.c.b16 %v1373, %v1370
        %v1455 = vpack.c.b16 %v1377, %v1374
        %v1456 = vpack.c.b16 %v1378, %v1375
        %v1457 = vpack.c.b16 %v1379, %v1376
        %v1458 = vpack.c.b16 %v1383, %v1380
        %v1459 = vpack.c.b16 %v1384, %v1381
        %v1460 = vpack.c.b16 %v1385, %v1382
        %v1461 = vpack.c.b16 %v1389, %v1386
        %v1462 = vpack.c.b16 %v1390, %v1387
        %v1463 = vpack.c.b16 %v1391, %v1388
        %1536 = vmatprep.subr.bf16.mxu0 %v1393
        %1537 = vmatpush1.bf16.msra.mxu0 %v1392
        %1538 = vmatprep.subr.bf16.mxu0 %v1396
        %1539 = vmatpush1.bf16.msra.mxu0 %v1395
        %1540 = vmatprep.subr.bf16.mxu0 %v1399
        %1541 = vmatpush1.bf16.msra.mxu0 %v1398
        %1542 = vmatprep.subr.bf16.mxu0 %v1402
        %1543 = vmatpush1.bf16.msra.mxu0 %v1401
        %1544 = vmatprep.subr.bf16.mxu0 %v1405
        %1545 = vmatpush1.bf16.msra.mxu0 %v1404
        %1546 = vmatprep.subr.bf16.mxu0 %v1408
        %1547 = vmatpush1.bf16.msra.mxu0 %v1407
        %1548 = vmatprep.subr.bf16.mxu0 %v1411
        %1549 = vmatpush1.bf16.msra.mxu0 %v1410
        %1550 = vmatprep.subr.bf16.mxu0 %v1414
        %1551 = vmatpush1.bf16.msra.mxu0 %v1413
        %1552 = vmatprep.subr.bf16.mxu0 %v1417
        %1553 = vmatpush1.bf16.msra.mxu0 %v1416
        %1554 = vmatprep.subr.bf16.mxu0 %v1420
        %1555 = vmatpush1.bf16.msra.mxu0 %v1419
        %1556 = vmatprep.subr.bf16.mxu0 %v1423
        %1557 = vmatpush1.bf16.msra.mxu0 %v1422
        %1558 = vmatprep.subr.bf16.mxu0 %v1426
        %1559 = vmatpush1.bf16.msra.mxu0 %v1425
        %1560 = vmatprep.subr.bf16.mxu0 %v1429
        %1561 = vmatpush1.bf16.msra.mxu0 %v1428
        %1562 = vmatprep.subr.bf16.mxu0 %v1432
        %1563 = vmatpush1.bf16.msra.mxu0 %v1431
        %1564 = vmatprep.subr.bf16.mxu0 %v1435
        %1565 = vmatpush1.bf16.msra.mxu0 %v1434
        %1566 = vmatprep.subr.bf16.mxu0 %v1438
        %1567 = vmatpush1.bf16.msra.mxu0 %v1437
        %1568 = vmatprep.mubr.bf16.mxu0 %v825
        %1569 = vmatmul.mubr.bf16.gmra.mrb[0].mxu0 %v824
        %v1570 = vpop.f32.mrb[0].mxu0
        %v1571 = vadd.f32 0.0, %v1570
        %v1572 = vpop.f32.mrb[0].mxu0
        %v1573 = vadd.f32 0.0, %v1572
        %v1574 = vpop.f32.mrb[0].mxu0
        %v1575 = vadd.f32 0.0, %v1574
        %v1576 = vpop.f32.mrb[0].mxu0
        %v1577 = vadd.f32 0.0, %v1576
        %1578 = vmatprep.mubr.bf16.mxu0 %v828
        %1579 = vmatmul.mubr.bf16.gmra.mrb[0].mxu0 %v827
        %v1580 = vpop.f32.mrb[0].mxu0
        %v1581 = vadd.f32 0.0, %v1580
        %v1582 = vpop.f32.mrb[0].mxu0
        %v1583 = vadd.f32 0.0, %v1582
        %v1584 = vpop.f32.mrb[0].mxu0
        %v1585 = vadd.f32 0.0, %v1584
        %v1586 = vpop.f32.mrb[0].mxu0
        %v1587 = vadd.f32 0.0, %v1586
        %1588 = vdwg.mxu0
        %1589 = vmatprep.subr.bf16.mxu0 %v1441
        %1590 = vmatpush1.bf16.msra.mxu0 %v1440
        %1591 = vmatprep.subr.bf16.mxu0 %v1444
        %1592 = vmatpush1.bf16.msra.mxu0 %v1443
        %1593 = vmatprep.subr.bf16.mxu0 %v1447
        %1594 = vmatpush1.bf16.msra.mxu0 %v1446
        %1595 = vmatprep.subr.bf16.mxu0 %v1450
        %1596 = vmatpush1.bf16.msra.mxu0 %v1449
        %1597 = vmatprep.subr.bf16.mxu0 %v1453
        %1598 = vmatpush1.bf16.msra.mxu0 %v1452
        %1599 = vmatprep.subr.bf16.mxu0 %v1456
        %1600 = vmatpush1.bf16.msra.mxu0 %v1455
        %1601 = vmatprep.subr.bf16.mxu0 %v1459
        %1602 = vmatpush1.bf16.msra.mxu0 %v1458
        %1603 = vmatprep.subr.bf16.mxu0 %v1462
        %1604 = vmatpush1.bf16.msra.mxu0 %v1461
        %1605 = vmatprep.subr.bf16.mxu0 0
        %1606 = vmatpush1.bf16.msra.mxu0 0
        %1607 = vmatprep.subr.bf16.mxu0 0
        %1608 = vmatpush1.bf16.msra.mxu0 0
        %1609 = vmatprep.subr.bf16.mxu0 0
        %1610 = vmatpush1.bf16.msra.mxu0 0
        %1611 = vmatprep.subr.bf16.mxu0 0
        %1612 = vmatpush1.bf16.msra.mxu0 0
        %1613 = vmatprep.subr.bf16.mxu0 0
        %1614 = vmatpush1.bf16.msra.mxu0 0
        %1615 = vmatprep.subr.bf16.mxu0 0
        %1616 = vmatpush1.bf16.msra.mxu0 0
        %1617 = vmatprep.subr.bf16.mxu0 0
        %1618 = vmatpush1.bf16.msra.mxu0 0
        %1619 = vmatprep.subr.bf16.mxu0 0
        %1620 = vmatpush1.bf16.msra.mxu0 0
        %1621 = vmatprep.mubr.bf16.mxu0 0
        %1622 = vmatmul.mubr.bf16.gmra.mrb[0].mxu0 %v826
        %v1623 = vpop.f32.mrb[0].mxu0
        %v1624 = vadd.f32 %v1571, %v1623
        %v1625 = vpop.f32.mrb[0].mxu0
        %v1626 = vadd.f32 %v1573, %v1625
        %v1627 = vpop.f32.mrb[0].mxu0
        %v1628 = vadd.f32 %v1575, %v1627
        %v1629 = vpop.f32.mrb[0].mxu0
        %v1630 = vadd.f32 %v1577, %v1629
        %1631 = vmatprep.mubr.bf16.mxu0 0
        %1632 = vmatmul.mubr.bf16.gmra.mrb[0].mxu0 %v829
        %v1633 = vpop.f32.mrb[0].mxu0
        %v1634 = vadd.f32 %v1581, %v1633
        %v1635 = vpop.f32.mrb[0].mxu0
        %v1636 = vadd.f32 %v1583, %v1635
        %v1637 = vpop.f32.mrb[0].mxu0
        %v1638 = vadd.f32 %v1585, %v1637
        %v1639 = vpop.f32.mrb[0].mxu0
        %v1640 = vadd.f32 %v1587, %v1639
        %1641 = vdwg.mxu0
        %1642 = vmatprep.subr.bf16.mxu0 0
        %1643 = vmatpush1.bf16.msra.mxu0 %v1394
        %1644 = vmatprep.subr.bf16.mxu0 0
        %1645 = vmatpush1.bf16.msra.mxu0 %v1397
        %1646 = vmatprep.subr.bf16.mxu0 0
        %1647 = vmatpush1.bf16.msra.mxu0 %v1400
        %1648 = vmatprep.subr.bf16.mxu0 0
        %1649 = vmatpush1.bf16.msra.mxu0 %v1403
        %1650 = vmatprep.subr.bf16.mxu0 0
        %1651 = vmatpush1.bf16.msra.mxu0 %v1406
        %1652 = vmatprep.subr.bf16.mxu0 0
        %1653 = vmatpush1.bf16.msra.mxu0 %v1409
        %1654 = vmatprep.subr.bf16.mxu0 0
        %1655 = vmatpush1.bf16.msra.mxu0 %v1412
        %1656 = vmatprep.subr.bf16.mxu0 0
        %1657 = vmatpush1.bf16.msra.mxu0 %v1415
        %1658 = vmatprep.subr.bf16.mxu0 0
        %1659 = vmatpush1.bf16.msra.mxu0 %v1418
        %1660 = vmatprep.subr.bf16.mxu0 0
        %1661 = vmatpush1.bf16.msra.mxu0 %v1421
        %1662 = vmatprep.subr.bf16.mxu0 0
        %1663 = vmatpush1.bf16.msra.mxu0 %v1424
        %1664 = vmatprep.subr.bf16.mxu0 0
        %1665 = vmatpush1.bf16.msra.mxu0 %v1427
        %1666 = vmatprep.subr.bf16.mxu0 0
        %1667 = vmatpush1.bf16.msra.mxu0 %v1430
        %1668 = vmatprep.subr.bf16.mxu0 0
        %1669 = vmatpush1.bf16.msra.mxu0 %v1433
        %1670 = vmatprep.subr.bf16.mxu0 0
        %1671 = vmatpush1.bf16.msra.mxu0 %v1436
        %1672 = vmatprep.subr.bf16.mxu0 0
        %1673 = vmatpush1.bf16.msra.mxu0 %v1439
        %1674 = vmatprep.mubr.bf16.mxu0 %v825
        %1675 = vmatmul.mubr.bf16.gmra.mrb[0].mxu0 %v824
        %v1676 = vpop.f32.mrb[0].mxu0
        %v1677 = vadd.f32 0.0, %v1676
        %v1678 = vpop.f32.mrb[0].mxu0
        %v1679 = vpop.f32.mrb[0].mxu0
        %v1680 = vadd.f32 0.0, %v1679
        %v1681 = vpop.f32.mrb[0].mxu0
        %1682 = vmatprep.mubr.bf16.mxu0 %v828
        %1683 = vmatmul.mubr.bf16.gmra.mrb[0].mxu0 %v827
        %v1684 = vpop.f32.mrb[0].mxu0
        %v1685 = vadd.f32 0.0, %v1684
        %v1686 = vpop.f32.mrb[0].mxu0
        %v1687 = vpop.f32.mrb[0].mxu0
        %v1688 = vadd.f32 0.0, %v1687
        %v1689 = vpop.f32.mrb[0].mxu0
        %1690 = vdwg.mxu0
        %1691 = vmatprep.subr.bf16.mxu0 0
        %1692 = vmatpush1.bf16.msra.mxu0 %v1442
        %1693 = vmatprep.subr.bf16.mxu0 0
        %1694 = vmatpush1.bf16.msra.mxu0 %v1445
        %1695 = vmatprep.subr.bf16.mxu0 0
        %1696 = vmatpush1.bf16.msra.mxu0 %v1448
        %1697 = vmatprep.subr.bf16.mxu0 0
        %1698 = vmatpush1.bf16.msra.mxu0 %v1451
        %1699 = vmatprep.subr.bf16.mxu0 0
        %1700 = vmatpush1.bf16.msra.mxu0 %v1454
        %1701 = vmatprep.subr.bf16.mxu0 0
        %1702 = vmatpush1.bf16.msra.mxu0 %v1457
        %1703 = vmatprep.subr.bf16.mxu0 0
        %1704 = vmatpush1.bf16.msra.mxu0 %v1460
        %1705 = vmatprep.subr.bf16.mxu0 0
        %1706 = vmatpush1.bf16.msra.mxu0 %v1463
        %1707 = vmatprep.subr.bf16.mxu0 0
        %1708 = vmatpush1.bf16.msra.mxu0 0
        %1709 = vmatprep.subr.bf16.mxu0 0
        %1710 = vmatpush1.bf16.msra.mxu0 0
        %1711 = vmatprep.subr.bf16.mxu0 0
        %1712 = vmatpush1.bf16.msra.mxu0 0
        %1713 = vmatprep.subr.bf16.mxu0 0
        %1714 = vmatpush1.bf16.msra.mxu0 0
        %1715 = vmatprep.subr.bf16.mxu0 0
        %1716 = vmatpush1.bf16.msra.mxu0 0
        %1717 = vmatprep.subr.bf16.mxu0 0
        %1718 = vmatpush1.bf16.msra.mxu0 0
        %1719 = vmatprep.subr.bf16.mxu0 0
        %1720 = vmatpush1.bf16.msra.mxu0 0
        %1721 = vmatprep.subr.bf16.mxu0 0
        %1722 = vmatpush1.bf16.msra.mxu0 0
        %1723 = vmatprep.mubr.bf16.mxu0 0
        %1724 = vmatmul.mubr.bf16.gmra.mrb[0].mxu0 %v826
        %v1725 = vpop.f32.mrb[0].mxu0
        %v1726 = vadd.f32 %v1677, %v1725
        %v1727 = vpop.f32.mrb[0].mxu0
        %v1728 = vpop.f32.mrb[0].mxu0
        %v1729 = vadd.f32 %v1680, %v1728
        %v1730 = vpop.f32.mrb[0].mxu0
        %1731 = vmatprep.mubr.bf16.mxu0 0
        %1732 = vmatmul.mubr.bf16.gmra.mrb[0].mxu0 %v829
        %v1733 = vpop.f32.mrb[0].mxu0
        %v1734 = vadd.f32 %v1685, %v1733
        %v1735 = vpop.f32.mrb[0].mxu0
        %v1736 = vpop.f32.mrb[0].mxu0
        %v1737 = vadd.f32 %v1688, %v1736
        %v1738 = vpop.f32.mrb[0].mxu0
        %1739 = vdwg.mxu0
        %v1836 = vunpack.c.l.b16 %v959
        %v1837 = vunpack.c.h.b16 %v959
        %v1838 = vunpack.c.l.b16 %v960
        %v1839 = vunpack.c.l.b16 %v961
        %v1840 = vunpack.c.h.b16 %v961
        %v1841 = vunpack.c.l.b16 %v962
        %v1842 = vunpack.c.l.b16 %v963
        %v1843 = vunpack.c.h.b16 %v963
        %v1844 = vunpack.c.l.b16 %v964
        %v1845 = vunpack.c.l.b16 %v965
        %v1846 = vunpack.c.h.b16 %v965
        %v1847 = vunpack.c.l.b16 %v966
        %v1848 = vunpack.c.l.b16 %v967
        %v1849 = vunpack.c.h.b16 %v967
        %v1850 = vunpack.c.l.b16 %v968
        %v1851 = vunpack.c.l.b16 %v969
        %v1852 = vunpack.c.h.b16 %v969
        %v1853 = vunpack.c.l.b16 %v970
        %v1854 = vunpack.c.l.b16 %v971
        %v1855 = vunpack.c.h.b16 %v971
        %v1856 = vunpack.c.l.b16 %v972
        %v1857 = vunpack.c.l.b16 %v973
        %v1858 = vunpack.c.h.b16 %v973
        %v1859 = vunpack.c.l.b16 %v974
        %v1860 = vunpack.c.l.b16 %v975
        %v1861 = vunpack.c.h.b16 %v975
        %v1862 = vunpack.c.l.b16 %v976
        %v1863 = vunpack.c.l.b16 %v977
        %v1864 = vunpack.c.h.b16 %v977
        %v1865 = vunpack.c.l.b16 %v978
        %v1866 = vunpack.c.l.b16 %v979
        %v1867 = vunpack.c.h.b16 %v979
        %v1868 = vunpack.c.l.b16 %v980
        %v1869 = vunpack.c.l.b16 %v981
        %v1870 = vunpack.c.h.b16 %v981
        %v1871 = vunpack.c.l.b16 %v982
        %v1872 = vunpack.c.l.b16 %v983
        %v1873 = vunpack.c.h.b16 %v983
        %v1874 = vunpack.c.l.b16 %v984
        %v1875 = vunpack.c.l.b16 %v985
        %v1876 = vunpack.c.h.b16 %v985
        %v1877 = vunpack.c.l.b16 %v986
        %v1878 = vunpack.c.l.b16 %v987
        %v1879 = vunpack.c.h.b16 %v987
        %v1880 = vunpack.c.l.b16 %v988
        %v1881 = vunpack.c.l.b16 %v989
        %v1882 = vunpack.c.h.b16 %v989
        %v1883 = vunpack.c.l.b16 %v990
        %v1884 = vunpack.c.l.b16 %v991
        %v1885 = vunpack.c.h.b16 %v991
        %v1886 = vunpack.c.l.b16 %v992
        %v1887 = vunpack.c.l.b16 %v993
        %v1888 = vunpack.c.h.b16 %v993
        %v1889 = vunpack.c.l.b16 %v994
        %v1890 = vunpack.c.l.b16 %v995
        %v1891 = vunpack.c.h.b16 %v995
        %v1892 = vunpack.c.l.b16 %v996
        %v1893 = vunpack.c.l.b16 %v997
        %v1894 = vunpack.c.h.b16 %v997
        %v1895 = vunpack.c.l.b16 %v998
        %v1896 = vunpack.c.l.b16 %v999
        %v1897 = vunpack.c.h.b16 %v999
        %v1898 = vunpack.c.l.b16 %v1000
        %v1899 = vunpack.c.l.b16 %v1001
        %v1900 = vunpack.c.h.b16 %v1001
        %v1901 = vunpack.c.l.b16 %v1002
        %v1902 = vunpack.c.l.b16 %v1003
        %v1903 = vunpack.c.h.b16 %v1003
        %v1904 = vunpack.c.l.b16 %v1004
        %v1905 = vunpack.c.l.b16 %v1005
        %v1906 = vunpack.c.h.b16 %v1005
        %v1907 = vunpack.c.l.b16 %v1006
        %v1908 = vunpack.c.l.b16 %v1007
        %v1909 = vunpack.c.h.b16 %v1007
        %v1910 = vunpack.c.l.b16 %v1008
        %v1911 = vunpack.c.l.b16 %v1009
        %v1912 = vunpack.c.h.b16 %v1009
        %v1913 = vunpack.c.l.b16 %v1010
        %v1914 = vunpack.c.l.b16 %v1011
        %v1915 = vunpack.c.h.b16 %v1011
        %v1916 = vunpack.c.l.b16 %v1012
        %v1917 = vunpack.c.l.b16 %v1013
        %v1918 = vunpack.c.h.b16 %v1013
        %v1919 = vunpack.c.l.b16 %v1014
        %v1920 = vunpack.c.l.b16 %v1015
        %v1921 = vunpack.c.h.b16 %v1015
        %v1922 = vunpack.c.l.b16 %v1016
        %v1923 = vunpack.c.l.b16 %v1017
        %v1924 = vunpack.c.h.b16 %v1017
        %v1925 = vunpack.c.l.b16 %v1018
        %v1926 = vunpack.c.l.b16 %v1019
        %v1927 = vunpack.c.h.b16 %v1019
        %v1928 = vunpack.c.l.b16 %v1020
        %v1929 = vunpack.c.l.b16 %v1021
        %v1930 = vunpack.c.h.b16 %v1021
        %v1931 = vunpack.c.l.b16 %v1022
        %v1932 = vunpack.c.l.b16 %v1023
        %v1933 = vunpack.c.h.b16 %v1023
        %v1934 = vunpack.c.l.b16 %v1024
        %v1935 = vunpack.c.l.b16 %v1025
        %v1936 = vunpack.c.h.b16 %v1025
        %v1937 = vunpack.c.l.b16 %v1026
        %v1938 = vunpack.c.l.b16 %v1027
        %v1939 = vunpack.c.h.b16 %v1027
        %v1940 = vunpack.c.l.b16 %v1028
        %v1941 = vunpack.c.l.b16 %v1029
        %v1942 = vunpack.c.h.b16 %v1029
        %v1943 = vunpack.c.l.b16 %v1030
        %v1944 = vunpack.c.l.b16 %v1031
        %v1945 = vunpack.c.h.b16 %v1031
        %v1946 = vunpack.c.l.b16 %v1032
        %v1947 = vunpack.c.l.b16 %v1033
        %v1948 = vunpack.c.h.b16 %v1033
        %v1949 = vunpack.c.l.b16 %v1034
        %v1950 = vunpack.c.l.b16 %v1035
        %v1951 = vunpack.c.h.b16 %v1035
        %v1952 = vunpack.c.l.b16 %v1036
        %v1953 = vunpack.c.l.b16 %v1037
        %v1954 = vunpack.c.h.b16 %v1037
        %v1955 = vunpack.c.l.b16 %v1038
        %v1956 = vunpack.c.l.b16 %v1039
        %v1957 = vunpack.c.h.b16 %v1039
        %v1958 = vunpack.c.l.b16 %v1040
        %v1959 = vunpack.c.l.b16 %v1041
        %v1960 = vunpack.c.h.b16 %v1041
        %v1961 = vunpack.c.l.b16 %v1042
        %v1962 = vunpack.c.l.b16 %v1043
        %v1963 = vunpack.c.h.b16 %v1043
        %v1964 = vunpack.c.l.b16 %v1044
        %v1965 = vunpack.c.l.b16 %v1045
        %v1966 = vunpack.c.h.b16 %v1045
        %v1967 = vunpack.c.l.b16 %v1046
        %v1968 = vunpack.c.l.b16 %v1047
        %v1969 = vunpack.c.h.b16 %v1047
        %v1970 = vunpack.c.l.b16 %v1048
        %v1971 = vunpack.c.l.b16 %v1049
        %v1972 = vunpack.c.h.b16 %v1049
        %v1973 = vunpack.c.l.b16 %v1050
        %v1974 = vunpack.c.l.b16 %v1051
        %v1975 = vunpack.c.h.b16 %v1051
        %v1976 = vunpack.c.l.b16 %v1052
        %v1977 = vunpack.c.l.b16 %v1053
        %v1978 = vunpack.c.h.b16 %v1053
        %v1979 = vunpack.c.l.b16 %v1054
        %v1980 = vpack.c.b16 %v1839, %v1836
        %v1981 = vpack.c.b16 %v1840, %v1837
        %v1982 = vpack.c.b16 %v1841, %v1838
        %v1983 = vpack.c.b16 %v1845, %v1842
        %v1984 = vpack.c.b16 %v1846, %v1843
        %v1985 = vpack.c.b16 %v1847, %v1844
        %v1986 = vpack.c.b16 %v1851, %v1848
        %v1987 = vpack.c.b16 %v1852, %v1849
        %v1988 = vpack.c.b16 %v1853, %v1850
        %v1989 = vpack.c.b16 %v1857, %v1854
        %v1990 = vpack.c.b16 %v1858, %v1855
        %v1991 = vpack.c.b16 %v1859, %v1856
        %v1992 = vpack.c.b16 %v1863, %v1860
        %v1993 = vpack.c.b16 %v1864, %v1861
        %v1994 = vpack.c.b16 %v1865, %v1862
        %v1995 = vpack.c.b16 %v1869, %v1866
        %v1996 = vpack.c.b16 %v1870, %v1867
        %v1997 = vpack.c.b16 %v1871, %v1868
        %v1998 = vpack.c.b16 %v1875, %v1872
        %v1999 = vpack.c.b16 %v1876, %v1873
        %v2000 = vpack.c.b16 %v1877, %v1874
        %v2001 = vpack.c.b16 %v1881, %v1878
        %v2002 = vpack.c.b16 %v1882, %v1879
        %v2003 = vpack.c.b16 %v1883, %v1880
        %v2004 = vpack.c.b16 %v1887, %v1884
        %v2005 = vpack.c.b16 %v1888, %v1885
        %v2006 = vpack.c.b16 %v1889, %v1886
        %v2007 = vpack.c.b16 %v1893, %v1890
        %v2008 = vpack.c.b16 %v1894, %v1891
        %v2009 = vpack.c.b16 %v1895, %v1892
        %v2010 = vpack.c.b16 %v1899, %v1896
        %v2011 = vpack.c.b16 %v1900, %v1897
        %v2012 = vpack.c.b16 %v1901, %v1898
        %v2013 = vpack.c.b16 %v1905, %v1902
        %v2014 = vpack.c.b16 %v1906, %v1903
        %v2015 = vpack.c.b16 %v1907, %v1904
        %v2016 = vpack.c.b16 %v1911, %v1908
        %v2017 = vpack.c.b16 %v1912, %v1909
        %v2018 = vpack.c.b16 %v1913, %v1910
        %v2019 = vpack.c.b16 %v1917, %v1914
        %v2020 = vpack.c.b16 %v1918, %v1915
        %v2021 = vpack.c.b16 %v1919, %v1916
        %v2022 = vpack.c.b16 %v1923, %v1920
        %v2023 = vpack.c.b16 %v1924, %v1921
        %v2024 = vpack.c.b16 %v1925, %v1922
        %v2025 = vpack.c.b16 %v1929, %v1926
        %v2026 = vpack.c.b16 %v1930, %v1927
        %v2027 = vpack.c.b16 %v1931, %v1928
        %v2028 = vpack.c.b16 %v1935, %v1932
        %v2029 = vpack.c.b16 %v1936, %v1933
        %v2030 = vpack.c.b16 %v1937, %v1934
        %v2031 = vpack.c.b16 %v1941, %v1938
        %v2032 = vpack.c.b16 %v1942, %v1939
        %v2033 = vpack.c.b16 %v1943, %v1940
        %v2034 = vpack.c.b16 %v1947, %v1944
        %v2035 = vpack.c.b16 %v1948, %v1945
        %v2036 = vpack.c.b16 %v1949, %v1946
        %v2037 = vpack.c.b16 %v1953, %v1950
        %v2038 = vpack.c.b16 %v1954, %v1951
        %v2039 = vpack.c.b16 %v1955, %v1952
        %v2040 = vpack.c.b16 %v1959, %v1956
        %v2041 = vpack.c.b16 %v1960, %v1957
        %v2042 = vpack.c.b16 %v1961, %v1958
        %v2043 = vpack.c.b16 %v1965, %v1962
        %v2044 = vpack.c.b16 %v1966, %v1963
        %v2045 = vpack.c.b16 %v1967, %v1964
        %v2046 = vpack.c.b16 %v1971, %v1968
        %v2047 = vpack.c.b16 %v1972, %v1969
        %v2048 = vpack.c.b16 %v1973, %v1970
        %v2049 = vpack.c.b16 %v1977, %v1974
        %v2050 = vpack.c.b16 %v1978, %v1975
        %v2051 = vpack.c.b16 %v1979, %v1976
        %2124 = vmatprep.subr.bf16.mxu0 %v1981
        %2125 = vmatpush1.bf16.msra.mxu0 %v1980
        %2126 = vmatprep.subr.bf16.mxu0 %v1984
        %2127 = vmatpush1.bf16.msra.mxu0 %v1983
        %2128 = vmatprep.subr.bf16.mxu0 %v1987
        %2129 = vmatpush1.bf16.msra.mxu0 %v1986
        %2130 = vmatprep.subr.bf16.mxu0 %v1990
        %2131 = vmatpush1.bf16.msra.mxu0 %v1989
        %2132 = vmatprep.subr.bf16.mxu0 %v1993
        %2133 = vmatpush1.bf16.msra.mxu0 %v1992
        %2134 = vmatprep.subr.bf16.mxu0 %v1996
        %2135 = vmatpush1.bf16.msra.mxu0 %v1995
        %2136 = vmatprep.subr.bf16.mxu0 %v1999
        %2137 = vmatpush1.bf16.msra.mxu0 %v1998
        %2138 = vmatprep.subr.bf16.mxu0 %v2002
        %2139 = vmatpush1.bf16.msra.mxu0 %v2001
        %2140 = vmatprep.subr.bf16.mxu0 %v2005
        %2141 = vmatpush1.bf16.msra.mxu0 %v2004
        %2142 = vmatprep.subr.bf16.mxu0 %v2008
        %2143 = vmatpush1.bf16.msra.mxu0 %v2007
        %2144 = vmatprep.subr.bf16.mxu0 %v2011
        %2145 = vmatpush1.bf16.msra.mxu0 %v2010
        %2146 = vmatprep.subr.bf16.mxu0 %v2014
        %2147 = vmatpush1.bf16.msra.mxu0 %v2013
        %2148 = vmatprep.subr.bf16.mxu0 %v2017
        %2149 = vmatpush1.bf16.msra.mxu0 %v2016
        %2150 = vmatprep.subr.bf16.mxu0 %v2020
        %2151 = vmatpush1.bf16.msra.mxu0 %v2019
        %2152 = vmatprep.subr.bf16.mxu0 %v2023
        %2153 = vmatpush1.bf16.msra.mxu0 %v2022
        %2154 = vmatprep.subr.bf16.mxu0 %v2026
        %2155 = vmatpush1.bf16.msra.mxu0 %v2025
        %2156 = vmatprep.mubr.bf16.mxu0 %v954
        %2157 = vmatmul.mubr.bf16.gmra.mrb[0].mxu0 %v953
        %v2158 = vpop.f32.mrb[0].mxu0
        %v2159 = vadd.f32 %v1624, %v2158
        %v2160 = vpop.f32.mrb[0].mxu0
        %v2161 = vadd.f32 %v1626, %v2160
        %v2162 = vpop.f32.mrb[0].mxu0
        %v2163 = vadd.f32 %v1628, %v2162
        %v2164 = vpop.f32.mrb[0].mxu0
        %v2165 = vadd.f32 %v1630, %v2164
        %2166 = vmatprep.mubr.bf16.mxu0 %v957
        %2167 = vmatmul.mubr.bf16.gmra.mrb[0].mxu0 %v956
        %v2168 = vpop.f32.mrb[0].mxu0
        %v2169 = vadd.f32 %v1634, %v2168
        %v2170 = vpop.f32.mrb[0].mxu0
        %v2171 = vadd.f32 %v1636, %v2170
        %v2172 = vpop.f32.mrb[0].mxu0
        %v2173 = vadd.f32 %v1638, %v2172
        %v2174 = vpop.f32.mrb[0].mxu0
        %v2175 = vadd.f32 %v1640, %v2174
        %2176 = vdwg.mxu0
        %2177 = vmatprep.subr.bf16.mxu0 %v2029
        %2178 = vmatpush1.bf16.msra.mxu0 %v2028
        %2179 = vmatprep.subr.bf16.mxu0 %v2032
        %2180 = vmatpush1.bf16.msra.mxu0 %v2031
        %2181 = vmatprep.subr.bf16.mxu0 %v2035
        %2182 = vmatpush1.bf16.msra.mxu0 %v2034
        %2183 = vmatprep.subr.bf16.mxu0 %v2038
        %2184 = vmatpush1.bf16.msra.mxu0 %v2037
        %2185 = vmatprep.subr.bf16.mxu0 %v2041
        %2186 = vmatpush1.bf16.msra.mxu0 %v2040
        %2187 = vmatprep.subr.bf16.mxu0 %v2044
        %2188 = vmatpush1.bf16.msra.mxu0 %v2043
        %2189 = vmatprep.subr.bf16.mxu0 %v2047
        %2190 = vmatpush1.bf16.msra.mxu0 %v2046
        %2191 = vmatprep.subr.bf16.mxu0 %v2050
        %2192 = vmatpush1.bf16.msra.mxu0 %v2049
        %2193 = vmatprep.subr.bf16.mxu0 0
        %2194 = vmatpush1.bf16.msra.mxu0 0
        %2195 = vmatprep.subr.bf16.mxu0 0
        %2196 = vmatpush1.bf16.msra.mxu0 0
        %2197 = vmatprep.subr.bf16.mxu0 0
        %2198 = vmatpush1.bf16.msra.mxu0 0
        %2199 = vmatprep.subr.bf16.mxu0 0
        %2200 = vmatpush1.bf16.msra.mxu0 0
        %2201 = vmatprep.subr.bf16.mxu0 0
        %2202 = vmatpush1.bf16.msra.mxu0 0
        %2203 = vmatprep.subr.bf16.mxu0 0
        %2204 = vmatpush1.bf16.msra.mxu0 0
        %2205 = vmatprep.subr.bf16.mxu0 0
        %2206 = vmatpush1.bf16.msra.mxu0 0
        %2207 = vmatprep.subr.bf16.mxu0 0
        %2208 = vmatpush1.bf16.msra.mxu0 0
        %2209 = vmatprep.mubr.bf16.mxu0 0
        %2210 = vmatmul.mubr.bf16.gmra.mrb[0].mxu0 %v955
        %v2211 = vpop.f32.mrb[0].mxu0
        %v2212 = vadd.f32 %v2159, %v2211
        %v2213 = vpop.f32.mrb[0].mxu0
        %v2214 = vadd.f32 %v2161, %v2213
        %v2215 = vpop.f32.mrb[0].mxu0
        %v2216 = vadd.f32 %v2163, %v2215
        %v2217 = vpop.f32.mrb[0].mxu0
        %v2218 = vadd.f32 %v2165, %v2217
        %2219 = vmatprep.mubr.bf16.mxu0 0
        %2220 = vmatmul.mubr.bf16.gmra.mrb[0].mxu0 %v958
        %v2221 = vpop.f32.mrb[0].mxu0
        %v2222 = vadd.f32 %v2169, %v2221
        %v2223 = vpop.f32.mrb[0].mxu0
        %v2224 = vadd.f32 %v2171, %v2223
        %v2225 = vpop.f32.mrb[0].mxu0
        %v2226 = vadd.f32 %v2173, %v2225
        %v2227 = vpop.f32.mrb[0].mxu0
        %v2228 = vadd.f32 %v2175, %v2227
        %2229 = vdwg.mxu0
        %2230 = vmatprep.subr.bf16.mxu0 0
        %2231 = vmatpush1.bf16.msra.mxu0 %v1982
        %2232 = vmatprep.subr.bf16.mxu0 0
        %2233 = vmatpush1.bf16.msra.mxu0 %v1985
        %2234 = vmatprep.subr.bf16.mxu0 0
        %2235 = vmatpush1.bf16.msra.mxu0 %v1988
        %2236 = vmatprep.subr.bf16.mxu0 0
        %2237 = vmatpush1.bf16.msra.mxu0 %v1991
        %2238 = vmatprep.subr.bf16.mxu0 0
        %2239 = vmatpush1.bf16.msra.mxu0 %v1994
        %2240 = vmatprep.subr.bf16.mxu0 0
        %2241 = vmatpush1.bf16.msra.mxu0 %v1997
        %2242 = vmatprep.subr.bf16.mxu0 0
        %2243 = vmatpush1.bf16.msra.mxu0 %v2000
        %2244 = vmatprep.subr.bf16.mxu0 0
        %2245 = vmatpush1.bf16.msra.mxu0 %v2003
        %2246 = vmatprep.subr.bf16.mxu0 0
        %2247 = vmatpush1.bf16.msra.mxu0 %v2006
        %2248 = vmatprep.subr.bf16.mxu0 0
        %2249 = vmatpush1.bf16.msra.mxu0 %v2009
        %2250 = vmatprep.subr.bf16.mxu0 0
        %2251 = vmatpush1.bf16.msra.mxu0 %v2012
        %2252 = vmatprep.subr.bf16.mxu0 0
        %2253 = vmatpush1.bf16.msra.mxu0 %v2015
        %2254 = vmatprep.subr.bf16.mxu0 0
        %2255 = vmatpush1.bf16.msra.mxu0 %v2018
        %2256 = vmatprep.subr.bf16.mxu0 0
        %2257 = vmatpush1.bf16.msra.mxu0 %v2021
        %2258 = vmatprep.subr.bf16.mxu0 0
        %2259 = vmatpush1.bf16.msra.mxu0 %v2024
        %2260 = vmatprep.subr.bf16.mxu0 0
        %2261 = vmatpush1.bf16.msra.mxu0 %v2027
        %2262 = vmatprep.mubr.bf16.mxu0 %v954
        %2263 = vmatmul.mubr.bf16.gmra.mrb[0].mxu0 %v953
        %v2264 = vpop.f32.mrb[0].mxu0
        %v2265 = vadd.f32 %v1726, %v2264
        %v2266 = vpop.f32.mrb[0].mxu0
        %v2267 = vpop.f32.mrb[0].mxu0
        %v2268 = vadd.f32 %v1729, %v2267
        %v2269 = vpop.f32.mrb[0].mxu0
        %2270 = vmatprep.mubr.bf16.mxu0 %v957
        %2271 = vmatmul.mubr.bf16.gmra.mrb[0].mxu0 %v956
        %v2272 = vpop.f32.mrb[0].mxu0
        %v2273 = vadd.f32 %v1734, %v2272
        %v2274 = vpop.f32.mrb[0].mxu0
        %v2275 = vpop.f32.mrb[0].mxu0
        %v2276 = vadd.f32 %v1737, %v2275
        %v2277 = vpop.f32.mrb[0].mxu0
        %2278 = vdwg.mxu0
        %2279 = vmatprep.subr.bf16.mxu0 0
        %2280 = vmatpush1.bf16.msra.mxu0 %v2030
        %2281 = vmatprep.subr.bf16.mxu0 0
        %2282 = vmatpush1.bf16.msra.mxu0 %v2033
        %2283 = vmatprep.subr.bf16.mxu0 0
        %2284 = vmatpush1.bf16.msra.mxu0 %v2036
        %2285 = vmatprep.subr.bf16.mxu0 0
        %2286 = vmatpush1.bf16.msra.mxu0 %v2039
        %2287 = vmatprep.subr.bf16.mxu0 0
        %2288 = vmatpush1.bf16.msra.mxu0 %v2042
        %2289 = vmatprep.subr.bf16.mxu0 0
        %2290 = vmatpush1.bf16.msra.mxu0 %v2045
        %2291 = vmatprep.subr.bf16.mxu0 0
        %2292 = vmatpush1.bf16.msra.mxu0 %v2048
        %2293 = vmatprep.subr.bf16.mxu0 0
        %2294 = vmatpush1.bf16.msra.mxu0 %v2051
        %2295 = vmatprep.subr.bf16.mxu0 0
        %2296 = vmatpush1.bf16.msra.mxu0 0
        %2297 = vmatprep.subr.bf16.mxu0 0
        %2298 = vmatpush1.bf16.msra.mxu0 0
        %2299 = vmatprep.subr.bf16.mxu0 0
        %2300 = vmatpush1.bf16.msra.mxu0 0
        %2301 = vmatprep.subr.bf16.mxu0 0
        %2302 = vmatpush1.bf16.msra.mxu0 0
        %2303 = vmatprep.subr.bf16.mxu0 0
        %2304 = vmatpush1.bf16.msra.mxu0 0
        %2305 = vmatprep.subr.bf16.mxu0 0
        %2306 = vmatpush1.bf16.msra.mxu0 0
        %2307 = vmatprep.subr.bf16.mxu0 0
        %2308 = vmatpush1.bf16.msra.mxu0 0
        %2309 = vmatprep.subr.bf16.mxu0 0
        %2310 = vmatpush1.bf16.msra.mxu0 0
        %2311 = vmatprep.mubr.bf16.mxu0 0
        %2312 = vmatmul.mubr.bf16.gmra.mrb[0].mxu0 %v955
        %v2313 = vpop.f32.mrb[0].mxu0
        %v2314 = vadd.f32 %v2265, %v2313
        %v2315 = vpop.f32.mrb[0].mxu0
        %v2316 = vpop.f32.mrb[0].mxu0
        %v2317 = vadd.f32 %v2268, %v2316
        %v2318 = vpop.f32.mrb[0].mxu0
        %2319 = vmatprep.mubr.bf16.mxu0 0
        %2320 = vmatmul.mubr.bf16.gmra.mrb[0].mxu0 %v958
        %v2321 = vpop.f32.mrb[0].mxu0
        %v2322 = vadd.f32 %v2273, %v2321
        %v2323 = vpop.f32.mrb[0].mxu0
        %v2324 = vpop.f32.mrb[0].mxu0
        %v2325 = vadd.f32 %v2276, %v2324
        %v2326 = vpop.f32.mrb[0].mxu0
        %2327 = vdwg.mxu0
        %s2328 = scalar_lea.vmem [#allocation9], 32
        %v2329 = vld [vmem:[%s2328] sm:$0xf]
        %v2330 = vld [vmem:[%s2328 + $0x4] sm:$0xf]
        %v2331 = vld [vmem:[%s2328 + $0x8] sm:$0xf]
        %v2332 = vld [vmem:[%s2328 + $0xc] sm:$0xf]
        %v2337 = vunpack.c.l.b16 %v2329
        %v2338 = vunpack.c.l.b16 %v2330
        %v2339 = vunpack.c.l.b16 %v2331
        %v2340 = vunpack.c.l.b16 %v2332
        %v2341 = vpack.c.b16 %v2338, %v2337
        %v2342 = vpack.c.b16 %v2340, %v2339
        %v2344 = vsel %vm844, %v2341, 0
        %v2347 = vsel %vm844, %v2342, 0
        %2349 = vmatprep.subr.bf16.mxu0 %v825
        %2350 = vmatpush1.bf16.msra.mxu0 %v824
        %2351 = vmatprep.subr.bf16.mxu0 %v828
        %2352 = vmatpush1.bf16.msra.mxu0 %v827
        %2353 = vmatprep.subr.bf16.mxu0 0
        %2354 = vmatpush1.bf16.msra.mxu0 0
        %2355 = vmatprep.subr.bf16.mxu0 0
        %2356 = vmatpush1.bf16.msra.mxu0 0
        %2357 = vmatprep.subr.bf16.mxu0 0
        %2358 = vmatpush1.bf16.msra.mxu0 0
        %2359 = vmatprep.subr.bf16.mxu0 0
        %2360 = vmatpush1.bf16.msra.mxu0 0
        %2361 = vmatprep.subr.bf16.mxu0 0
        %2362 = vmatpush1.bf16.msra.mxu0 0
        %2363 = vmatprep.subr.bf16.mxu0 0
        %2364 = vmatpush1.bf16.msra.mxu0 0
        %2365 = vmatprep.subr.bf16.mxu0 0
        %2366 = vmatpush1.bf16.msra.mxu0 0
        %2367 = vmatprep.subr.bf16.mxu0 0
        %2368 = vmatpush1.bf16.msra.mxu0 0
        %2369 = vmatprep.subr.bf16.mxu0 0
        %2370 = vmatpush1.bf16.msra.mxu0 0
        %2371 = vmatprep.subr.bf16.mxu0 0
        %2372 = vmatpush1.bf16.msra.mxu0 0
        %2373 = vmatprep.subr.bf16.mxu0 0
        %2374 = vmatpush1.bf16.msra.mxu0 0
        %2375 = vmatprep.subr.bf16.mxu0 0
        %2376 = vmatpush1.bf16.msra.mxu0 0
        %2377 = vmatprep.subr.bf16.mxu0 0
        %2378 = vmatpush1.bf16.msra.mxu0 0
        %2379 = vmatprep.subr.bf16.mxu0 0
        %2380 = vmatpush1.bf16.msra.mxu0 0
        %2381 = vmatprep.mubr.bf16.mxu0 0
        %2382 = vmatmul.mubr.bf16.gmra.mrb[0].mxu0 %v2344
        %v2383 = vpop.f32.mrb[0].mxu0
        %v2384 = vadd.f32 0.0, %v2383
        %v2385 = vpop.f32.mrb[0].mxu0
        %v2386 = vadd.f32 0.0, %v2385
        %v2387 = vpop.f32.mrb[0].mxu0
        %v2388 = vadd.f32 0.0, %v2387
        %v2389 = vpop.f32.mrb[0].mxu0
        %v2390 = vadd.f32 0.0, %v2389
        %2391 = vmatprep.mubr.bf16.mxu0 0
        %2392 = vmatmul.mubr.bf16.gmra.mrb[0].mxu0 %v2347
        %v2393 = vpop.f32.mrb[0].mxu0
        %v2394 = vadd.f32 0.0, %v2393
        %v2395 = vpop.f32.mrb[0].mxu0
        %v2396 = vadd.f32 0.0, %v2395
        %v2397 = vpop.f32.mrb[0].mxu0
        %v2398 = vadd.f32 0.0, %v2397
        %v2399 = vpop.f32.mrb[0].mxu0
        %v2400 = vadd.f32 0.0, %v2399
        %2401 = vdwg.mxu0
        %2402 = vmatprep.subr.bf16.mxu0 0
        %2403 = vmatpush1.bf16.msra.mxu0 %v826
        %2404 = vmatprep.subr.bf16.mxu0 0
        %2405 = vmatpush1.bf16.msra.mxu0 %v829
        %2406 = vmatprep.subr.bf16.mxu0 0
        %2407 = vmatpush1.bf16.msra.mxu0 0
        %2408 = vmatprep.subr.bf16.mxu0 0
        %2409 = vmatpush1.bf16.msra.mxu0 0
        %2410 = vmatprep.subr.bf16.mxu0 0
        %2411 = vmatpush1.bf16.msra.mxu0 0
        %2412 = vmatprep.subr.bf16.mxu0 0
        %2413 = vmatpush1.bf16.msra.mxu0 0
        %2414 = vmatprep.subr.bf16.mxu0 0
        %2415 = vmatpush1.bf16.msra.mxu0 0
        %2416 = vmatprep.subr.bf16.mxu0 0
        %2417 = vmatpush1.bf16.msra.mxu0 0
        %2418 = vmatprep.subr.bf16.mxu0 0
        %2419 = vmatpush1.bf16.msra.mxu0 0
        %2420 = vmatprep.subr.bf16.mxu0 0
        %2421 = vmatpush1.bf16.msra.mxu0 0
        %2422 = vmatprep.subr.bf16.mxu0 0
        %2423 = vmatpush1.bf16.msra.mxu0 0
        %2424 = vmatprep.subr.bf16.mxu0 0
        %2425 = vmatpush1.bf16.msra.mxu0 0
        %2426 = vmatprep.subr.bf16.mxu0 0
        %2427 = vmatpush1.bf16.msra.mxu0 0
        %2428 = vmatprep.subr.bf16.mxu0 0
        %2429 = vmatpush1.bf16.msra.mxu0 0
        %2430 = vmatprep.subr.bf16.mxu0 0
        %2431 = vmatpush1.bf16.msra.mxu0 0
        %2432 = vmatprep.subr.bf16.mxu0 0
        %2433 = vmatpush1.bf16.msra.mxu0 0
        %2434 = vmatprep.mubr.bf16.mxu0 0
        %2435 = vmatmul.mubr.bf16.gmra.mrb[0].mxu0 %v2344
        %v2436 = vpop.f32.mrb[0].mxu0
        %v2437 = vadd.f32 0.0, %v2436
        %v2438 = vpop.f32.mrb[0].mxu0
        %v2439 = vpop.f32.mrb[0].mxu0
        %v2440 = vadd.f32 0.0, %v2439
        %v2441 = vpop.f32.mrb[0].mxu0
        %2442 = vmatprep.mubr.bf16.mxu0 0
        %2443 = vmatmul.mubr.bf16.gmra.mrb[0].mxu0 %v2347
        %v2444 = vpop.f32.mrb[0].mxu0
        %v2445 = vadd.f32 0.0, %v2444
        %v2446 = vpop.f32.mrb[0].mxu0
        %v2447 = vpop.f32.mrb[0].mxu0
        %v2448 = vadd.f32 0.0, %v2447
        %v2449 = vpop.f32.mrb[0].mxu0
        %2450 = vdwg.mxu0
        %v2451 = vpack.c.bf16 %v2388, %v2384
        %v2452 = vpack.c.bf16 %v2390, %v2386
        %v2453 = vpack.c.bf16 %v2440, %v2437
        %v2454 = vpack.c.bf16 %v2398, %v2394
        %v2455 = vpack.c.bf16 %v2400, %v2396
        %v2456 = vpack.c.bf16 %v2448, %v2445
        %s2457 = scalar_lea.vmem [#allocation8], 1152
        %v2458 = vld [vmem:[%s2457] sm:$0xff]
        %v2459 = vld [vmem:[%s2457 + $0x8] sm:$0xf]
        %v2460 = vld [vmem:[%s2457 + $0xc] sm:$0xff]
        %v2461 = vld [vmem:[%s2457 + $0x14] sm:$0xf]
        %v2462 = vld [vmem:[%s2457 + $0x18] sm:$0xff]
        %v2463 = vld [vmem:[%s2457 + $0x20] sm:$0xf]
        %v2464 = vld [vmem:[%s2457 + $0x24] sm:$0xff]
        %v2465 = vld [vmem:[%s2457 + $0x2c] sm:$0xf]
        %v2466 = vld [vmem:[%s2457 + $0x30] sm:$0xff]
        %v2467 = vld [vmem:[%s2457 + $0x38] sm:$0xf]
        %v2468 = vld [vmem:[%s2457 + $0x3c] sm:$0xff]
        %v2469 = vld [vmem:[%s2457 + $0x44] sm:$0xf]
        %v2470 = vld [vmem:[%s2457 + $0x48] sm:$0xff]
        %v2471 = vld [vmem:[%s2457 + $0x50] sm:$0xf]
        %v2472 = vld [vmem:[%s2457 + $0x54] sm:$0xff]
        %v2473 = vld [vmem:[%s2457 + $0x5c] sm:$0xf]
        %v2474 = vld [vmem:[%s2457 + $0x60] sm:$0xff]
        %v2475 = vld [vmem:[%s2457 + $0x68] sm:$0xf]
        %v2476 = vld [vmem:[%s2457 + $0x6c] sm:$0xff]
        %v2477 = vld [vmem:[%s2457 + $0x74] sm:$0xf]
        %v2478 = vld [vmem:[%s2457 + $0x78] sm:$0xff]
        %v2479 = vld [vmem:[%s2457 + $0x80] sm:$0xf]
        %v2480 = vld [vmem:[%s2457 + $0x84] sm:$0xff]
        %v2481 = vld [vmem:[%s2457 + $0x8c] sm:$0xf]
        %v2482 = vld [vmem:[%s2457 + $0x90] sm:$0xff]
        %v2483 = vld [vmem:[%s2457 + $0x98] sm:$0xf]
        %v2484 = vld [vmem:[%s2457 + $0x9c] sm:$0xff]
        %v2485 = vld [vmem:[%s2457 + $0xa4] sm:$0xf]
        %v2486 = vld [vmem:[%s2457 + $0xa8] sm:$0xff]
        %v2487 = vld [vmem:[%s2457 + $0xb0] sm:$0xf]
        %v2488 = vld [vmem:[%s2457 + $0xb4] sm:$0xff]
        %v2489 = vld [vmem:[%s2457 + $0xbc] sm:$0xf]
        %v2490 = vld [vmem:[%s2457 + $0xc0] sm:$0xff]
        %v2491 = vld [vmem:[%s2457 + $0xc8] sm:$0xf]
        %v2492 = vld [vmem:[%s2457 + $0xcc] sm:$0xff]
        %v2493 = vld [vmem:[%s2457 + $0xd4] sm:$0xf]
        %v2494 = vld [vmem:[%s2457 + $0xd8] sm:$0xff]
        %v2495 = vld [vmem:[%s2457 + $0xe0] sm:$0xf]
        %v2496 = vld [vmem:[%s2457 + $0xe4] sm:$0xff]
        %v2497 = vld [vmem:[%s2457 + $0xec] sm:$0xf]
        %v2498 = vld [vmem:[%s2457 + $0xf0] sm:$0xff]
        %v2499 = vld [vmem:[%s2457 + $0xf8] sm:$0xf]
        %v2500 = vld [vmem:[%s2457 + $0xfc] sm:$0xff]
        %v2501 = vld [vmem:[%s2457 + $0x104] sm:$0xf]
        %v2502 = vld [vmem:[%s2457 + $0x108] sm:$0xff]
        %v2503 = vld [vmem:[%s2457 + $0x110] sm:$0xf]
        %v2504 = vld [vmem:[%s2457 + $0x114] sm:$0xff]
        %v2505 = vld [vmem:[%s2457 + $0x11c] sm:$0xf]
        %v2506 = vld [vmem:[%s2457 + $0x120] sm:$0xff]
        %v2507 = vld [vmem:[%s2457 + $0x128] sm:$0xf]
        %v2508 = vld [vmem:[%s2457 + $0x12c] sm:$0xff]
        %v2509 = vld [vmem:[%s2457 + $0x134] sm:$0xf]
        %v2510 = vld [vmem:[%s2457 + $0x138] sm:$0xff]
        %v2511 = vld [vmem:[%s2457 + $0x140] sm:$0xf]
        %v2512 = vld [vmem:[%s2457 + $0x144] sm:$0xff]
        %v2513 = vld [vmem:[%s2457 + $0x14c] sm:$0xf]
        %v2514 = vld [vmem:[%s2457 + $0x150] sm:$0xff]
        %v2515 = vld [vmem:[%s2457 + $0x158] sm:$0xf]
        %v2516 = vld [vmem:[%s2457 + $0x15c] sm:$0xff]
        %v2517 = vld [vmem:[%s2457 + $0x164] sm:$0xf]
        %v2518 = vld [vmem:[%s2457 + $0x168] sm:$0xff]
        %v2519 = vld [vmem:[%s2457 + $0x170] sm:$0xf]
        %v2520 = vld [vmem:[%s2457 + $0x174] sm:$0xff]
        %v2521 = vld [vmem:[%s2457 + $0x17c] sm:$0xf]
        %v2522 = vld [vmem:[%s2457 + $0x180] sm:$0xff]
        %v2523 = vld [vmem:[%s2457 + $0x188] sm:$0xf]
        %v2524 = vld [vmem:[%s2457 + $0x18c] sm:$0xff]
        %v2525 = vld [vmem:[%s2457 + $0x194] sm:$0xf]
        %v2526 = vld [vmem:[%s2457 + $0x198] sm:$0xff]
        %v2527 = vld [vmem:[%s2457 + $0x1a0] sm:$0xf]
        %v2528 = vld [vmem:[%s2457 + $0x1a4] sm:$0xff]
        %v2529 = vld [vmem:[%s2457 + $0x1ac] sm:$0xf]
        %v2530 = vld [vmem:[%s2457 + $0x1b0] sm:$0xff]
        %v2531 = vld [vmem:[%s2457 + $0x1b8] sm:$0xf]
        %v2532 = vld [vmem:[%s2457 + $0x1bc] sm:$0xff]
        %v2533 = vld [vmem:[%s2457 + $0x1c4] sm:$0xf]
        %v2534 = vld [vmem:[%s2457 + $0x1c8] sm:$0xff]
        %v2535 = vld [vmem:[%s2457 + $0x1d0] sm:$0xf]
        %v2536 = vld [vmem:[%s2457 + $0x1d4] sm:$0xff]
        %v2537 = vld [vmem:[%s2457 + $0x1dc] sm:$0xf]
        %v2538 = vld [vmem:[%s2457 + $0x1e0] sm:$0xff]
        %v2539 = vld [vmem:[%s2457 + $0x1e8] sm:$0xf]
        %v2540 = vld [vmem:[%s2457 + $0x1ec] sm:$0xff]
        %v2541 = vld [vmem:[%s2457 + $0x1f4] sm:$0xf]
        %v2542 = vld [vmem:[%s2457 + $0x1f8] sm:$0xff]
        %v2543 = vld [vmem:[%s2457 + $0x200] sm:$0xf]
        %v2544 = vld [vmem:[%s2457 + $0x204] sm:$0xff]
        %v2545 = vld [vmem:[%s2457 + $0x20c] sm:$0xf]
        %v2546 = vld [vmem:[%s2457 + $0x210] sm:$0xff]
        %v2547 = vld [vmem:[%s2457 + $0x218] sm:$0xf]
        %v2548 = vld [vmem:[%s2457 + $0x21c] sm:$0xff]
        %v2549 = vld [vmem:[%s2457 + $0x224] sm:$0xf]
        %v2550 = vld [vmem:[%s2457 + $0x228] sm:$0xff]
        %v2551 = vld [vmem:[%s2457 + $0x230] sm:$0xf]
        %v2552 = vld [vmem:[%s2457 + $0x234] sm:$0xff]
        %v2553 = vld [vmem:[%s2457 + $0x23c] sm:$0xf]
        %v2650 = vunpack.c.l.b16 %v2458
        %v2651 = vunpack.c.h.b16 %v2458
        %v2652 = vunpack.c.l.b16 %v2459
        %v2653 = vunpack.c.l.b16 %v2460
        %v2654 = vunpack.c.h.b16 %v2460
        %v2655 = vunpack.c.l.b16 %v2461
        %v2656 = vunpack.c.l.b16 %v2462
        %v2657 = vunpack.c.h.b16 %v2462
        %v2658 = vunpack.c.l.b16 %v2463
        %v2659 = vunpack.c.l.b16 %v2464
        %v2660 = vunpack.c.h.b16 %v2464
        %v2661 = vunpack.c.l.b16 %v2465
        %v2662 = vunpack.c.l.b16 %v2466
        %v2663 = vunpack.c.h.b16 %v2466
        %v2664 = vunpack.c.l.b16 %v2467
        %v2665 = vunpack.c.l.b16 %v2468
        %v2666 = vunpack.c.h.b16 %v2468
        %v2667 = vunpack.c.l.b16 %v2469
        %v2668 = vunpack.c.l.b16 %v2470
        %v2669 = vunpack.c.h.b16 %v2470
        %v2670 = vunpack.c.l.b16 %v2471
        %v2671 = vunpack.c.l.b16 %v2472
        %v2672 = vunpack.c.h.b16 %v2472
        %v2673 = vunpack.c.l.b16 %v2473
        %v2674 = vunpack.c.l.b16 %v2474
        %v2675 = vunpack.c.h.b16 %v2474
        %v2676 = vunpack.c.l.b16 %v2475
        %v2677 = vunpack.c.l.b16 %v2476
        %v2678 = vunpack.c.h.b16 %v2476
        %v2679 = vunpack.c.l.b16 %v2477
        %v2680 = vunpack.c.l.b16 %v2478
        %v2681 = vunpack.c.h.b16 %v2478
        %v2682 = vunpack.c.l.b16 %v2479
        %v2683 = vunpack.c.l.b16 %v2480
        %v2684 = vunpack.c.h.b16 %v2480
        %v2685 = vunpack.c.l.b16 %v2481
        %v2686 = vunpack.c.l.b16 %v2482
        %v2687 = vunpack.c.h.b16 %v2482
        %v2688 = vunpack.c.l.b16 %v2483
        %v2689 = vunpack.c.l.b16 %v2484
        %v2690 = vunpack.c.h.b16 %v2484
        %v2691 = vunpack.c.l.b16 %v2485
        %v2692 = vunpack.c.l.b16 %v2486
        %v2693 = vunpack.c.h.b16 %v2486
        %v2694 = vunpack.c.l.b16 %v2487
        %v2695 = vunpack.c.l.b16 %v2488
        %v2696 = vunpack.c.h.b16 %v2488
        %v2697 = vunpack.c.l.b16 %v2489
        %v2698 = vunpack.c.l.b16 %v2490
        %v2699 = vunpack.c.h.b16 %v2490
        %v2700 = vunpack.c.l.b16 %v2491
        %v2701 = vunpack.c.l.b16 %v2492
        %v2702 = vunpack.c.h.b16 %v2492
        %v2703 = vunpack.c.l.b16 %v2493
        %v2704 = vunpack.c.l.b16 %v2494
        %v2705 = vunpack.c.h.b16 %v2494
        %v2706 = vunpack.c.l.b16 %v2495
        %v2707 = vunpack.c.l.b16 %v2496
        %v2708 = vunpack.c.h.b16 %v2496
        %v2709 = vunpack.c.l.b16 %v2497
        %v2710 = vunpack.c.l.b16 %v2498
        %v2711 = vunpack.c.h.b16 %v2498
        %v2712 = vunpack.c.l.b16 %v2499
        %v2713 = vunpack.c.l.b16 %v2500
        %v2714 = vunpack.c.h.b16 %v2500
        %v2715 = vunpack.c.l.b16 %v2501
        %v2716 = vunpack.c.l.b16 %v2502
        %v2717 = vunpack.c.h.b16 %v2502
        %v2718 = vunpack.c.l.b16 %v2503
        %v2719 = vunpack.c.l.b16 %v2504
        %v2720 = vunpack.c.h.b16 %v2504
        %v2721 = vunpack.c.l.b16 %v2505
        %v2722 = vunpack.c.l.b16 %v2506
        %v2723 = vunpack.c.h.b16 %v2506
        %v2724 = vunpack.c.l.b16 %v2507
        %v2725 = vunpack.c.l.b16 %v2508
        %v2726 = vunpack.c.h.b16 %v2508
        %v2727 = vunpack.c.l.b16 %v2509
        %v2728 = vunpack.c.l.b16 %v2510
        %v2729 = vunpack.c.h.b16 %v2510
        %v2730 = vunpack.c.l.b16 %v2511
        %v2731 = vunpack.c.l.b16 %v2512
        %v2732 = vunpack.c.h.b16 %v2512
        %v2733 = vunpack.c.l.b16 %v2513
        %v2734 = vunpack.c.l.b16 %v2514
        %v2735 = vunpack.c.h.b16 %v2514
        %v2736 = vunpack.c.l.b16 %v2515
        %v2737 = vunpack.c.l.b16 %v2516
        %v2738 = vunpack.c.h.b16 %v2516
        %v2739 = vunpack.c.l.b16 %v2517
        %v2740 = vunpack.c.l.b16 %v2518
        %v2741 = vunpack.c.h.b16 %v2518
        %v2742 = vunpack.c.l.b16 %v2519
        %v2743 = vunpack.c.l.b16 %v2520
        %v2744 = vunpack.c.h.b16 %v2520
        %v2745 = vunpack.c.l.b16 %v2521
        %v2746 = vunpack.c.l.b16 %v2522
        %v2747 = vunpack.c.h.b16 %v2522
        %v2748 = vunpack.c.l.b16 %v2523
        %v2749 = vunpack.c.l.b16 %v2524
        %v2750 = vunpack.c.h.b16 %v2524
        %v2751 = vunpack.c.l.b16 %v2525
        %v2752 = vunpack.c.l.b16 %v2526
        %v2753 = vunpack.c.h.b16 %v2526
        %v2754 = vunpack.c.l.b16 %v2527
        %v2755 = vunpack.c.l.b16 %v2528
        %v2756 = vunpack.c.h.b16 %v2528
        %v2757 = vunpack.c.l.b16 %v2529
        %v2758 = vunpack.c.l.b16 %v2530
        %v2759 = vunpack.c.h.b16 %v2530
        %v2760 = vunpack.c.l.b16 %v2531
        %v2761 = vunpack.c.l.b16 %v2532
        %v2762 = vunpack.c.h.b16 %v2532
        %v2763 = vunpack.c.l.b16 %v2533
        %v2764 = vunpack.c.l.b16 %v2534
        %v2765 = vunpack.c.h.b16 %v2534
        %v2766 = vunpack.c.l.b16 %v2535
        %v2767 = vunpack.c.l.b16 %v2536
        %v2768 = vunpack.c.h.b16 %v2536
        %v2769 = vunpack.c.l.b16 %v2537
        %v2770 = vunpack.c.l.b16 %v2538
        %v2771 = vunpack.c.h.b16 %v2538
        %v2772 = vunpack.c.l.b16 %v2539
        %v2773 = vunpack.c.l.b16 %v2540
        %v2774 = vunpack.c.h.b16 %v2540
        %v2775 = vunpack.c.l.b16 %v2541
        %v2776 = vunpack.c.l.b16 %v2542
        %v2777 = vunpack.c.h.b16 %v2542
        %v2778 = vunpack.c.l.b16 %v2543
        %v2779 = vunpack.c.l.b16 %v2544
        %v2780 = vunpack.c.h.b16 %v2544
        %v2781 = vunpack.c.l.b16 %v2545
        %v2782 = vunpack.c.l.b16 %v2546
        %v2783 = vunpack.c.h.b16 %v2546
        %v2784 = vunpack.c.l.b16 %v2547
        %v2785 = vunpack.c.l.b16 %v2548
        %v2786 = vunpack.c.h.b16 %v2548
        %v2787 = vunpack.c.l.b16 %v2549
        %v2788 = vunpack.c.l.b16 %v2550
        %v2789 = vunpack.c.h.b16 %v2550
        %v2790 = vunpack.c.l.b16 %v2551
        %v2791 = vunpack.c.l.b16 %v2552
        %v2792 = vunpack.c.h.b16 %v2552
        %v2793 = vunpack.c.l.b16 %v2553
        %v2794 = vpack.c.b16 %v2653, %v2650
        %v2795 = vpack.c.b16 %v2654, %v2651
        %v2796 = vpack.c.b16 %v2655, %v2652
        %v2797 = vpack.c.b16 %v2659, %v2656
        %v2798 = vpack.c.b16 %v2660, %v2657
        %v2799 = vpack.c.b16 %v2661, %v2658
        %v2800 = vpack.c.b16 %v2665, %v2662
        %v2801 = vpack.c.b16 %v2666, %v2663
        %v2802 = vpack.c.b16 %v2667, %v2664
        %v2803 = vpack.c.b16 %v2671, %v2668
        %v2804 = vpack.c.b16 %v2672, %v2669
        %v2805 = vpack.c.b16 %v2673, %v2670
        %v2806 = vpack.c.b16 %v2677, %v2674
        %v2807 = vpack.c.b16 %v2678, %v2675
        %v2808 = vpack.c.b16 %v2679, %v2676
        %v2809 = vpack.c.b16 %v2683, %v2680
        %v2810 = vpack.c.b16 %v2684, %v2681
        %v2811 = vpack.c.b16 %v2685, %v2682
        %v2812 = vpack.c.b16 %v2689, %v2686
        %v2813 = vpack.c.b16 %v2690, %v2687
        %v2814 = vpack.c.b16 %v2691, %v2688
        %v2815 = vpack.c.b16 %v2695, %v2692
        %v2816 = vpack.c.b16 %v2696, %v2693
        %v2817 = vpack.c.b16 %v2697, %v2694
        %v2818 = vpack.c.b16 %v2701, %v2698
        %v2819 = vpack.c.b16 %v2702, %v2699
        %v2820 = vpack.c.b16 %v2703, %v2700
        %v2821 = vpack.c.b16 %v2707, %v2704
        %v2822 = vpack.c.b16 %v2708, %v2705
        %v2823 = vpack.c.b16 %v2709, %v2706
        %v2824 = vpack.c.b16 %v2713, %v2710
        %v2825 = vpack.c.b16 %v2714, %v2711
        %v2826 = vpack.c.b16 %v2715, %v2712
        %v2827 = vpack.c.b16 %v2719, %v2716
        %v2828 = vpack.c.b16 %v2720, %v2717
        %v2829 = vpack.c.b16 %v2721, %v2718
        %v2830 = vpack.c.b16 %v2725, %v2722
        %v2831 = vpack.c.b16 %v2726, %v2723
        %v2832 = vpack.c.b16 %v2727, %v2724
        %v2833 = vpack.c.b16 %v2731, %v2728
        %v2834 = vpack.c.b16 %v2732, %v2729
        %v2835 = vpack.c.b16 %v2733, %v2730
        %v2836 = vpack.c.b16 %v2737, %v2734
        %v2837 = vpack.c.b16 %v2738, %v2735
        %v2838 = vpack.c.b16 %v2739, %v2736
        %v2839 = vpack.c.b16 %v2743, %v2740
        %v2840 = vpack.c.b16 %v2744, %v2741
        %v2841 = vpack.c.b16 %v2745, %v2742
        %v2842 = vpack.c.b16 %v2749, %v2746
        %v2843 = vpack.c.b16 %v2750, %v2747
        %v2844 = vpack.c.b16 %v2751, %v2748
        %v2845 = vpack.c.b16 %v2755, %v2752
        %v2846 = vpack.c.b16 %v2756, %v2753
        %v2847 = vpack.c.b16 %v2757, %v2754
        %v2848 = vpack.c.b16 %v2761, %v2758
        %v2849 = vpack.c.b16 %v2762, %v2759
        %v2850 = vpack.c.b16 %v2763, %v2760
        %v2851 = vpack.c.b16 %v2767, %v2764
        %v2852 = vpack.c.b16 %v2768, %v2765
        %v2853 = vpack.c.b16 %v2769, %v2766
        %v2854 = vpack.c.b16 %v2773, %v2770
        %v2855 = vpack.c.b16 %v2774, %v2771
        %v2856 = vpack.c.b16 %v2775, %v2772
        %v2857 = vpack.c.b16 %v2779, %v2776
        %v2858 = vpack.c.b16 %v2780, %v2777
        %v2859 = vpack.c.b16 %v2781, %v2778
        %v2860 = vpack.c.b16 %v2785, %v2782
        %v2861 = vpack.c.b16 %v2786, %v2783
        %v2862 = vpack.c.b16 %v2787, %v2784
        %v2863 = vpack.c.b16 %v2791, %v2788
        %v2864 = vpack.c.b16 %v2792, %v2789
        %v2865 = vpack.c.b16 %v2793, %v2790
        %2938 = vmatprep.subr.bf16.mxu0 %v2795
        %2939 = vmatpush1.bf16.msra.mxu0 %v2794
        %2940 = vmatprep.subr.bf16.mxu0 %v2798
        %2941 = vmatpush1.bf16.msra.mxu0 %v2797
        %2942 = vmatprep.subr.bf16.mxu0 %v2801
        %2943 = vmatpush1.bf16.msra.mxu0 %v2800
        %2944 = vmatprep.subr.bf16.mxu0 %v2804
        %2945 = vmatpush1.bf16.msra.mxu0 %v2803
        %2946 = vmatprep.subr.bf16.mxu0 %v2807
        %2947 = vmatpush1.bf16.msra.mxu0 %v2806
        %2948 = vmatprep.subr.bf16.mxu0 %v2810
        %2949 = vmatpush1.bf16.msra.mxu0 %v2809
        %2950 = vmatprep.subr.bf16.mxu0 %v2813
        %2951 = vmatpush1.bf16.msra.mxu0 %v2812
        %2952 = vmatprep.subr.bf16.mxu0 %v2816
        %2953 = vmatpush1.bf16.msra.mxu0 %v2815
        %2954 = vmatprep.subr.bf16.mxu0 %v2819
        %2955 = vmatpush1.bf16.msra.mxu0 %v2818
        %2956 = vmatprep.subr.bf16.mxu0 %v2822
        %2957 = vmatpush1.bf16.msra.mxu0 %v2821
        %2958 = vmatprep.subr.bf16.mxu0 %v2825
        %2959 = vmatpush1.bf16.msra.mxu0 %v2824
        %2960 = vmatprep.subr.bf16.mxu0 %v2828
        %2961 = vmatpush1.bf16.msra.mxu0 %v2827
        %2962 = vmatprep.subr.bf16.mxu0 %v2831
        %2963 = vmatpush1.bf16.msra.mxu0 %v2830
        %2964 = vmatprep.subr.bf16.mxu0 %v2834
        %2965 = vmatpush1.bf16.msra.mxu0 %v2833
        %2966 = vmatprep.subr.bf16.mxu0 %v2837
        %2967 = vmatpush1.bf16.msra.mxu0 %v2836
        %2968 = vmatprep.subr.bf16.mxu0 %v2840
        %2969 = vmatpush1.bf16.msra.mxu0 %v2839
        %2970 = vmatprep.mubr.bf16.mxu0 %v2452
        %2971 = vmatmul.mubr.bf16.gmra.mrb[0].mxu0 %v2451
        %v2972 = vpop.f32.mrb[0].mxu0
        %v2973 = vadd.f32 0.0, %v2972
        %v2974 = vpop.f32.mrb[0].mxu0
        %v2975 = vadd.f32 0.0, %v2974
        %v2976 = vpop.f32.mrb[0].mxu0
        %v2977 = vadd.f32 0.0, %v2976
        %v2978 = vpop.f32.mrb[0].mxu0
        %v2979 = vadd.f32 0.0, %v2978
        %2980 = vmatprep.mubr.bf16.mxu0 %v2455
        %2981 = vmatmul.mubr.bf16.gmra.mrb[0].mxu0 %v2454
        %v2982 = vpop.f32.mrb[0].mxu0
        %v2983 = vadd.f32 0.0, %v2982
        %v2984 = vpop.f32.mrb[0].mxu0
        %v2985 = vadd.f32 0.0, %v2984
        %v2986 = vpop.f32.mrb[0].mxu0
        %v2987 = vadd.f32 0.0, %v2986
        %v2988 = vpop.f32.mrb[0].mxu0
        %v2989 = vadd.f32 0.0, %v2988
        %2990 = vdwg.mxu0
        %2991 = vmatprep.subr.bf16.mxu0 %v2843
        %2992 = vmatpush1.bf16.msra.mxu0 %v2842
        %2993 = vmatprep.subr.bf16.mxu0 %v2846
        %2994 = vmatpush1.bf16.msra.mxu0 %v2845
        %2995 = vmatprep.subr.bf16.mxu0 %v2849
        %2996 = vmatpush1.bf16.msra.mxu0 %v2848
        %2997 = vmatprep.subr.bf16.mxu0 %v2852
        %2998 = vmatpush1.bf16.msra.mxu0 %v2851
        %2999 = vmatprep.subr.bf16.mxu0 %v2855
        %3000 = vmatpush1.bf16.msra.mxu0 %v2854
        %3001 = vmatprep.subr.bf16.mxu0 %v2858
        %3002 = vmatpush1.bf16.msra.mxu0 %v2857
        %3003 = vmatprep.subr.bf16.mxu0 %v2861
        %3004 = vmatpush1.bf16.msra.mxu0 %v2860
        %3005 = vmatprep.subr.bf16.mxu0 %v2864
        %3006 = vmatpush1.bf16.msra.mxu0 %v2863
        %3007 = vmatprep.subr.bf16.mxu0 0
        %3008 = vmatpush1.bf16.msra.mxu0 0
        %3009 = vmatprep.subr.bf16.mxu0 0
        %3010 = vmatpush1.bf16.msra.mxu0 0
        %3011 = vmatprep.subr.bf16.mxu0 0
        %3012 = vmatpush1.bf16.msra.mxu0 0
        %3013 = vmatprep.subr.bf16.mxu0 0
        %3014 = vmatpush1.bf16.msra.mxu0 0
        %3015 = vmatprep.subr.bf16.mxu0 0
        %3016 = vmatpush1.bf16.msra.mxu0 0
        %3017 = vmatprep.subr.bf16.mxu0 0
        %3018 = vmatpush1.bf16.msra.mxu0 0
        %3019 = vmatprep.subr.bf16.mxu0 0
        %3020 = vmatpush1.bf16.msra.mxu0 0
        %3021 = vmatprep.subr.bf16.mxu0 0
        %3022 = vmatpush1.bf16.msra.mxu0 0
        %3023 = vmatprep.mubr.bf16.mxu0 0
        %3024 = vmatmul.mubr.bf16.gmra.mrb[0].mxu0 %v2453
        %v3025 = vpop.f32.mrb[0].mxu0
        %v3026 = vadd.f32 %v2973, %v3025
        %v3027 = vpop.f32.mrb[0].mxu0
        %v3028 = vadd.f32 %v2975, %v3027
        %v3029 = vpop.f32.mrb[0].mxu0
        %v3030 = vadd.f32 %v2977, %v3029
        %v3031 = vpop.f32.mrb[0].mxu0
        %v3032 = vadd.f32 %v2979, %v3031
        %3033 = vmatprep.mubr.bf16.mxu0 0
        %3034 = vmatmul.mubr.bf16.gmra.mrb[0].mxu0 %v2456
        %v3035 = vpop.f32.mrb[0].mxu0
        %v3036 = vadd.f32 %v2983, %v3035
        %v3037 = vpop.f32.mrb[0].mxu0
        %v3038 = vadd.f32 %v2985, %v3037
        %v3039 = vpop.f32.mrb[0].mxu0
        %v3040 = vadd.f32 %v2987, %v3039
        %v3041 = vpop.f32.mrb[0].mxu0
        %v3042 = vadd.f32 %v2989, %v3041
        %3043 = vdwg.mxu0
        %3044 = vmatprep.subr.bf16.mxu0 0
        %3045 = vmatpush1.bf16.msra.mxu0 %v2796
        %3046 = vmatprep.subr.bf16.mxu0 0
        %3047 = vmatpush1.bf16.msra.mxu0 %v2799
        %3048 = vmatprep.subr.bf16.mxu0 0
        %3049 = vmatpush1.bf16.msra.mxu0 %v2802
        %3050 = vmatprep.subr.bf16.mxu0 0
        %3051 = vmatpush1.bf16.msra.mxu0 %v2805
        %3052 = vmatprep.subr.bf16.mxu0 0
        %3053 = vmatpush1.bf16.msra.mxu0 %v2808
        %3054 = vmatprep.subr.bf16.mxu0 0
        %3055 = vmatpush1.bf16.msra.mxu0 %v2811
        %3056 = vmatprep.subr.bf16.mxu0 0
        %3057 = vmatpush1.bf16.msra.mxu0 %v2814
        %3058 = vmatprep.subr.bf16.mxu0 0
        %3059 = vmatpush1.bf16.msra.mxu0 %v2817
        %3060 = vmatprep.subr.bf16.mxu0 0
        %3061 = vmatpush1.bf16.msra.mxu0 %v2820
        %3062 = vmatprep.subr.bf16.mxu0 0
        %3063 = vmatpush1.bf16.msra.mxu0 %v2823
        %3064 = vmatprep.subr.bf16.mxu0 0
        %3065 = vmatpush1.bf16.msra.mxu0 %v2826
        %3066 = vmatprep.subr.bf16.mxu0 0
        %3067 = vmatpush1.bf16.msra.mxu0 %v2829
        %3068 = vmatprep.subr.bf16.mxu0 0
        %3069 = vmatpush1.bf16.msra.mxu0 %v2832
        %3070 = vmatprep.subr.bf16.mxu0 0
        %3071 = vmatpush1.bf16.msra.mxu0 %v2835
        %3072 = vmatprep.subr.bf16.mxu0 0
        %3073 = vmatpush1.bf16.msra.mxu0 %v2838
        %3074 = vmatprep.subr.bf16.mxu0 0
        %3075 = vmatpush1.bf16.msra.mxu0 %v2841
        %3076 = vmatprep.mubr.bf16.mxu0 %v2452
        %3077 = vmatmul.mubr.bf16.gmra.mrb[0].mxu0 %v2451
        %v3078 = vpop.f32.mrb[0].mxu0
        %v3079 = vadd.f32 0.0, %v3078
        %v3080 = vpop.f32.mrb[0].mxu0
        %v3081 = vpop.f32.mrb[0].mxu0
        %v3082 = vadd.f32 0.0, %v3081
        %v3083 = vpop.f32.mrb[0].mxu0
        %3084 = vmatprep.mubr.bf16.mxu0 %v2455
        %3085 = vmatmul.mubr.bf16.gmra.mrb[0].mxu0 %v2454
        %v3086 = vpop.f32.mrb[0].mxu0
        %v3087 = vadd.f32 0.0, %v3086
        %v3088 = vpop.f32.mrb[0].mxu0
        %v3089 = vpop.f32.mrb[0].mxu0
        %v3090 = vadd.f32 0.0, %v3089
        %v3091 = vpop.f32.mrb[0].mxu0
        %3092 = vdwg.mxu0
        %3093 = vmatprep.subr.bf16.mxu0 0
        %3094 = vmatpush1.bf16.msra.mxu0 %v2844
        %3095 = vmatprep.subr.bf16.mxu0 0
        %3096 = vmatpush1.bf16.msra.mxu0 %v2847
        %3097 = vmatprep.subr.bf16.mxu0 0
        %3098 = vmatpush1.bf16.msra.mxu0 %v2850
        %3099 = vmatprep.subr.bf16.mxu0 0
        %3100 = vmatpush1.bf16.msra.mxu0 %v2853
        %3101 = vmatprep.subr.bf16.mxu0 0
        %3102 = vmatpush1.bf16.msra.mxu0 %v2856
        %3103 = vmatprep.subr.bf16.mxu0 0
        %3104 = vmatpush1.bf16.msra.mxu0 %v2859
        %3105 = vmatprep.subr.bf16.mxu0 0
        %3106 = vmatpush1.bf16.msra.mxu0 %v2862
        %3107 = vmatprep.subr.bf16.mxu0 0
        %3108 = vmatpush1.bf16.msra.mxu0 %v2865
        %3109 = vmatprep.subr.bf16.mxu0 0
        %3110 = vmatpush1.bf16.msra.mxu0 0
        %3111 = vmatprep.subr.bf16.mxu0 0
        %3112 = vmatpush1.bf16.msra.mxu0 0
        %3113 = vmatprep.subr.bf16.mxu0 0
        %3114 = vmatpush1.bf16.msra.mxu0 0
        %3115 = vmatprep.subr.bf16.mxu0 0
        %3116 = vmatpush1.bf16.msra.mxu0 0
        %3117 = vmatprep.subr.bf16.mxu0 0
        %3118 = vmatpush1.bf16.msra.mxu0 0
        %3119 = vmatprep.subr.bf16.mxu0 0
        %3120 = vmatpush1.bf16.msra.mxu0 0
        %3121 = vmatprep.subr.bf16.mxu0 0
        %3122 = vmatpush1.bf16.msra.mxu0 0
        %3123 = vmatprep.subr.bf16.mxu0 0
        %3124 = vmatpush1.bf16.msra.mxu0 0
        %3125 = vmatprep.mubr.bf16.mxu0 0
        %3126 = vmatmul.mubr.bf16.gmra.mrb[0].mxu0 %v2453
        %v3127 = vpop.f32.mrb[0].mxu0
        %v3128 = vadd.f32 %v3079, %v3127
        %v3129 = vpop.f32.mrb[0].mxu0
        %v3130 = vpop.f32.mrb[0].mxu0
        %v3131 = vadd.f32 %v3082, %v3130
        %v3132 = vpop.f32.mrb[0].mxu0
        %3133 = vmatprep.mubr.bf16.mxu0 0
        %3134 = vmatmul.mubr.bf16.gmra.mrb[0].mxu0 %v2456
        %v3135 = vpop.f32.mrb[0].mxu0
        %v3136 = vadd.f32 %v3087, %v3135
        %v3137 = vpop.f32.mrb[0].mxu0
        %v3138 = vpop.f32.mrb[0].mxu0
        %v3139 = vadd.f32 %v3090, %v3138
        %v3140 = vpop.f32.mrb[0].mxu0
        %3141 = vdwg.mxu0
        %v3142 = vadd.f32 %v2212, %v3026
        %v3143 = vadd.f32 %v2214, %v3028
        %v3144 = vadd.f32 %v2314, %v3128
        %v3145 = vadd.f32 %v2216, %v3030
        %v3146 = vadd.f32 %v2218, %v3032
        %v3147 = vadd.f32 %v2317, %v3131
        %v3148 = vadd.f32 %v2222, %v3036
        %v3149 = vadd.f32 %v2224, %v3038
        %v3150 = vadd.f32 %v2322, %v3136
        %v3151 = vadd.f32 %v2226, %v3040
        %v3152 = vadd.f32 %v2228, %v3042
        %v3153 = vadd.f32 %v2325, %v3139
        %v3154 = vld [vmem:[%s6] sm:$0x7]
        %v3156 = vlaneseq
        %v3157 = vshrl.u32 %v3156, 7
        %v3158 = vsub.s32 0, %v3157
        %v3159 = vrot.slane %v3154, %v3158
        %v3160 = vlaneseq
        %v3161 = vshrl.u32 %v3160, 7
        %v3162 = vsub.s32 1, %v3161
        %v3163 = vrot.slane %v3154, %v3162
        %v3164 = vlaneseq
        %v3165 = vshrl.u32 %v3164, 7
        %v3166 = vsub.s32 2, %v3165
        %v3167 = vrot.slane %v3154, %v3166
        %v3171 = vmul.f32 %v3142, %v3159
        %v3172 = vmul.f32 %v3143, %v3163
        %v3173 = vmul.f32 %v3144, %v3167
        %v3174 = vmul.f32 %v3145, %v3159
        %v3175 = vmul.f32 %v3146, %v3163
        %v3176 = vmul.f32 %v3147, %v3167
        %v3177 = vmul.f32 %v3148, %v3159
        %v3178 = vmul.f32 %v3149, %v3163
        %v3179 = vmul.f32 %v3150, %v3167
        %v3180 = vmul.f32 %v3151, %v3159
        %v3181 = vmul.f32 %v3152, %v3163
        %v3182 = vmul.f32 %v3153, %v3167
        %v3183 = vld [vmem:[%s7] sm:$0x7]
        %v3185 = vlaneseq
        %v3186 = vshrl.u32 %v3185, 7
        %v3187 = vsub.s32 0, %v3186
        %v3188 = vrot.slane %v3183, %v3187
        %v3189 = vlaneseq
        %v3190 = vshrl.u32 %v3189, 7
        %v3191 = vsub.s32 1, %v3190
        %v3192 = vrot.slane %v3183, %v3191
        %v3193 = vlaneseq
        %v3194 = vshrl.u32 %v3193, 7
        %v3195 = vsub.s32 2, %v3194
        %v3196 = vrot.slane %v3183, %v3195
        %v3200 = vadd.f32 %v3171, %v3188
        %v3201 = vadd.f32 %v3172, %v3192
        %v3202 = vadd.f32 %v3173, %v3196
        %v3203 = vadd.f32 %v3174, %v3188
        %v3204 = vadd.f32 %v3175, %v3192
        %v3205 = vadd.f32 %v3176, %v3196
        %v3206 = vadd.f32 %v3177, %v3188
        %v3207 = vadd.f32 %v3178, %v3192
        %v3208 = vadd.f32 %v3179, %v3196
        %v3209 = vadd.f32 %v3180, %v3188
        %v3210 = vadd.f32 %v3181, %v3192
        %v3211 = vadd.f32 %v3182, %v3196
        %vm3212 = vcmp.ge.f32.partialorder %v3200, 0.0
        %vm3213 = vcmp.ge.f32.partialorder %v3201, 0.0
        %vm3214 = vcmp.ge.f32.partialorder %v3202, 0.0
        %vm3215 = vcmp.ge.f32.partialorder %v3203, 0.0
        %vm3216 = vcmp.ge.f32.partialorder %v3204, 0.0
        %vm3217 = vcmp.ge.f32.partialorder %v3205, 0.0
        %vm3218 = vcmp.ge.f32.partialorder %v3206, 0.0
        %vm3219 = vcmp.ge.f32.partialorder %v3207, 0.0
        %vm3220 = vcmp.ge.f32.partialorder %v3208, 0.0
        %vm3221 = vcmp.ge.f32.partialorder %v3209, 0.0
        %vm3222 = vcmp.ge.f32.partialorder %v3210, 0.0
        %vm3223 = vcmp.ge.f32.partialorder %v3211, 0.0
        %v3224 = vmul.f32 %v799, %v3200
        %v3225 = vmul.f32 %v799, %v3201
        %v3226 = vmul.f32 %v799, %v3202
        %v3227 = vmul.f32 %v799, %v3203
        %v3228 = vmul.f32 %v799, %v3204
        %v3229 = vmul.f32 %v799, %v3205
        %v3230 = vmul.f32 %v799, %v3206
        %v3231 = vmul.f32 %v799, %v3207
        %v3232 = vmul.f32 %v799, %v3208
        %v3233 = vmul.f32 %v799, %v3209
        %v3234 = vmul.f32 %v799, %v3210
        %v3235 = vmul.f32 %v799, %v3211
        %v3236 = vsel %vm3212, %v3200, %v3224
        %v3237 = vsel %vm3213, %v3201, %v3225
        %v3238 = vsel %vm3214, %v3202, %v3226
        %v3239 = vsel %vm3215, %v3203, %v3227
        %v3240 = vsel %vm3216, %v3204, %v3228
        %v3241 = vsel %vm3217, %v3205, %v3229
        %v3242 = vsel %vm3218, %v3206, %v3230
        %v3243 = vsel %vm3219, %v3207, %v3231
        %v3244 = vsel %vm3220, %v3208, %v3232
        %v3245 = vsel %vm3221, %v3209, %v3233
        %v3246 = vsel %vm3222, %v3210, %v3234
        %v3247 = vsel %vm3223, %v3211, %v3235
        %v3248 = vpack.c.bf16 %v3239, %v3236
        %v3249 = vpack.c.bf16 %v3240, %v3237
        %v3250 = vpack.c.bf16 %v3241, %v3238
        %v3251 = vpack.c.bf16 %v3245, %v3242
        %v3252 = vpack.c.bf16 %v3246, %v3243
        %v3253 = vpack.c.bf16 %v3247, %v3244
        %v3254 = vld [vmem:[#allocation11] sm:$0xf]
        %v3255 = vld [vmem:[#allocation11 + $0x4] sm:$0xf]
        %v3256 = vld [vmem:[#allocation11 + $0x8] sm:$0xf]
        %v3257 = vld [vmem:[#allocation11 + $0xc] sm:$0xf]
        %v3258 = vld [vmem:[#allocation11 + $0x10] sm:$0xf]
        %v3259 = vld [vmem:[#allocation11 + $0x14] sm:$0xf]
        %v3260 = vld [vmem:[#allocation11 + $0x18] sm:$0xf]
        %v3261 = vld [vmem:[#allocation11 + $0x1c] sm:$0xf]
        %v3262 = vld [vmem:[#allocation11 + $0x20] sm:$0xf]
        %v3263 = vld [vmem:[#allocation11 + $0x24] sm:$0xf]
        %v3264 = vld [vmem:[#allocation11 + $0x28] sm:$0xf]
        %v3265 = vld [vmem:[#allocation11 + $0x2c] sm:$0xf]
        %v3266 = vld [vmem:[#allocation11 + $0x30] sm:$0xf]
        %v3267 = vld [vmem:[#allocation11 + $0x34] sm:$0xf]
        %v3268 = vld [vmem:[#allocation11 + $0x38] sm:$0xf]
        %v3269 = vld [vmem:[#allocation11 + $0x3c] sm:$0xf]
        %v3270 = vld [vmem:[#allocation11 + $0x40] sm:$0xf]
        %v3271 = vld [vmem:[#allocation11 + $0x44] sm:$0xf]
        %v3272 = vld [vmem:[#allocation11 + $0x48] sm:$0xf]
        %v3273 = vld [vmem:[#allocation11 + $0x4c] sm:$0xf]
        %v3274 = vld [vmem:[#allocation11 + $0x50] sm:$0xf]
        %v3275 = vld [vmem:[#allocation11 + $0x54] sm:$0xf]
        %v3276 = vld [vmem:[#allocation11 + $0x58] sm:$0xf]
        %v3277 = vld [vmem:[#allocation11 + $0x5c] sm:$0xf]
        %v3278 = vld [vmem:[#allocation11 + $0x60] sm:$0xf]
        %v3279 = vld [vmem:[#allocation11 + $0x64] sm:$0xf]
        %v3280 = vld [vmem:[#allocation11 + $0x68] sm:$0xf]
        %v3281 = vld [vmem:[#allocation11 + $0x6c] sm:$0xf]
        %v3282 = vld [vmem:[#allocation11 + $0x70] sm:$0xf]
        %v3283 = vld [vmem:[#allocation11 + $0x74] sm:$0xf]
        %v3284 = vld [vmem:[#allocation11 + $0x78] sm:$0xf]
        %v3285 = vld [vmem:[#allocation11 + $0x7c] sm:$0xf]
        %v3286 = vld [vmem:[#allocation11 + $0x80] sm:$0xf]
        %v3287 = vld [vmem:[#allocation11 + $0x84] sm:$0xf]
        %v3288 = vld [vmem:[#allocation11 + $0x88] sm:$0xf]
        %v3289 = vld [vmem:[#allocation11 + $0x8c] sm:$0xf]
        %v3290 = vld [vmem:[#allocation11 + $0x90] sm:$0xf]
        %v3291 = vld [vmem:[#allocation11 + $0x94] sm:$0xf]
        %v3292 = vld [vmem:[#allocation11 + $0x98] sm:$0xf]
        %v3293 = vld [vmem:[#allocation11 + $0x9c] sm:$0xf]
        %v3294 = vld [vmem:[#allocation11 + $0xa0] sm:$0xf]
        %v3295 = vld [vmem:[#allocation11 + $0xa4] sm:$0xf]
        %v3296 = vld [vmem:[#allocation11 + $0xa8] sm:$0xf]
        %v3297 = vld [vmem:[#allocation11 + $0xac] sm:$0xf]
        %v3298 = vld [vmem:[#allocation11 + $0xb0] sm:$0xf]
        %v3299 = vld [vmem:[#allocation11 + $0xb4] sm:$0xf]
        %v3300 = vld [vmem:[#allocation11 + $0xb8] sm:$0xf]
        %v3301 = vld [vmem:[#allocation11 + $0xbc] sm:$0xf]
        %v3350 = vunpack.c.l.b16 %v3254
        %v3351 = vunpack.c.l.b16 %v3255
        %v3352 = vunpack.c.l.b16 %v3256
        %v3353 = vunpack.c.l.b16 %v3257
        %v3354 = vunpack.c.l.b16 %v3258
        %v3355 = vunpack.c.l.b16 %v3259
        %v3356 = vunpack.c.l.b16 %v3260
        %v3357 = vunpack.c.l.b16 %v3261
        %v3358 = vunpack.c.l.b16 %v3262
        %v3359 = vunpack.c.l.b16 %v3263
        %v3360 = vunpack.c.l.b16 %v3264
        %v3361 = vunpack.c.l.b16 %v3265
        %v3362 = vunpack.c.l.b16 %v3266
        %v3363 = vunpack.c.l.b16 %v3267
        %v3364 = vunpack.c.l.b16 %v3268
        %v3365 = vunpack.c.l.b16 %v3269
        %v3366 = vunpack.c.l.b16 %v3270
        %v3367 = vunpack.c.l.b16 %v3271
        %v3368 = vunpack.c.l.b16 %v3272
        %v3369 = vunpack.c.l.b16 %v3273
        %v3370 = vunpack.c.l.b16 %v3274
        %v3371 = vunpack.c.l.b16 %v3275
        %v3372 = vunpack.c.l.b16 %v3276
        %v3373 = vunpack.c.l.b16 %v3277
        %v3374 = vunpack.c.l.b16 %v3278
        %v3375 = vunpack.c.l.b16 %v3279
        %v3376 = vunpack.c.l.b16 %v3280
        %v3377 = vunpack.c.l.b16 %v3281
        %v3378 = vunpack.c.l.b16 %v3282
        %v3379 = vunpack.c.l.b16 %v3283
        %v3380 = vunpack.c.l.b16 %v3284
        %v3381 = vunpack.c.l.b16 %v3285
        %v3382 = vunpack.c.l.b16 %v3286
        %v3383 = vunpack.c.l.b16 %v3287
        %v3384 = vunpack.c.l.b16 %v3288
        %v3385 = vunpack.c.l.b16 %v3289
        %v3386 = vunpack.c.l.b16 %v3290
        %v3387 = vunpack.c.l.b16 %v3291
        %v3388 = vunpack.c.l.b16 %v3292
        %v3389 = vunpack.c.l.b16 %v3293
        %v3390 = vunpack.c.l.b16 %v3294
        %v3391 = vunpack.c.l.b16 %v3295
        %v3392 = vunpack.c.l.b16 %v3296
        %v3393 = vunpack.c.l.b16 %v3297
        %v3394 = vunpack.c.l.b16 %v3298
        %v3395 = vunpack.c.l.b16 %v3299
        %v3396 = vunpack.c.l.b16 %v3300
        %v3397 = vunpack.c.l.b16 %v3301
        %v3398 = vpack.c.b16 %v3351, %v3350
        %v3399 = vpack.c.b16 %v3353, %v3352
        %v3400 = vpack.c.b16 %v3355, %v3354
        %v3401 = vpack.c.b16 %v3357, %v3356
        %v3402 = vpack.c.b16 %v3359, %v3358
        %v3403 = vpack.c.b16 %v3361, %v3360
        %v3404 = vpack.c.b16 %v3363, %v3362
        %v3405 = vpack.c.b16 %v3365, %v3364
        %v3406 = vpack.c.b16 %v3367, %v3366
        %v3407 = vpack.c.b16 %v3369, %v3368
        %v3408 = vpack.c.b16 %v3371, %v3370
        %v3409 = vpack.c.b16 %v3373, %v3372
        %v3410 = vpack.c.b16 %v3375, %v3374
        %v3411 = vpack.c.b16 %v3377, %v3376
        %v3412 = vpack.c.b16 %v3379, %v3378
        %v3413 = vpack.c.b16 %v3381, %v3380
        %v3414 = vpack.c.b16 %v3383, %v3382
        %v3415 = vpack.c.b16 %v3385, %v3384
        %v3416 = vpack.c.b16 %v3387, %v3386
        %v3417 = vpack.c.b16 %v3389, %v3388
        %v3418 = vpack.c.b16 %v3391, %v3390
        %v3419 = vpack.c.b16 %v3393, %v3392
        %v3420 = vpack.c.b16 %v3395, %v3394
        %v3421 = vpack.c.b16 %v3397, %v3396
        %3446 = vmatprep.subr.bf16.mxu0 0
        %3447 = vmatpush1.bf16.msra.mxu0 %v3398
        %3448 = vmatprep.subr.bf16.mxu0 0
        %3449 = vmatpush1.bf16.msra.mxu0 %v3399
        %3450 = vmatprep.subr.bf16.mxu0 0
        %3451 = vmatpush1.bf16.msra.mxu0 %v3400
        %3452 = vmatprep.subr.bf16.mxu0 0
        %3453 = vmatpush1.bf16.msra.mxu0 %v3401
        %3454 = vmatprep.subr.bf16.mxu0 0
        %3455 = vmatpush1.bf16.msra.mxu0 %v3402
        %3456 = vmatprep.subr.bf16.mxu0 0
        %3457 = vmatpush1.bf16.msra.mxu0 %v3403
        %3458 = vmatprep.subr.bf16.mxu0 0
        %3459 = vmatpush1.bf16.msra.mxu0 %v3404
        %3460 = vmatprep.subr.bf16.mxu0 0
        %3461 = vmatpush1.bf16.msra.mxu0 %v3405
        %3462 = vmatprep.subr.bf16.mxu0 0
        %3463 = vmatpush1.bf16.msra.mxu0 %v3406
        %3464 = vmatprep.subr.bf16.mxu0 0
        %3465 = vmatpush1.bf16.msra.mxu0 %v3407
        %3466 = vmatprep.subr.bf16.mxu0 0
        %3467 = vmatpush1.bf16.msra.mxu0 %v3408
        %3468 = vmatprep.subr.bf16.mxu0 0
        %3469 = vmatpush1.bf16.msra.mxu0 %v3409
        %3470 = vmatprep.subr.bf16.mxu0 0
        %3471 = vmatpush1.bf16.msra.mxu0 %v3410
        %3472 = vmatprep.subr.bf16.mxu0 0
        %3473 = vmatpush1.bf16.msra.mxu0 %v3411
        %3474 = vmatprep.subr.bf16.mxu0 0
        %3475 = vmatpush1.bf16.msra.mxu0 %v3412
        %3476 = vmatprep.subr.bf16.mxu0 0
        %3477 = vmatpush1.bf16.msra.mxu0 %v3413
        %3478 = vmatprep.mubr.bf16.mxu0 %v3249
        %3479 = vmatmul.mubr.bf16.gmra.mrb[0].mxu0 %v3248
        %v3480 = vpop.f32.mrb[0].mxu0
        %v3481 = vadd.f32 0.0, %v3480
        %v3482 = vpop.f32.mrb[0].mxu0
        %v3483 = vpop.f32.mrb[0].mxu0
        %v3484 = vadd.f32 0.0, %v3483
        %v3485 = vpop.f32.mrb[0].mxu0
        %3486 = vmatprep.mubr.bf16.mxu0 %v3252
        %3487 = vmatmul.mubr.bf16.gmra.mrb[0].mxu0 %v3251
        %v3488 = vpop.f32.mrb[0].mxu0
        %v3489 = vadd.f32 0.0, %v3488
        %v3490 = vpop.f32.mrb[0].mxu0
        %v3491 = vpop.f32.mrb[0].mxu0
        %v3492 = vadd.f32 0.0, %v3491
        %v3493 = vpop.f32.mrb[0].mxu0
        %3494 = vdwg.mxu0
        %3495 = vmatprep.subr.bf16.mxu0 0
        %3496 = vmatpush1.bf16.msra.mxu0 %v3414
        %3497 = vmatprep.subr.bf16.mxu0 0
        %3498 = vmatpush1.bf16.msra.mxu0 %v3415
        %3499 = vmatprep.subr.bf16.mxu0 0
        %3500 = vmatpush1.bf16.msra.mxu0 %v3416
        %3501 = vmatprep.subr.bf16.mxu0 0
        %3502 = vmatpush1.bf16.msra.mxu0 %v3417
        %3503 = vmatprep.subr.bf16.mxu0 0
        %3504 = vmatpush1.bf16.msra.mxu0 %v3418
        %3505 = vmatprep.subr.bf16.mxu0 0
        %3506 = vmatpush1.bf16.msra.mxu0 %v3419
        %3507 = vmatprep.subr.bf16.mxu0 0
        %3508 = vmatpush1.bf16.msra.mxu0 %v3420
        %3509 = vmatprep.subr.bf16.mxu0 0
        %3510 = vmatpush1.bf16.msra.mxu0 %v3421
        %3511 = vmatprep.subr.bf16.mxu0 0
        %3512 = vmatpush1.bf16.msra.mxu0 0
        %3513 = vmatprep.subr.bf16.mxu0 0
        %3514 = vmatpush1.bf16.msra.mxu0 0
        %3515 = vmatprep.subr.bf16.mxu0 0
        %3516 = vmatpush1.bf16.msra.mxu0 0
        %3517 = vmatprep.subr.bf16.mxu0 0
        %3518 = vmatpush1.bf16.msra.mxu0 0
        %3519 = vmatprep.subr.bf16.mxu0 0
        %3520 = vmatpush1.bf16.msra.mxu0 0
        %3521 = vmatprep.subr.bf16.mxu0 0
        %3522 = vmatpush1.bf16.msra.mxu0 0
        %3523 = vmatprep.subr.bf16.mxu0 0
        %3524 = vmatpush1.bf16.msra.mxu0 0
        %3525 = vmatprep.subr.bf16.mxu0 0
        %3526 = vmatpush1.bf16.msra.mxu0 0
        %3527 = vmatprep.mubr.bf16.mxu0 0
        %3528 = vmatmul.mubr.bf16.gmra.mrb[0].mxu0 %v3250
        %v3529 = vpop.f32.mrb[0].mxu0
        %v3530 = vadd.f32 %v3481, %v3529
        %v3531 = vpop.f32.mrb[0].mxu0
        %v3532 = vpop.f32.mrb[0].mxu0
        %v3533 = vadd.f32 %v3484, %v3532
        %v3534 = vpop.f32.mrb[0].mxu0
        %3535 = vmatprep.mubr.bf16.mxu0 0
        %3536 = vmatmul.mubr.bf16.gmra.mrb[0].mxu0 %v3253
        %v3537 = vpop.f32.mrb[0].mxu0
        %v3538 = vadd.f32 %v3489, %v3537
        %v3539 = vpop.f32.mrb[0].mxu0
        %v3540 = vpop.f32.mrb[0].mxu0
        %v3541 = vadd.f32 %v3492, %v3540
        %v3542 = vpop.f32.mrb[0].mxu0
        %3543 = vdwg.mxu0
        %v3544 = vld [vmem:[%s9] sm:$0x1]
        %v3546 = vlaneseq
        %v3547 = vshrl.u32 %v3546, 7
        %v3548 = vsub.s32 0, %v3547
        %v3549 = vrot.slane %v3544, %v3548
        %v3551 = vmul.f32 %v3530, %v3549
        %v3552 = vmul.f32 %v3533, %v3549
        %v3553 = vmul.f32 %v3538, %v3549
        %v3554 = vmul.f32 %v3541, %v3549
        %v3555 = vld [vmem:[%s10] sm:$0x1]
        %v3557 = vlaneseq
        %v3558 = vshrl.u32 %v3557, 7
        %v3559 = vsub.s32 0, %v3558
        %v3560 = vrot.slane %v3555, %v3559
        %v3562 = vadd.f32 %v3551, %v3560
        %v3563 = vadd.f32 %v3552, %v3560
        %v3564 = vadd.f32 %v3553, %v3560
        %v3565 = vadd.f32 %v3554, %v3560
        %v3566 = vadd.f32 %v3562, %v774
        %v3567 = vadd.f32 %v3563, %v778
        %v3568 = vadd.f32 %v3564, %v782
        %v3569 = vadd.f32 %v3565, %v786
        %3570 = vst [vmem:[%s491] sm:$0xff] %v3566
        %3571 = vst [vmem:[%s491 + $0x8] sm:$0xff] %v3567
        %3572 = vst [vmem:[%s491 + $0x10] sm:$0xff] %v3568
        %3573 = vst [vmem:[%s491 + $0x18] sm:$0xff] %v3569
        %s3574 = sand.u32 %s297, 1
        %s3575 = scalar_lea.sflag [#allocation5], %s3574
        %s3576 = sand.u32 %s297, 1
        %s3577 = smul.addr %s3576, 32
        %s3578 = scalar_lea.vmem [#allocation12], %s3577
        // Predicated region
        $region89: #{tpu_custom_call.1} parent=67 // pred_check
          %p3579 = pneg %p307
        $region90: #{tpu_custom_call.1} parent=67 // pred_check_branch
          %3581 = sbr.rel (%p3579) target = $region92
        $region91: #{tpu_custom_call.1} parent=67 // pred_region
          %s3582 = smul.u32 2, %s32
          %s3584 = ssub.s32 512, 512
          %3585 = vsyncadd %s3575, %s3584
          %s3586 = smul.addr %s3582, 2
          %s3587 = smul.addr %s3586, 128
          %s3588 = scalar_lea.hbm %s12, %s3587
          %s3589 = sshll.u32 %s3578, 4
          %s3590 = int_to_ptr.vmem [resolvable:$true] %s3589
          %3595 = dma.vmem_to_hbm [thread:$0]  %s3590, 512, %s3588, %s3575, 128, 128, 8
        $region92: #{tpu_custom_call.1} parent=67 // pred_fallthru
          _
      $region68: #{tpu_custom_call.1} parent=5 // pred_fallthru
        _
      %p3596 = scmp.le.s32.totalorder 2, %s27
      // Predicated region
      $region93: #{tpu_custom_call.1} parent=5 // pred_check
        %p3597 = pneg %p3596
      $region94: #{tpu_custom_call.1} parent=5 // pred_check_branch
        %3599 = sbr.rel (%p3597) target = $region96
      $region95: #{tpu_custom_call.1} parent=5 // pred_region
        %s3600 = ssub.s32 %s27, 2
        // Predicated region
        $region97: #{tpu_custom_call.1} parent=95 // pred_check
          %p3601 = pneg %p313
        $region98: #{tpu_custom_call.1} parent=95 // pred_check_branch
          %3603 = sbr.rel (%p3601) target = $region100
        $region99: #{tpu_custom_call.1} parent=95 // pred_region
          %s3604 = sand.u32 %s298, 1
          %s3605 = scalar_lea.sflag [#allocation5], %s3604
          %s3606 = sand.u32 %s298, 1
          %s3607 = smul.addr %s3606, 32
          %s3608 = scalar_lea.vmem [#allocation12], %s3607
          %3609 = dma.done %s3605, 512
        $region100: #{tpu_custom_call.1} parent=95 // pred_fallthru
          _
      $region96: #{tpu_custom_call.1} parent=5 // pred_fallthru
        _
    $region6: #{tpu_custom_call.1} parent=1 // loop_footer
      %s31 = sadd.s32 1, %s27
    $region7: #{tpu_custom_call.1} parent=1 // loop_footer_branch
      %26 = sbr.rel target = $region3
    $region8: #{tpu_custom_call.1} parent=1 // loop_exit
      _
    %3610 = vsyncpa [#allocation4], 1
    %s3611 = scalar_lea.sflag [#allocation4], 1
    %3612 = vsyncpa %s3611, 1
    %3613 = vsyncpa [#allocation7], 1
    %3614 = vsyncpa [#allocation10], 1
    %3615 = vsyncpa [#allocation5], 1
    %s3616 = scalar_lea.sflag [#allocation5], 1
    %3617 = vsyncpa %s3616, 1

</llo_original>
